<compile_context>
chip_gen: v5e
topology: v5e:2x2
jax: 0.10.0
libtpu: 0.0.40
codegen_flags: <defaults>
</compile_context>

<pallas_src>
import jax
import jax.numpy as jnp
from jax.experimental import pallas as pl
from jax.experimental.pallas import tpu as pltpu


# ---------------------------------------------------------------------------
# Kernel 1: conv1 as im2col matmul + bias + ReLU, tiled over the row axis.
# ---------------------------------------------------------------------------
def conv1_mm_relu_kernel(p_ref, w_ref, b_ref, o_ref):
    acc = jnp.dot(p_ref[...], w_ref[...], preferred_element_type=jnp.float32)
    o_ref[...] = jnp.maximum(acc + b_ref[...], 0.0).astype(o_ref.dtype)


def conv1_mm_relu(patches, w_mat, bias, *, tm=2048, out_dtype=jnp.bfloat16):
    M, K = patches.shape
    Cout = w_mat.shape[1]
    tm = min(tm, M)
    return pl.pallas_call(
        conv1_mm_relu_kernel,
        out_shape=jax.ShapeDtypeStruct((M, Cout), out_dtype),
        grid=(pl.cdiv(M, tm),),
        in_specs=[
            pl.BlockSpec((tm, K), lambda i: (i, 0)),
            pl.BlockSpec((K, Cout), lambda i: (0, 0)),
            pl.BlockSpec((1, Cout), lambda i: (0, 0)),
        ],
        out_specs=pl.BlockSpec((tm, Cout), lambda i: (i, 0)),
        compiler_params=pltpu.CompilerParams(dimension_semantics=("parallel",)),
    )(patches, w_mat, bias)


# ---------------------------------------------------------------------------
# Kernel 2: conv2 matmul + bias + ReLU + fused 2x2 max-pool.
# The four inputs are the im2col patch matrices of the four pool quadrants,
# all indexed by (image, pooled_row, pooled_col), so max-pool == elementwise
# max.  Bias-add and ReLU commute with the max, so they run once after it.
# ---------------------------------------------------------------------------
def conv2_pool_relu_kernel(pa_ref, pb_ref, pc_ref, pd_ref, w_ref, b_ref, o_ref):
    w = w_ref[...]

    def branch(p_ref):
        return jnp.dot(p_ref[...], w, preferred_element_type=jnp.float32)

    m = jnp.maximum(jnp.maximum(branch(pa_ref), branch(pb_ref)),
                    jnp.maximum(branch(pc_ref), branch(pd_ref)))
    o_ref[...] = jnp.maximum(m + b_ref[...], 0.0).astype(o_ref.dtype)


def conv2_pool_relu(quads, w_mat, bias, *, tm=2048, out_dtype=jnp.bfloat16):
    M, K = quads[0].shape
    Cout = w_mat.shape[1]
    tm = min(tm, M)
    p_spec = pl.BlockSpec((tm, K), lambda i: (i, 0))
    return pl.pallas_call(
        conv2_pool_relu_kernel,
        out_shape=jax.ShapeDtypeStruct((M, Cout), out_dtype),
        grid=(pl.cdiv(M, tm),),
        in_specs=[p_spec, p_spec, p_spec, p_spec,
                  pl.BlockSpec((K, Cout), lambda i: (0, 0)),
                  pl.BlockSpec((1, Cout), lambda i: (0, 0))],
        out_specs=pl.BlockSpec((tm, Cout), lambda i: (i, 0)),
        compiler_params=pltpu.CompilerParams(dimension_semantics=("parallel",)),
    )(*quads, w_mat, bias)


# ---------------------------------------------------------------------------
# Kernel 3: fused MLP head with batch-parallel + K-tiled fc1 reduction.
#   fc1 (K tiled, bf16 weights, f32 accumulate) -> ReLU -> fc2 -> log_softmax
# ---------------------------------------------------------------------------
def mlp_head_kernel(x_ref, w1_ref, b1_ref, w2_ref, b2_ref, o_ref, acc_ref):
    k = pl.program_id(1)

    @pl.when(k == 0)
    def _():
        acc_ref[...] = jnp.zeros_like(acc_ref)

    acc_ref[...] += jnp.dot(x_ref[...], w1_ref[...],
                            preferred_element_type=jnp.float32)

    @pl.when(k == pl.num_programs(1) - 1)
    def _():
        h = jnp.maximum(acc_ref[...] + b1_ref[...], 0.0)
        # dropout2 (p=0.5) is identity at inference.
        logits = jnp.dot(h.astype(jnp.bfloat16), w2_ref[...],
                         preferred_element_type=jnp.float32) + b2_ref[...]
        m = jnp.max(logits, axis=-1, keepdims=True)
        s = logits - m
        o_ref[...] = s - jnp.log(jnp.sum(jnp.exp(s), axis=-1, keepdims=True))


def mlp_head(x, w1, b1, w2, b2, *, tn=512, tk=1152):
    N, K = x.shape
    H = w1.shape[1]
    O = w2.shape[1]
    tn = min(tn, N)
    assert K % tk == 0 and tk % 128 == 0
    return pl.pallas_call(
        mlp_head_kernel,
        out_shape=jax.ShapeDtypeStruct((N, O), jnp.float32),
        grid=(pl.cdiv(N, tn), K // tk),
        in_specs=[
            pl.BlockSpec((tn, tk), lambda n, k: (n, k)),
            pl.BlockSpec((tk, H), lambda n, k: (k, 0)),
            pl.BlockSpec((1, H), lambda n, k: (0, 0)),
            pl.BlockSpec((H, O), lambda n, k: (0, 0)),
            pl.BlockSpec((1, O), lambda n, k: (0, 0)),
        ],
        out_specs=pl.BlockSpec((tn, O), lambda n, k: (n, 0)),
        scratch_shapes=[pltpu.VMEM((tn, H), jnp.float32)],
        compiler_params=pltpu.CompilerParams(
            dimension_semantics=("parallel", "arbitrary")),
    )(x, w1, b1, w2, b2)


# ---------------------------------------------------------------------------
# Plain-JAX glue: one-time parameter prep and the jitted forward.
# ---------------------------------------------------------------------------
def prepare_params(params):
    """One-time torch-layout -> kernel-layout conversion (bf16 weights)."""
    w1m = jnp.transpose(params["conv1_w"], (2, 3, 1, 0)).reshape(3 * 3 * 1, 32)
    w2m = jnp.transpose(params["conv2_w"], (2, 3, 1, 0)).reshape(3 * 3 * 32, 64)
    # fc1 consumes the NHWC flatten order (h, w, c); torch flattens NCHW
    # (c*144 + h*12 + w), so permute fc1's columns once here instead of
    # transposing the pooled activation every forward pass.
    fc1 = params["fc1_w"].reshape(256, 64, 12, 12)
    fc1 = jnp.transpose(fc1, (2, 3, 1, 0)).reshape(12 * 12 * 64, 256)
    return {
        "conv1_w": w1m.astype(jnp.bfloat16),
        "conv1_b": params["conv1_b"].reshape(1, 32).astype(jnp.float32),
        "conv2_w": w2m.astype(jnp.bfloat16),
        "conv2_b": params["conv2_b"].reshape(1, 64).astype(jnp.float32),
        "fc1_w": fc1.astype(jnp.bfloat16),
        "fc1_b": params["fc1_b"].reshape(1, 256).astype(jnp.float32),
        "fc2_w": params["fc2_w"].T.astype(jnp.bfloat16),
        "fc2_b": params["fc2_b"].reshape(1, 10).astype(jnp.float32),
    }


@jax.jit
def cnn_forward(x_nchw, p):
    N = x_nchw.shape[0]
    x = jnp.transpose(x_nchw, (0, 2, 3, 1)).astype(jnp.bfloat16)  # NHWC bf16

    # conv1 + ReLU : (N,28,28,1) -> (N,26,26,32), bf16 activations.
    p1 = jnp.concatenate(
        [x[:, dy:dy + 26, dx:dx + 26, :] for dy in range(3) for dx in range(3)],
        axis=-1).reshape(N * 26 * 26, 9)
    y1 = conv1_mm_relu(p1, p["conv1_w"], p["conv1_b"]).reshape(N, 26, 26, 32)

    # conv2 + ReLU + max_pool2d(kernel=2), fused in one kernel via quadrant
    # im2col built DIRECTLY from y1 (no (N,24,24,288) intermediate): quadrant
    # (qy,qx) holds the patch of conv2-output pixel (2i+qy, 2j+qx) at row
    # (n, i, j), so the 2x2 pool is an elementwise max inside the kernel.
    quads = []
    for qy in (0, 1):
        for qx in (0, 1):
            q = jnp.concatenate(
                [y1[:, qy + dy:qy + dy + 24:2, qx + dx:qx + dx + 24:2, :]
                 for dy in range(3) for dx in range(3)],
                axis=-1)
            quads.append(q.reshape(N * 12 * 12, 3 * 3 * 32))
    pooled = conv2_pool_relu(quads, p["conv2_w"], p["conv2_b"])  # (N*144,64) bf16

    # dropout1 (p=0.25) is identity at inference.
    # NHWC flatten (free reshape); fc1 weights were permuted to match.
    flat = pooled.reshape(N, 12 * 12 * 64)

    # fc1 -> ReLU -> (dropout2) -> fc2 -> log_softmax, batch-parallel + K-tiled.
    return mlp_head(flat, p["fc1_w"], p["fc1_b"], p["fc2_w"], p["fc2_b"])


# ---------------------------------------------------------------------------
# Pure-JAX f32 reference (torch layouts / torch semantics) for validation.
# ---------------------------------------------------------------------------
def reference_forward(x, params):
    dn = ("NCHW", "OIHW", "NCHW")
    y = jax.lax.conv_general_dilated(x, params["conv1_w"], (1, 1), "VALID",
                                     dimension_numbers=dn)
    y = jax.nn.relu(y + params["conv1_b"][None, :, None, None])
    y = jax.lax.conv_general_dilated(y, params["conv2_w"], (1, 1), "VALID",
                                     dimension_numbers=dn)
    y = jax.nn.relu(y + params["conv2_b"][None, :, None, None])
    y = jax.lax.reduce_window(y, -jnp.inf, jax.lax.max,
                              (1, 1, 2, 2), (1, 1, 2, 2), "VALID")
    y = y.reshape(y.shape[0], -1)                      # torch NCHW flatten
    y = jax.nn.relu(y @ params["fc1_w"].T + params["fc1_b"])
    y = y @ params["fc2_w"].T + params["fc2_b"]
    return jax.nn.log_softmax(y, axis=1)


if __name__ == "__main__":
    key = jax.random.PRNGKey(0)
    kx, k1, k2, k3, k4, k5, k6, k7, k8 = jax.random.split(key, 9)

    # Deterministic synthetic parameters, torch layouts:
    #   conv weight (Cout, Cin, KH, KW), linear weight (out, in).
    params = {
        "conv1_w": 0.20 * jax.random.normal(k1, (32, 1, 3, 3), jnp.float32),
        "conv1_b": 0.10 * jax.random.normal(k2, (32,), jnp.float32),
        "conv2_w": 0.05 * jax.random.normal(k3, (64, 32, 3, 3), jnp.float32),
        "conv2_b": 0.10 * jax.random.normal(k4, (64,), jnp.float32),
        "fc1_w": 0.02 * jax.random.normal(k5, (256, 12 * 12 * 64), jnp.float32),
        "fc1_b": 0.10 * jax.random.normal(k6, (256,), jnp.float32),
        "fc2_w": 0.05 * jax.random.normal(k7, (10, 256), jnp.float32),
        "fc2_b": 0.10 * jax.random.normal(k8, (10,), jnp.float32),
    }

    # MNIST-shaped input; 28x28 is required so fc1's 12*12*64 input dim matches.
    x = jax.random.normal(kx, (2, 1, 28, 28), jnp.float32)

    prepped = prepare_params(params)
    out = jax.block_until_ready(cnn_forward(x, prepped))

    assert out.shape == (2, 10)
    # log_softmax rows must exponentiate-sum to 1.
    assert bool(jnp.allclose(jnp.sum(jnp.exp(out), axis=1), 1.0, atol=1e-3))
    # Match the f32 reference (loose tolerance: bf16 weights/activations).
    ref = reference_forward(x, params)
    err = float(jnp.max(jnp.abs(out - ref)))
    assert err < 0.2, f"mismatch vs f32 reference: max abs err = {err}"
    print("KERNEL_OK")
</pallas_src>

<mosaic_0001>
module attributes {stable_mosaic.version = 11 : i64} {
  func.func @conv1_mm_relu_kernel(%arg0: i32, %arg1: memref<1352x9xbf16, #tpu.memory_space<vmem>>, %arg2: memref<9x32xbf16, #tpu.memory_space<vmem>>, %arg3: memref<1x32xf32, #tpu.memory_space<vmem>>, %arg4: memref<1352x32xbf16, #tpu.memory_space<vmem>>) attributes {dimension_semantics = [#tpu.dimension_semantics<parallel>], iteration_bounds = array<i64: 1>, scalar_prefetch = 0 : i64, scratch_operands = 0 : i64, tpu.core_type = #tpu.core_type<tc>, window_params = [{transform_indices = @transform_0, window_bounds = array<i64: 1352, 9>}, {pipeline_mode = #tpu.pipeline_mode<synchronous>, transform_indices = @transform_1, window_bounds = array<i64: 9, 32>}, {pipeline_mode = #tpu.pipeline_mode<synchronous>, transform_indices = @transform_2, window_bounds = array<i64: 1, 32>}, {transform_indices = @transform_3, window_bounds = array<i64: 1352, 32>}]} {
    %c0 = arith.constant 0 : index
    %c0_0 = arith.constant 0 : index
    %0 = vector.load %arg1[%c0, %c0_0] : memref<1352x9xbf16, #tpu.memory_space<vmem>>, vector<1352x9xbf16>
    %c0_1 = arith.constant 0 : index
    %c0_2 = arith.constant 0 : index
    %1 = vector.load %arg2[%c0_1, %c0_2] : memref<9x32xbf16, #tpu.memory_space<vmem>>, vector<9x32xbf16>
    %cst = arith.constant dense<0.000000e+00> : vector<1352x32xf32>
    %2 = tpu.matmul %0, %1, %cst {dimension_numbers = #tpu.dot_dimension_numbers<[1], [0], [0], [1], [0, 0, 1, 1], [], []>} : vector<1352x9xbf16>, vector<9x32xbf16>, vector<1352x32xf32> -> vector<1352x32xf32>
    %c0_3 = arith.constant 0 : index
    %c0_4 = arith.constant 0 : index
    %3 = vector.load %arg3[%c0_3, %c0_4] : memref<1x32xf32, #tpu.memory_space<vmem>>, vector<1x32xf32>
    %4 = vector.broadcast %3 : vector<1x32xf32> to vector<1352x32xf32>
    %5 = arith.addf %2, %4 : vector<1352x32xf32>
    %cst_5 = arith.constant 0.000000e+00 : f32
    %6 = vector.broadcast %cst_5 : f32 to vector<1352x32xf32>
    %7 = arith.maximumf %5, %6 : vector<1352x32xf32>
    %8 = arith.truncf %7 : vector<1352x32xf32> to vector<1352x32xbf16>
    %c0_6 = arith.constant 0 : index
    %c0_7 = arith.constant 0 : index
    %9 = vector.load %arg4[%c0_6, %c0_7] : memref<1352x32xbf16, #tpu.memory_space<vmem>>, vector<1352x32xbf16>
    tpu.vector_store %arg4[%c0_6, %c0_7], %8 {strides = array<i32>} : memref<1352x32xbf16, #tpu.memory_space<vmem>>, vector<1352x32xbf16>,
    return
  }
  func.func @transform_0(%arg0: i32) -> (i32, i32) {
    %c0_i32 = arith.constant 0 : i32
    %c0_i32_0 = arith.constant 0 : i32
    return %arg0, %c0_i32 : i32, i32
  }
  func.func @transform_1(%arg0: i32) -> (i32, i32) {
    %c0_i32 = arith.constant 0 : i32
    %c0_i32_0 = arith.constant 0 : i32
    %c0_i32_1 = arith.constant 0 : i32
    return %c0_i32, %c0_i32_0 : i32, i32
  }
  func.func @transform_2(%arg0: i32) -> (i32, i32) {
    %c0_i32 = arith.constant 0 : i32
    %c0_i32_0 = arith.constant 0 : i32
    %c0_i32_1 = arith.constant 0 : i32
    return %c0_i32, %c0_i32_0 : i32, i32
  }
  func.func @transform_3(%arg0: i32) -> (i32, i32) {
    %c0_i32 = arith.constant 0 : i32
    %c0_i32_0 = arith.constant 0 : i32
    return %arg0, %c0_i32 : i32, i32
  }
}

module attributes {stable_mosaic.version = 11 : i64} {
  func.func @conv2_pool_relu_kernel(%arg0: i32, %arg1: memref<288x288xbf16, #tpu.memory_space<vmem>>, %arg2: memref<288x288xbf16, #tpu.memory_space<vmem>>, %arg3: memref<288x288xbf16, #tpu.memory_space<vmem>>, %arg4: memref<288x288xbf16, #tpu.memory_space<vmem>>, %arg5: memref<288x64xbf16, #tpu.memory_space<vmem>>, %arg6: memref<1x64xf32, #tpu.memory_space<vmem>>, %arg7: memref<288x64xbf16, #tpu.memory_space<vmem>>) attributes {dimension_semantics = [#tpu.dimension_semantics<parallel>], iteration_bounds = array<i64: 1>, scalar_prefetch = 0 : i64, scratch_operands = 0 : i64, tpu.core_type = #tpu.core_type<tc>, window_params = [{transform_indices = @transform_0, window_bounds = array<i64: 288, 288>}, {transform_indices = @transform_1, window_bounds = array<i64: 288, 288>}, {transform_indices = @transform_2, window_bounds = array<i64: 288, 288>}, {transform_indices = @transform_3, window_bounds = array<i64: 288, 288>}, {pipeline_mode = #tpu.pipeline_mode<synchronous>, transform_indices = @transform_4, window_bounds = array<i64: 288, 64>}, {pipeline_mode = #tpu.pipeline_mode<synchronous>, transform_indices = @transform_5, window_bounds = array<i64: 1, 64>}, {transform_indices = @transform_6, window_bounds = array<i64: 288, 64>}]} {
    %c0 = arith.constant 0 : index
    %c0_0 = arith.constant 0 : index
    %0 = vector.load %arg5[%c0, %c0_0] : memref<288x64xbf16, #tpu.memory_space<vmem>>, vector<288x64xbf16>
    %c0_1 = arith.constant 0 : index
    %c0_2 = arith.constant 0 : index
    %1 = vector.load %arg1[%c0_1, %c0_2] : memref<288x288xbf16, #tpu.memory_space<vmem>>, vector<288x288xbf16>
    %cst = arith.constant dense<0.000000e+00> : vector<288x64xf32>
    %2 = tpu.matmul %1, %0, %cst {dimension_numbers = #tpu.dot_dimension_numbers<[1], [0], [0], [1], [0, 0, 1, 1], [], []>} : vector<288x288xbf16>, vector<288x64xbf16>, vector<288x64xf32> -> vector<288x64xf32>
    %c0_3 = arith.constant 0 : index
    %c0_4 = arith.constant 0 : index
    %3 = vector.load %arg2[%c0_3, %c0_4] : memref<288x288xbf16, #tpu.memory_space<vmem>>, vector<288x288xbf16>
    %cst_5 = arith.constant dense<0.000000e+00> : vector<288x64xf32>
    %4 = tpu.matmul %3, %0, %cst_5 {dimension_numbers = #tpu.dot_dimension_numbers<[1], [0], [0], [1], [0, 0, 1, 1], [], []>} : vector<288x288xbf16>, vector<288x64xbf16>, vector<288x64xf32> -> vector<288x64xf32>
    %5 = arith.maximumf %2, %4 : vector<288x64xf32>
    %c0_6 = arith.constant 0 : index
    %c0_7 = arith.constant 0 : index
    %6 = vector.load %arg3[%c0_6, %c0_7] : memref<288x288xbf16, #tpu.memory_space<vmem>>, vector<288x288xbf16>
    %cst_8 = arith.constant dense<0.000000e+00> : vector<288x64xf32>
    %7 = tpu.matmul %6, %0, %cst_8 {dimension_numbers = #tpu.dot_dimension_numbers<[1], [0], [0], [1], [0, 0, 1, 1], [], []>} : vector<288x288xbf16>, vector<288x64xbf16>, vector<288x64xf32> -> vector<288x64xf32>
    %c0_9 = arith.constant 0 : index
    %c0_10 = arith.constant 0 : index
    %8 = vector.load %arg4[%c0_9, %c0_10] : memref<288x288xbf16, #tpu.memory_space<vmem>>, vector<288x288xbf16>
    %cst_11 = arith.constant dense<0.000000e+00> : vector<288x64xf32>
    %9 = tpu.matmul %8, %0, %cst_11 {dimension_numbers = #tpu.dot_dimension_numbers<[1], [0], [0], [1], [0, 0, 1, 1], [], []>} : vector<288x288xbf16>, vector<288x64xbf16>, vector<288x64xf32> -> vector<288x64xf32>
    %10 = arith.maximumf %7, %9 : vector<288x64xf32>
    %11 = arith.maximumf %5, %10 : vector<288x64xf32>
    %c0_12 = arith.constant 0 : index
    %c0_13 = arith.constant 0 : index
    %12 = vector.load %arg6[%c0_12, %c0_13] : memref<1x64xf32, #tpu.memory_space<vmem>>, vector<1x64xf32>
    %13 = vector.broadcast %12 : vector<1x64xf32> to vector<288x64xf32>
    %14 = arith.addf %11, %13 : vector<288x64xf32>
    %cst_14 = arith.constant 0.000000e+00 : f32
    %15 = vector.broadcast %cst_14 : f32 to vector<288x64xf32>
    %16 = arith.maximumf %14, %15 : vector<288x64xf32>
    %17 = arith.truncf %16 : vector<288x64xf32> to vector<288x64xbf16>
    %c0_15 = arith.constant 0 : index
    %c0_16 = arith.constant 0 : index
    %18 = vector.load %arg7[%c0_15, %c0_16] : memref<288x64xbf16, #tpu.memory_space<vmem>>, vector<288x64xbf16>
    tpu.vector_store %arg7[%c0_15, %c0_16], %17 {strides = array<i32>} : memref<288x64xbf16, #tpu.memory_space<vmem>>, vector<288x64xbf16>,
    return
  }
  func.func @transform_0(%arg0: i32) -> (i32, i32) {
    %c0_i32 = arith.constant 0 : i32
    %c0_i32_0 = arith.constant 0 : i32
    return %arg0, %c0_i32 : i32, i32
  }
  func.func @transform_1(%arg0: i32) -> (i32, i32) {
    %c0_i32 = arith.constant 0 : i32
    %c0_i32_0 = arith.constant 0 : i32
    return %arg0, %c0_i32 : i32, i32
  }
  func.func @transform_2(%arg0: i32) -> (i32, i32) {
    %c0_i32 = arith.constant 0 : i32
    %c0_i32_0 = arith.constant 0 : i32
    return %arg0, %c0_i32 : i32, i32
  }
  func.func @transform_3(%arg0: i32) -> (i32, i32) {
    %c0_i32 = arith.constant 0 : i32
    %c0_i32_0 = arith.constant 0 : i32
    return %arg0, %c0_i32 : i32, i32
  }
  func.func @transform_4(%arg0: i32) -> (i32, i32) {
    %c0_i32 = arith.constant 0 : i32
    %c0_i32_0 = arith.constant 0 : i32
    %c0_i32_1 = arith.constant 0 : i32
    return %c0_i32, %c0_i32_0 : i32, i32
  }
  func.func @transform_5(%arg0: i32) -> (i32, i32) {
    %c0_i32 = arith.constant 0 : i32
    %c0_i32_0 = arith.constant 0 : i32
    %c0_i32_1 = arith.constant 0 : i32
    return %c0_i32, %c0_i32_0 : i32, i32
  }
  func.func @transform_6(%arg0: i32) -> (i32, i32) {
    %c0_i32 = arith.constant 0 : i32
    %c0_i32_0 = arith.constant 0 : i32
    return %arg0, %c0_i32 : i32, i32
  }
}

module attributes {stable_mosaic.version = 11 : i64} {
  func.func @mlp_head_kernel(%arg0: i32, %arg1: i32, %arg2: memref<2x1152xbf16, #tpu.memory_space<vmem>>, %arg3: memref<1152x256xbf16, #tpu.memory_space<vmem>>, %arg4: memref<1x256xf32, #tpu.memory_space<vmem>>, %arg5: memref<256x10xbf16, #tpu.memory_space<vmem>>, %arg6: memref<1x10xf32, #tpu.memory_space<vmem>>, %arg7: memref<2x10xf32, #tpu.memory_space<vmem>>, %arg8: memref<2x256xf32, #tpu.memory_space<vmem>>) attributes {dimension_semantics = [#tpu.dimension_semantics<parallel>, #tpu.dimension_semantics<arbitrary>], iteration_bounds = array<i64: 1, 8>, scalar_prefetch = 0 : i64, scratch_operands = 1 : i64, tpu.core_type = #tpu.core_type<tc>, window_params = [{transform_indices = @transform_0, window_bounds = array<i64: 2, 1152>}, {transform_indices = @transform_1, window_bounds = array<i64: 1152, 256>}, {pipeline_mode = #tpu.pipeline_mode<synchronous>, transform_indices = @transform_2, window_bounds = array<i64: 1, 256>}, {pipeline_mode = #tpu.pipeline_mode<synchronous>, transform_indices = @transform_3, window_bounds = array<i64: 256, 10>}, {pipeline_mode = #tpu.pipeline_mode<synchronous>, transform_indices = @transform_4, window_bounds = array<i64: 1, 10>}, {transform_indices = @transform_5, window_bounds = array<i64: 2, 10>}]} {
    %c0_i32 = arith.constant 0 : i32
    %0 = arith.cmpi eq, %arg1, %c0_i32 : i32
    %1 = arith.extui %0 : i1 to i32
    %c0_i32_0 = arith.constant 0 : i32
    %2 = arith.cmpi ne, %1, %c0_i32_0 : i32
    scf.if %2 {
      %cst_9 = arith.constant 0.000000e+00 : f32
      %12 = vector.broadcast %cst_9 : f32 to vector<2x256xf32>
      %c0_10 = arith.constant 0 : index
      %c0_11 = arith.constant 0 : index
      %13 = vector.load %arg8[%c0_10, %c0_11] : memref<2x256xf32, #tpu.memory_space<vmem>>, vector<2x256xf32>
      tpu.vector_store %arg8[%c0_10, %c0_11], %12 {strides = array<i32>} : memref<2x256xf32, #tpu.memory_space<vmem>>, vector<2x256xf32>,
    } else {
    }
    %c0 = arith.constant 0 : index
    %c0_1 = arith.constant 0 : index
    %3 = vector.load %arg8[%c0, %c0_1] : memref<2x256xf32, #tpu.memory_space<vmem>>, vector<2x256xf32>
    %c0_2 = arith.constant 0 : index
    %c0_3 = arith.constant 0 : index
    %4 = vector.load %arg2[%c0_2, %c0_3] : memref<2x1152xbf16, #tpu.memory_space<vmem>>, vector<2x1152xbf16>
    %c0_4 = arith.constant 0 : index
    %c0_5 = arith.constant 0 : index
    %5 = vector.load %arg3[%c0_4, %c0_5] : memref<1152x256xbf16, #tpu.memory_space<vmem>>, vector<1152x256xbf16>
    %cst = arith.constant dense<0.000000e+00> : vector<2x256xf32>
    %6 = tpu.matmul %4, %5, %cst {dimension_numbers = #tpu.dot_dimension_numbers<[1], [0], [0], [1], [0, 0, 1, 1], [], []>} : vector<2x1152xbf16>, vector<1152x256xbf16>, vector<2x256xf32> -> vector<2x256xf32>
    %7 = arith.addf %3, %6 : vector<2x256xf32>
    %c0_6 = arith.constant 0 : index
    %c0_7 = arith.constant 0 : index
    %8 = vector.load %arg8[%c0_6, %c0_7] : memref<2x256xf32, #tpu.memory_space<vmem>>, vector<2x256xf32>
    tpu.vector_store %arg8[%c0_6, %c0_7], %7 {strides = array<i32>} : memref<2x256xf32, #tpu.memory_space<vmem>>, vector<2x256xf32>,
    %c7_i32 = arith.constant 7 : i32
    %9 = arith.cmpi eq, %arg1, %c7_i32 : i32
    %10 = arith.extui %9 : i1 to i32
    %c0_i32_8 = arith.constant 0 : i32
    %11 = arith.cmpi ne, %10, %c0_i32_8 : i32
    scf.if %11 {
      %c0_9 = arith.constant 0 : index
      %c0_10 = arith.constant 0 : index
      %12 = vector.load %arg8[%c0_9, %c0_10] : memref<2x256xf32, #tpu.memory_space<vmem>>, vector<2x256xf32>
      %c0_11 = arith.constant 0 : index
      %c0_12 = arith.constant 0 : index
      %13 = vector.load %arg4[%c0_11, %c0_12] : memref<1x256xf32, #tpu.memory_space<vmem>>, vector<1x256xf32>
      %14 = vector.broadcast %13 : vector<1x256xf32> to vector<2x256xf32>
      %15 = arith.addf %12, %14 : vector<2x256xf32>
      %cst_13 = arith.constant 0.000000e+00 : f32
      %16 = vector.broadcast %cst_13 : f32 to vector<2x256xf32>
      %17 = arith.maximumf %15, %16 : vector<2x256xf32>
      %18 = arith.truncf %17 : vector<2x256xf32> to vector<2x256xbf16>
      %c0_14 = arith.constant 0 : index
      %c0_15 = arith.constant 0 : index
      %19 = vector.load %arg5[%c0_14, %c0_15] : memref<256x10xbf16, #tpu.memory_space<vmem>>, vector<256x10xbf16>
      %cst_16 = arith.constant dense<0.000000e+00> : vector<2x10xf32>
      %20 = tpu.matmul %18, %19, %cst_16 {dimension_numbers = #tpu.dot_dimension_numbers<[1], [0], [0], [1], [0, 0, 1, 1], [], []>} : vector<2x256xbf16>, vector<256x10xbf16>, vector<2x10xf32> -> vector<2x10xf32>
      %c0_17 = arith.constant 0 : index
      %c0_18 = arith.constant 0 : index
      %21 = vector.load %arg6[%c0_17, %c0_18] : memref<1x10xf32, #tpu.memory_space<vmem>>, vector<1x10xf32>
      %22 = vector.broadcast %21 : vector<1x10xf32> to vector<2x10xf32>
      %23 = arith.addf %20, %22 : vector<2x10xf32>
      %cst_19 = arith.constant dense<0xFF800000> : vector<2xf32>
      %24 = vector.multi_reduction <maximumf>, %23, %cst_19 [1] : vector<2x10xf32> to vector<2xf32>
      %25 = vector.shape_cast %24 : vector<2xf32> to vector<2x1xf32>
      %26 = vector.broadcast %25 : vector<2x1xf32> to vector<2x10xf32>
      %27 = arith.subf %23, %26 : vector<2x10xf32>
      %28 = math.exp %27 : vector<2x10xf32>
      %cst_20 = arith.constant dense<0.000000e+00> : vector<2xf32>
      %29 = vector.multi_reduction <add>, %28, %cst_20 [1] : vector<2x10xf32> to vector<2xf32>
      %30 = vector.shape_cast %29 : vector<2xf32> to vector<2x1xf32>
      %31 = math.log %30 : vector<2x1xf32>
      %32 = vector.broadcast %31 : vector<2x1xf32> to vector<2x10xf32>
      %33 = arith.subf %27, %32 : vector<2x10xf32>
      %c0_21 = arith.constant 0 : index
      %c0_22 = arith.constant 0 : index
      %34 = vector.load %arg7[%c0_21, %c0_22] : memref<2x10xf32, #tpu.memory_space<vmem>>, vector<2x10xf32>
      tpu.vector_store %arg7[%c0_21, %c0_22], %33 {strides = array<i32>} : memref<2x10xf32, #tpu.memory_space<vmem>>, vector<2x10xf32>,
    } else {
    }
    return
  }
  func.func @transform_0(%arg0: i32, %arg1: i32) -> (i32, i32) {
    %c0_i32 = arith.constant 0 : i32
    return %arg0, %arg1 : i32, i32
  }
  func.func @transform_1(%arg0: i32, %arg1: i32) -> (i32, i32) {
    %c0_i32 = arith.constant 0 : i32
    %c0_i32_0 = arith.constant 0 : i32
    return %arg1, %c0_i32 : i32, i32
  }
  func.func @transform_2(%arg0: i32, %arg1: i32) -> (i32, i32) {
    %c0_i32 = arith.constant 0 : i32
    %c0_i32_0 = arith.constant 0 : i32
    %c0_i32_1 = arith.constant 0 : i32
    return %c0_i32, %c0_i32_0 : i32, i32
  }
  func.func @transform_3(%arg0: i32, %arg1: i32) -> (i32, i32) {
    %c0_i32 = arith.constant 0 : i32
    %c0_i32_0 = arith.constant 0 : i32
    %c0_i32_1 = arith.constant 0 : i32
    return %c0_i32, %c0_i32_0 : i32, i32
  }
  func.func @transform_4(%arg0: i32, %arg1: i32) -> (i32, i32) {
    %c0_i32 = arith.constant 0 : i32
    %c0_i32_0 = arith.constant 0 : i32
    %c0_i32_1 = arith.constant 0 : i32
    return %c0_i32, %c0_i32_0 : i32, i32
  }
  func.func @transform_5(%arg0: i32, %arg1: i32) -> (i32, i32) {
    %c0_i32 = arith.constant 0 : i32
    %c0_i32_0 = arith.constant 0 : i32
    return %arg0, %c0_i32 : i32, i32
  }
}

</mosaic_0001>

<llo_original>
// kernel: cnn_forward.3
$region0: #{cnn_forward.3}
  #allocation0 [shape = 'u32[]', space=smem, size = 0x4, offset = 0x4, fixed_abs, tag = 'smem constant byte address 0x4 - core index']
  #allocation1 [shape = 'u32[72,128]{1,0:T(1,128)}', space=vmem, size = 0x9000, scoped, tag = 'internal scratch']
  %s0 = inlined_call_operand.vmem [shape: bf16[1352,9], index: 0, kind: input, shape index: {}]
  %s1 = inlined_call_operand.hbm [shape: bf16[9,32], index: 1, kind: input, shape index: {}]
  %s2 = inlined_call_operand.hbm [shape: f32[1,32], index: 2, kind: input, shape index: {}]
  %s3 = inlined_call_operand.vmem [shape: bf16[1352,32], index: 3, kind: output, shape index: {}]
  %s4 = sld [smem:[#allocation0]]
  $region30: #{cnn_forward.3} parent=0
    _
  %s6 = ssub.s32 1, %s4
  %s7 = scalar_select 0, %s6, %s4
  $region1: #{cnn_forward.3} parent=0
    #allocation2 [shape = 'u8[4096]{0}', space=vmem, size = 0x1000, scoped, tag = 'input window, operand 1, single buffered']
    #allocation3 [shape = 's32[1]{0}', space=sflag, size = 0x4, scoped, tag = 'scoped memory for cnn_forward.3']
    #allocation4 [shape = 'u8[512]{0}', space=vmem, size = 0x400, scoped, tag = 'input window, operand 2, single buffered']
    #allocation5 [shape = 's32[1]{0}', space=sflag, size = 0x4, scoped, tag = 'scoped memory for cnn_forward.3']
    %8 = vsyncpa [#allocation3], 0
    %9 = vsyncpa [#allocation5], 0
    // Predicated region
    $region2: #{cnn_forward.3} parent=1 // pred_check
      _
    $region3: #{cnn_forward.3} parent=1 // pred_check_branch
      %11 = sbr.rel (0) target = $region5
    $region4: #{cnn_forward.3} parent=1 // pred_region
      _
    $region5: #{cnn_forward.3} parent=1 // pred_fallthru
      _
    // Predicated region
    $region6: #{cnn_forward.3} parent=1 // pred_check
      _
    $region7: #{cnn_forward.3} parent=1 // pred_check_branch
      %13 = sbr.rel (0) target = $region9
    $region8: #{cnn_forward.3} parent=1 // pred_region
      %15 = vsyncadd [#allocation3], 0
      %s16 = sshll.u32 %s1, 4
      %s17 = int_to_ptr.hbm [resolvable:$true] %s16
      %s18 = sshll.u32 [#allocation2], 4
      %s19 = int_to_ptr.vmem [resolvable:$true] %s18
      %24 = dma.hbm_to_vmem [thread:$0]  %s17, 128, %s19, [#allocation3], 64, 64, 4
    $region9: #{cnn_forward.3} parent=1 // pred_fallthru
      _
    // Predicated region
    $region10: #{cnn_forward.3} parent=1 // pred_check
      _
    $region11: #{cnn_forward.3} parent=1 // pred_check_branch
      %26 = sbr.rel (0) target = $region13
    $region12: #{cnn_forward.3} parent=1 // pred_region
      %28 = vsyncadd [#allocation5], 0
      %s30 = sshll.u32 %s2, 4
      %s31 = int_to_ptr.hbm [resolvable:$true] %s30
      %s32 = sshll.u32 [#allocation4], 4
      %s33 = int_to_ptr.vmem [resolvable:$true] %s32
      %35 = dma.hbm_to_vmem [thread:$0]  %s31, 16, %s33, [#allocation5]
    $region13: #{cnn_forward.3} parent=1 // pred_fallthru
      _
    // Predicated region
    $region14: #{cnn_forward.3} parent=1 // pred_check
      _
    $region15: #{cnn_forward.3} parent=1 // pred_check_branch
      %37 = sbr.rel (0) target = $region17
    $region16: #{cnn_forward.3} parent=1 // pred_region
      %39 = dma.done [#allocation3], 128
    $region17: #{cnn_forward.3} parent=1 // pred_fallthru
      _
    // Predicated region
    $region18: #{cnn_forward.3} parent=1 // pred_check
      _
    $region19: #{cnn_forward.3} parent=1 // pred_check_branch
      %41 = sbr.rel (0) target = $region21
    $region20: #{cnn_forward.3} parent=1 // pred_region
      %43 = dma.done [#allocation5], 16
    $region21: #{cnn_forward.3} parent=1 // pred_fallthru
      _
    %v45 = vld [vmem:[%s0] sm:$0xf]
    %v46 = vld [vmem:[%s0 + $0x4] sm:$0xf]
    %v47 = vld [vmem:[%s0 + $0x8] sm:$0xf]
    %v48 = vld [vmem:[%s0 + $0xc] sm:$0xf]
    %v49 = vld [vmem:[%s0 + $0x10] sm:$0xf]
    %v50 = vld [vmem:[%s0 + $0x14] sm:$0xf]
    %v51 = vld [vmem:[%s0 + $0x18] sm:$0xf]
    %v52 = vld [vmem:[%s0 + $0x1c] sm:$0xf]
    %v53 = vld [vmem:[%s0 + $0x20] sm:$0xf]
    %v54 = vld [vmem:[%s0 + $0x24] sm:$0xf]
    %v55 = vld [vmem:[%s0 + $0x28] sm:$0xf]
    %v56 = vld [vmem:[%s0 + $0x2c] sm:$0xf]
    %v57 = vld [vmem:[%s0 + $0x30] sm:$0xf]
    %v58 = vld [vmem:[%s0 + $0x34] sm:$0xf]
    %v59 = vld [vmem:[%s0 + $0x38] sm:$0xf]
    %v60 = vld [vmem:[%s0 + $0x3c] sm:$0xf]
    %v61 = vld [vmem:[%s0 + $0x40] sm:$0xf]
    %v62 = vld [vmem:[%s0 + $0x44] sm:$0xf]
    %v63 = vld [vmem:[%s0 + $0x48] sm:$0xf]
    %v64 = vld [vmem:[%s0 + $0x4c] sm:$0xf]
    %v65 = vld [vmem:[%s0 + $0x50] sm:$0xf]
    %v66 = vld [vmem:[%s0 + $0x54] sm:$0xf]
    %v67 = vld [vmem:[%s0 + $0x58] sm:$0xf]
    %v68 = vld [vmem:[%s0 + $0x5c] sm:$0xf]
    %v69 = vld [vmem:[%s0 + $0x60] sm:$0xf]
    %v70 = vld [vmem:[%s0 + $0x64] sm:$0xf]
    %v71 = vld [vmem:[%s0 + $0x68] sm:$0xf]
    %v72 = vld [vmem:[%s0 + $0x6c] sm:$0xf]
    %v73 = vld [vmem:[%s0 + $0x70] sm:$0xf]
    %v74 = vld [vmem:[%s0 + $0x74] sm:$0xf]
    %v75 = vld [vmem:[%s0 + $0x78] sm:$0xf]
    %v76 = vld [vmem:[%s0 + $0x7c] sm:$0xf]
    %v77 = vld [vmem:[%s0 + $0x80] sm:$0xf]
    %v78 = vld [vmem:[%s0 + $0x84] sm:$0xf]
    %v79 = vld [vmem:[%s0 + $0x88] sm:$0xf]
    %v80 = vld [vmem:[%s0 + $0x8c] sm:$0xf]
    %v81 = vld [vmem:[%s0 + $0x90] sm:$0xf]
    %v82 = vld [vmem:[%s0 + $0x94] sm:$0xf]
    %v83 = vld [vmem:[%s0 + $0x98] sm:$0xf]
    %v84 = vld [vmem:[%s0 + $0x9c] sm:$0xf]
    %v85 = vld [vmem:[%s0 + $0xa0] sm:$0xf]
    %v86 = vld [vmem:[%s0 + $0xa4] sm:$0xf]
    %v87 = vld [vmem:[%s0 + $0xa8] sm:$0xf]
    %v88 = vld [vmem:[%s0 + $0xac] sm:$0xf]
    %v89 = vld [vmem:[%s0 + $0xb0] sm:$0xf]
    %v90 = vld [vmem:[%s0 + $0xb4] sm:$0xf]
    %v91 = vld [vmem:[%s0 + $0xb8] sm:$0xf]
    %v92 = vld [vmem:[%s0 + $0xbc] sm:$0xf]
    %v93 = vld [vmem:[%s0 + $0xc0] sm:$0xf]
    %v94 = vld [vmem:[%s0 + $0xc4] sm:$0xf]
    %v95 = vld [vmem:[%s0 + $0xc8] sm:$0xf]
    %v96 = vld [vmem:[%s0 + $0xcc] sm:$0xf]
    %v97 = vld [vmem:[%s0 + $0xd0] sm:$0xf]
    %v98 = vld [vmem:[%s0 + $0xd4] sm:$0xf]
    %v99 = vld [vmem:[%s0 + $0xd8] sm:$0xf]
    %v100 = vld [vmem:[%s0 + $0xdc] sm:$0xf]
    %v101 = vld [vmem:[%s0 + $0xe0] sm:$0xf]
    %v102 = vld [vmem:[%s0 + $0xe4] sm:$0xf]
    %v103 = vld [vmem:[%s0 + $0xe8] sm:$0xf]
    %v104 = vld [vmem:[%s0 + $0xec] sm:$0xf]
    %v105 = vld [vmem:[%s0 + $0xf0] sm:$0xf]
    %v106 = vld [vmem:[%s0 + $0xf4] sm:$0xf]
    %v107 = vld [vmem:[%s0 + $0xf8] sm:$0xf]
    %v108 = vld [vmem:[%s0 + $0xfc] sm:$0xf]
    %v109 = vld [vmem:[%s0 + $0x100] sm:$0xf]
    %v110 = vld [vmem:[%s0 + $0x104] sm:$0xf]
    %v111 = vld [vmem:[%s0 + $0x108] sm:$0xf]
    %v112 = vld [vmem:[%s0 + $0x10c] sm:$0xf]
    %v113 = vld [vmem:[%s0 + $0x110] sm:$0xf]
    %v114 = vld [vmem:[%s0 + $0x114] sm:$0xf]
    %v115 = vld [vmem:[%s0 + $0x118] sm:$0xf]
    %v116 = vld [vmem:[%s0 + $0x11c] sm:$0xf]
    %v117 = vld [vmem:[%s0 + $0x120] sm:$0xf]
    %v118 = vld [vmem:[%s0 + $0x124] sm:$0xf]
    %v119 = vld [vmem:[%s0 + $0x128] sm:$0xf]
    %v120 = vld [vmem:[%s0 + $0x12c] sm:$0xf]
    %v121 = vld [vmem:[%s0 + $0x130] sm:$0xf]
    %v122 = vld [vmem:[%s0 + $0x134] sm:$0xf]
    %v123 = vld [vmem:[%s0 + $0x138] sm:$0xf]
    %v124 = vld [vmem:[%s0 + $0x13c] sm:$0xf]
    %v125 = vld [vmem:[%s0 + $0x140] sm:$0xf]
    %v126 = vld [vmem:[%s0 + $0x144] sm:$0xf]
    %v127 = vld [vmem:[%s0 + $0x148] sm:$0xf]
    %v128 = vld [vmem:[%s0 + $0x14c] sm:$0xf]
    %v129 = vld [vmem:[%s0 + $0x150] sm:$0xf]
    %v130 = vld [vmem:[%s0 + $0x154] sm:$0xf]
    %v131 = vld [vmem:[%s0 + $0x158] sm:$0xf]
    %v132 = vld [vmem:[%s0 + $0x15c] sm:$0xf]
    %v133 = vld [vmem:[%s0 + $0x160] sm:$0xf]
    %v134 = vld [vmem:[%s0 + $0x164] sm:$0xf]
    %v135 = vld [vmem:[%s0 + $0x168] sm:$0xf]
    %v136 = vld [vmem:[%s0 + $0x16c] sm:$0xf]
    %v137 = vld [vmem:[%s0 + $0x170] sm:$0xf]
    %v138 = vld [vmem:[%s0 + $0x174] sm:$0xf]
    %v139 = vld [vmem:[%s0 + $0x178] sm:$0xf]
    %v140 = vld [vmem:[%s0 + $0x17c] sm:$0xf]
    %v141 = vld [vmem:[%s0 + $0x180] sm:$0xf]
    %v142 = vld [vmem:[%s0 + $0x184] sm:$0xf]
    %v143 = vld [vmem:[%s0 + $0x188] sm:$0xf]
    %v144 = vld [vmem:[%s0 + $0x18c] sm:$0xf]
    %v145 = vld [vmem:[%s0 + $0x190] sm:$0xf]
    %v146 = vld [vmem:[%s0 + $0x194] sm:$0xf]
    %v147 = vld [vmem:[%s0 + $0x198] sm:$0xf]
    %v148 = vld [vmem:[%s0 + $0x19c] sm:$0xf]
    %v149 = vld [vmem:[%s0 + $0x1a0] sm:$0xf]
    %v150 = vld [vmem:[%s0 + $0x1a4] sm:$0xf]
    %v151 = vld [vmem:[%s0 + $0x1a8] sm:$0xf]
    %v152 = vld [vmem:[%s0 + $0x1ac] sm:$0xf]
    %v153 = vld [vmem:[%s0 + $0x1b0] sm:$0xf]
    %v154 = vld [vmem:[%s0 + $0x1b4] sm:$0xf]
    %v155 = vld [vmem:[%s0 + $0x1b8] sm:$0xf]
    %v156 = vld [vmem:[%s0 + $0x1bc] sm:$0xf]
    %v157 = vld [vmem:[%s0 + $0x1c0] sm:$0xf]
    %v158 = vld [vmem:[%s0 + $0x1c4] sm:$0xf]
    %v159 = vld [vmem:[%s0 + $0x1c8] sm:$0xf]
    %v160 = vld [vmem:[%s0 + $0x1cc] sm:$0xf]
    %v161 = vld [vmem:[%s0 + $0x1d0] sm:$0xf]
    %v162 = vld [vmem:[%s0 + $0x1d4] sm:$0xf]
    %v163 = vld [vmem:[%s0 + $0x1d8] sm:$0xf]
    %v164 = vld [vmem:[%s0 + $0x1dc] sm:$0xf]
    %v165 = vld [vmem:[%s0 + $0x1e0] sm:$0xf]
    %v166 = vld [vmem:[%s0 + $0x1e4] sm:$0xf]
    %v167 = vld [vmem:[%s0 + $0x1e8] sm:$0xf]
    %v168 = vld [vmem:[%s0 + $0x1ec] sm:$0xf]
    %v169 = vld [vmem:[%s0 + $0x1f0] sm:$0xf]
    %v170 = vld [vmem:[%s0 + $0x1f4] sm:$0xf]
    %v171 = vld [vmem:[%s0 + $0x1f8] sm:$0xf]
    %v172 = vld [vmem:[%s0 + $0x1fc] sm:$0xf]
    %v173 = vld [vmem:[%s0 + $0x200] sm:$0xf]
    %v174 = vld [vmem:[%s0 + $0x204] sm:$0xf]
    %v175 = vld [vmem:[%s0 + $0x208] sm:$0xf]
    %v176 = vld [vmem:[%s0 + $0x20c] sm:$0xf]
    %v177 = vld [vmem:[%s0 + $0x210] sm:$0xf]
    %v178 = vld [vmem:[%s0 + $0x214] sm:$0xf]
    %v179 = vld [vmem:[%s0 + $0x218] sm:$0xf]
    %v180 = vld [vmem:[%s0 + $0x21c] sm:$0xf]
    %v181 = vld [vmem:[%s0 + $0x220] sm:$0xf]
    %v182 = vld [vmem:[%s0 + $0x224] sm:$0xf]
    %v183 = vld [vmem:[%s0 + $0x228] sm:$0xf]
    %v184 = vld [vmem:[%s0 + $0x22c] sm:$0xf]
    %v185 = vld [vmem:[%s0 + $0x230] sm:$0xf]
    %v186 = vld [vmem:[%s0 + $0x234] sm:$0xf]
    %v187 = vld [vmem:[%s0 + $0x238] sm:$0xf]
    %v188 = vld [vmem:[%s0 + $0x23c] sm:$0xf]
    %v189 = vld [vmem:[%s0 + $0x240] sm:$0xf]
    %v190 = vld [vmem:[%s0 + $0x244] sm:$0xf]
    %v191 = vld [vmem:[%s0 + $0x248] sm:$0xf]
    %v192 = vld [vmem:[%s0 + $0x24c] sm:$0xf]
    %v193 = vld [vmem:[%s0 + $0x250] sm:$0xf]
    %v194 = vld [vmem:[%s0 + $0x254] sm:$0xf]
    %v195 = vld [vmem:[%s0 + $0x258] sm:$0xf]
    %v196 = vld [vmem:[%s0 + $0x25c] sm:$0xf]
    %v197 = vld [vmem:[%s0 + $0x260] sm:$0xf]
    %v198 = vld [vmem:[%s0 + $0x264] sm:$0xf]
    %v199 = vld [vmem:[%s0 + $0x268] sm:$0xf]
    %v200 = vld [vmem:[%s0 + $0x26c] sm:$0xf]
    %v201 = vld [vmem:[%s0 + $0x270] sm:$0xf]
    %v202 = vld [vmem:[%s0 + $0x274] sm:$0xf]
    %v203 = vld [vmem:[%s0 + $0x278] sm:$0xf]
    %v204 = vld [vmem:[%s0 + $0x27c] sm:$0xf]
    %v205 = vld [vmem:[%s0 + $0x280] sm:$0xf]
    %v206 = vld [vmem:[%s0 + $0x284] sm:$0xf]
    %v207 = vld [vmem:[%s0 + $0x288] sm:$0xf]
    %v208 = vld [vmem:[%s0 + $0x28c] sm:$0xf]
    %v209 = vld [vmem:[%s0 + $0x290] sm:$0xf]
    %v210 = vld [vmem:[%s0 + $0x294] sm:$0xf]
    %v211 = vld [vmem:[%s0 + $0x298] sm:$0xf]
    %v212 = vld [vmem:[%s0 + $0x29c] sm:$0xf]
    %v213 = vld [vmem:[%s0 + $0x2a0] sm:$0xf]
    %v214 = vld [vmem:[#allocation2] sm:$0xf]
    %v215 = vld [vmem:[#allocation2 + $0x4] sm:$0x1]
    %v216 = vld [vmem:[#allocation4] sm:$0x1]
    %v218 = vperm.slane %v216, 0
    %v389 = vunpack.c.l.b16 %v45
    %v390 = vunpack.c.l.b16 %v46
    %v391 = vunpack.c.l.b16 %v47
    %v392 = vunpack.c.l.b16 %v48
    %v393 = vunpack.c.l.b16 %v49
    %v394 = vunpack.c.l.b16 %v50
    %v395 = vunpack.c.l.b16 %v51
    %v396 = vunpack.c.l.b16 %v52
    %v397 = vunpack.c.l.b16 %v53
    %v398 = vunpack.c.l.b16 %v54
    %v399 = vunpack.c.l.b16 %v55
    %v400 = vunpack.c.l.b16 %v56
    %v401 = vunpack.c.l.b16 %v57
    %v402 = vunpack.c.l.b16 %v58
    %v403 = vunpack.c.l.b16 %v59
    %v404 = vunpack.c.l.b16 %v60
    %v405 = vunpack.c.l.b16 %v61
    %v406 = vunpack.c.l.b16 %v62
    %v407 = vunpack.c.l.b16 %v63
    %v408 = vunpack.c.l.b16 %v64
    %v409 = vunpack.c.l.b16 %v65
    %v410 = vunpack.c.l.b16 %v66
    %v411 = vunpack.c.l.b16 %v67
    %v412 = vunpack.c.l.b16 %v68
    %v413 = vunpack.c.l.b16 %v69
    %v414 = vunpack.c.l.b16 %v70
    %v415 = vunpack.c.l.b16 %v71
    %v416 = vunpack.c.l.b16 %v72
    %v417 = vunpack.c.l.b16 %v73
    %v418 = vunpack.c.l.b16 %v74
    %v419 = vunpack.c.l.b16 %v75
    %v420 = vunpack.c.l.b16 %v76
    %v421 = vunpack.c.l.b16 %v77
    %v422 = vunpack.c.l.b16 %v78
    %v423 = vunpack.c.l.b16 %v79
    %v424 = vunpack.c.l.b16 %v80
    %v425 = vunpack.c.l.b16 %v81
    %v426 = vunpack.c.l.b16 %v82
    %v427 = vunpack.c.l.b16 %v83
    %v428 = vunpack.c.l.b16 %v84
    %v429 = vunpack.c.l.b16 %v85
    %v430 = vunpack.c.l.b16 %v86
    %v431 = vunpack.c.l.b16 %v87
    %v432 = vunpack.c.l.b16 %v88
    %v433 = vunpack.c.l.b16 %v89
    %v434 = vunpack.c.l.b16 %v90
    %v435 = vunpack.c.l.b16 %v91
    %v436 = vunpack.c.l.b16 %v92
    %v437 = vunpack.c.l.b16 %v93
    %v438 = vunpack.c.l.b16 %v94
    %v439 = vunpack.c.l.b16 %v95
    %v440 = vunpack.c.l.b16 %v96
    %v441 = vunpack.c.l.b16 %v97
    %v442 = vunpack.c.l.b16 %v98
    %v443 = vunpack.c.l.b16 %v99
    %v444 = vunpack.c.l.b16 %v100
    %v445 = vunpack.c.l.b16 %v101
    %v446 = vunpack.c.l.b16 %v102
    %v447 = vunpack.c.l.b16 %v103
    %v448 = vunpack.c.l.b16 %v104
    %v449 = vunpack.c.l.b16 %v105
    %v450 = vunpack.c.l.b16 %v106
    %v451 = vunpack.c.l.b16 %v107
    %v452 = vunpack.c.l.b16 %v108
    %v453 = vunpack.c.l.b16 %v109
    %v454 = vunpack.c.l.b16 %v110
    %v455 = vunpack.c.l.b16 %v111
    %v456 = vunpack.c.l.b16 %v112
    %v457 = vunpack.c.l.b16 %v113
    %v458 = vunpack.c.l.b16 %v114
    %v459 = vunpack.c.l.b16 %v115
    %v460 = vunpack.c.l.b16 %v116
    %v461 = vunpack.c.l.b16 %v117
    %v462 = vunpack.c.l.b16 %v118
    %v463 = vunpack.c.l.b16 %v119
    %v464 = vunpack.c.l.b16 %v120
    %v465 = vunpack.c.l.b16 %v121
    %v466 = vunpack.c.l.b16 %v122
    %v467 = vunpack.c.l.b16 %v123
    %v468 = vunpack.c.l.b16 %v124
    %v469 = vunpack.c.l.b16 %v125
    %v470 = vunpack.c.l.b16 %v126
    %v471 = vunpack.c.l.b16 %v127
    %v472 = vunpack.c.l.b16 %v128
    %v473 = vunpack.c.l.b16 %v129
    %v474 = vunpack.c.l.b16 %v130
    %v475 = vunpack.c.l.b16 %v131
    %v476 = vunpack.c.l.b16 %v132
    %v477 = vunpack.c.l.b16 %v133
    %v478 = vunpack.c.l.b16 %v134
    %v479 = vunpack.c.l.b16 %v135
    %v480 = vunpack.c.l.b16 %v136
    %v481 = vunpack.c.l.b16 %v137
    %v482 = vunpack.c.l.b16 %v138
    %v483 = vunpack.c.l.b16 %v139
    %v484 = vunpack.c.l.b16 %v140
    %v485 = vunpack.c.l.b16 %v141
    %v486 = vunpack.c.l.b16 %v142
    %v487 = vunpack.c.l.b16 %v143
    %v488 = vunpack.c.l.b16 %v144
    %v489 = vunpack.c.l.b16 %v145
    %v490 = vunpack.c.l.b16 %v146
    %v491 = vunpack.c.l.b16 %v147
    %v492 = vunpack.c.l.b16 %v148
    %v493 = vunpack.c.l.b16 %v149
    %v494 = vunpack.c.l.b16 %v150
    %v495 = vunpack.c.l.b16 %v151
    %v496 = vunpack.c.l.b16 %v152
    %v497 = vunpack.c.l.b16 %v153
    %v498 = vunpack.c.l.b16 %v154
    %v499 = vunpack.c.l.b16 %v155
    %v500 = vunpack.c.l.b16 %v156
    %v501 = vunpack.c.l.b16 %v157
    %v502 = vunpack.c.l.b16 %v158
    %v503 = vunpack.c.l.b16 %v159
    %v504 = vunpack.c.l.b16 %v160
    %v505 = vunpack.c.l.b16 %v161
    %v506 = vunpack.c.l.b16 %v162
    %v507 = vunpack.c.l.b16 %v163
    %v508 = vunpack.c.l.b16 %v164
    %v509 = vunpack.c.l.b16 %v165
    %v510 = vunpack.c.l.b16 %v166
    %v511 = vunpack.c.l.b16 %v167
    %v512 = vunpack.c.l.b16 %v168
    %v513 = vunpack.c.l.b16 %v169
    %v514 = vunpack.c.l.b16 %v170
    %v515 = vunpack.c.l.b16 %v171
    %v516 = vunpack.c.l.b16 %v172
    %v517 = vunpack.c.l.b16 %v173
    %v518 = vunpack.c.l.b16 %v174
    %v519 = vunpack.c.l.b16 %v175
    %v520 = vunpack.c.l.b16 %v176
    %v521 = vunpack.c.l.b16 %v177
    %v522 = vunpack.c.l.b16 %v178
    %v523 = vunpack.c.l.b16 %v179
    %v524 = vunpack.c.l.b16 %v180
    %v525 = vunpack.c.l.b16 %v181
    %v526 = vunpack.c.l.b16 %v182
    %v527 = vunpack.c.l.b16 %v183
    %v528 = vunpack.c.l.b16 %v184
    %v529 = vunpack.c.l.b16 %v185
    %v530 = vunpack.c.l.b16 %v186
    %v531 = vunpack.c.l.b16 %v187
    %v532 = vunpack.c.l.b16 %v188
    %v533 = vunpack.c.l.b16 %v189
    %v534 = vunpack.c.l.b16 %v190
    %v535 = vunpack.c.l.b16 %v191
    %v536 = vunpack.c.l.b16 %v192
    %v537 = vunpack.c.l.b16 %v193
    %v538 = vunpack.c.l.b16 %v194
    %v539 = vunpack.c.l.b16 %v195
    %v540 = vunpack.c.l.b16 %v196
    %v541 = vunpack.c.l.b16 %v197
    %v542 = vunpack.c.l.b16 %v198
    %v543 = vunpack.c.l.b16 %v199
    %v544 = vunpack.c.l.b16 %v200
    %v545 = vunpack.c.l.b16 %v201
    %v546 = vunpack.c.l.b16 %v202
    %v547 = vunpack.c.l.b16 %v203
    %v548 = vunpack.c.l.b16 %v204
    %v549 = vunpack.c.l.b16 %v205
    %v550 = vunpack.c.l.b16 %v206
    %v551 = vunpack.c.l.b16 %v207
    %v552 = vunpack.c.l.b16 %v208
    %v553 = vunpack.c.l.b16 %v209
    %v554 = vunpack.c.l.b16 %v210
    %v555 = vunpack.c.l.b16 %v211
    %v556 = vunpack.c.l.b16 %v212
    %v557 = vunpack.c.l.b16 %v213
    %v558 = vpack.c.b16 %v390, %v389
    %v559 = vpack.c.b16 %v392, %v391
    %v560 = vpack.c.b16 %v394, %v393
    %v561 = vpack.c.b16 %v396, %v395
    %v562 = vpack.c.b16 %v398, %v397
    %v563 = vpack.c.b16 %v400, %v399
    %v564 = vpack.c.b16 %v402, %v401
    %v565 = vpack.c.b16 %v404, %v403
    %v566 = vpack.c.b16 %v406, %v405
    %v567 = vpack.c.b16 %v408, %v407
    %v568 = vpack.c.b16 %v410, %v409
    %v569 = vpack.c.b16 %v412, %v411
    %v570 = vpack.c.b16 %v414, %v413
    %v571 = vpack.c.b16 %v416, %v415
    %v572 = vpack.c.b16 %v418, %v417
    %v573 = vpack.c.b16 %v420, %v419
    %v574 = vpack.c.b16 %v422, %v421
    %v575 = vpack.c.b16 %v424, %v423
    %v576 = vpack.c.b16 %v426, %v425
    %v577 = vpack.c.b16 %v428, %v427
    %v578 = vpack.c.b16 %v430, %v429
    %v579 = vpack.c.b16 %v432, %v431
    %v580 = vpack.c.b16 %v434, %v433
    %v581 = vpack.c.b16 %v436, %v435
    %v582 = vpack.c.b16 %v438, %v437
    %v583 = vpack.c.b16 %v440, %v439
    %v584 = vpack.c.b16 %v442, %v441
    %v585 = vpack.c.b16 %v444, %v443
    %v586 = vpack.c.b16 %v446, %v445
    %v587 = vpack.c.b16 %v448, %v447
    %v588 = vpack.c.b16 %v450, %v449
    %v589 = vpack.c.b16 %v452, %v451
    %v590 = vpack.c.b16 %v454, %v453
    %v591 = vpack.c.b16 %v456, %v455
    %v592 = vpack.c.b16 %v458, %v457
    %v593 = vpack.c.b16 %v460, %v459
    %v594 = vpack.c.b16 %v462, %v461
    %v595 = vpack.c.b16 %v464, %v463
    %v596 = vpack.c.b16 %v466, %v465
    %v597 = vpack.c.b16 %v468, %v467
    %v598 = vpack.c.b16 %v470, %v469
    %v599 = vpack.c.b16 %v472, %v471
    %v600 = vpack.c.b16 %v474, %v473
    %v601 = vpack.c.b16 %v476, %v475
    %v602 = vpack.c.b16 %v478, %v477
    %v603 = vpack.c.b16 %v480, %v479
    %v604 = vpack.c.b16 %v482, %v481
    %v605 = vpack.c.b16 %v484, %v483
    %v606 = vpack.c.b16 %v486, %v485
    %v607 = vpack.c.b16 %v488, %v487
    %v608 = vpack.c.b16 %v490, %v489
    %v609 = vpack.c.b16 %v492, %v491
    %v610 = vpack.c.b16 %v494, %v493
    %v611 = vpack.c.b16 %v496, %v495
    %v612 = vpack.c.b16 %v498, %v497
    %v613 = vpack.c.b16 %v500, %v499
    %v614 = vpack.c.b16 %v502, %v501
    %v615 = vpack.c.b16 %v504, %v503
    %v616 = vpack.c.b16 %v506, %v505
    %v617 = vpack.c.b16 %v508, %v507
    %v618 = vpack.c.b16 %v510, %v509
    %v619 = vpack.c.b16 %v512, %v511
    %v620 = vpack.c.b16 %v514, %v513
    %v621 = vpack.c.b16 %v516, %v515
    %v622 = vpack.c.b16 %v518, %v517
    %v623 = vpack.c.b16 %v520, %v519
    %v624 = vpack.c.b16 %v522, %v521
    %v625 = vpack.c.b16 %v524, %v523
    %v626 = vpack.c.b16 %v526, %v525
    %v627 = vpack.c.b16 %v528, %v527
    %v628 = vpack.c.b16 %v530, %v529
    %v629 = vpack.c.b16 %v532, %v531
    %v630 = vpack.c.b16 %v534, %v533
    %v631 = vpack.c.b16 %v536, %v535
    %v632 = vpack.c.b16 %v538, %v537
    %v633 = vpack.c.b16 %v540, %v539
    %v634 = vpack.c.b16 %v542, %v541
    %v635 = vpack.c.b16 %v544, %v543
    %v636 = vpack.c.b16 %v546, %v545
    %v637 = vpack.c.b16 %v548, %v547
    %v638 = vpack.c.b16 %v550, %v549
    %v639 = vpack.c.b16 %v552, %v551
    %v640 = vpack.c.b16 %v554, %v553
    %v641 = vpack.c.b16 %v556, %v555
    %v642 = vpack.c.b16 %v557, %v557
    %v645 = vunpack.c.l.b16 %v214
    %v646 = vunpack.c.l.b16 %v215
    %v647 = vpack.c.b16 %v646, %v645
    %vm648 = vcmask 72704
    %v650 = vsel %vm648, %v558, 0
    %v653 = vsel %vm648, %v559, 0
    %v656 = vsel %vm648, %v560, 0
    %v659 = vsel %vm648, %v561, 0
    %v662 = vsel %vm648, %v562, 0
    %v665 = vsel %vm648, %v563, 0
    %v668 = vsel %vm648, %v564, 0
    %v671 = vsel %vm648, %v565, 0
    %v674 = vsel %vm648, %v566, 0
    %v677 = vsel %vm648, %v567, 0
    %v680 = vsel %vm648, %v568, 0
    %v683 = vsel %vm648, %v569, 0
    %v686 = vsel %vm648, %v570, 0
    %v689 = vsel %vm648, %v571, 0
    %v692 = vsel %vm648, %v572, 0
    %v695 = vsel %vm648, %v573, 0
    %v698 = vsel %vm648, %v574, 0
    %v701 = vsel %vm648, %v575, 0
    %v704 = vsel %vm648, %v576, 0
    %v707 = vsel %vm648, %v577, 0
    %v710 = vsel %vm648, %v578, 0
    %v713 = vsel %vm648, %v579, 0
    %v716 = vsel %vm648, %v580, 0
    %v719 = vsel %vm648, %v581, 0
    %v722 = vsel %vm648, %v582, 0
    %v725 = vsel %vm648, %v583, 0
    %v728 = vsel %vm648, %v584, 0
    %v731 = vsel %vm648, %v585, 0
    %v734 = vsel %vm648, %v586, 0
    %v737 = vsel %vm648, %v587, 0
    %v740 = vsel %vm648, %v588, 0
    %v743 = vsel %vm648, %v589, 0
    %v746 = vsel %vm648, %v590, 0
    %v749 = vsel %vm648, %v591, 0
    %v752 = vsel %vm648, %v592, 0
    %v755 = vsel %vm648, %v593, 0
    %v758 = vsel %vm648, %v594, 0
    %v761 = vsel %vm648, %v595, 0
    %v764 = vsel %vm648, %v596, 0
    %v767 = vsel %vm648, %v597, 0
    %v770 = vsel %vm648, %v598, 0
    %v773 = vsel %vm648, %v599, 0
    %v776 = vsel %vm648, %v600, 0
    %v779 = vsel %vm648, %v601, 0
    %v782 = vsel %vm648, %v602, 0
    %v785 = vsel %vm648, %v603, 0
    %v788 = vsel %vm648, %v604, 0
    %v791 = vsel %vm648, %v605, 0
    %v794 = vsel %vm648, %v606, 0
    %v797 = vsel %vm648, %v607, 0
    %v800 = vsel %vm648, %v608, 0
    %v803 = vsel %vm648, %v609, 0
    %v806 = vsel %vm648, %v610, 0
    %v809 = vsel %vm648, %v611, 0
    %v812 = vsel %vm648, %v612, 0
    %v815 = vsel %vm648, %v613, 0
    %v818 = vsel %vm648, %v614, 0
    %v821 = vsel %vm648, %v615, 0
    %v824 = vsel %vm648, %v616, 0
    %v827 = vsel %vm648, %v617, 0
    %v830 = vsel %vm648, %v618, 0
    %v833 = vsel %vm648, %v619, 0
    %v836 = vsel %vm648, %v620, 0
    %v839 = vsel %vm648, %v621, 0
    %v842 = vsel %vm648, %v622, 0
    %v845 = vsel %vm648, %v623, 0
    %v848 = vsel %vm648, %v624, 0
    %v851 = vsel %vm648, %v625, 0
    %v854 = vsel %vm648, %v626, 0
    %v857 = vsel %vm648, %v627, 0
    %v860 = vsel %vm648, %v628, 0
    %v863 = vsel %vm648, %v629, 0
    %v866 = vsel %vm648, %v630, 0
    %v869 = vsel %vm648, %v631, 0
    %v872 = vsel %vm648, %v632, 0
    %v875 = vsel %vm648, %v633, 0
    %v878 = vsel %vm648, %v634, 0
    %v881 = vsel %vm648, %v635, 0
    %v884 = vsel %vm648, %v636, 0
    %v887 = vsel %vm648, %v637, 0
    %v890 = vsel %vm648, %v638, 0
    %v893 = vsel %vm648, %v639, 0
    %v896 = vsel %vm648, %v640, 0
    %v899 = vsel %vm648, %v641, 0
    %v902 = vsel %vm648, %v642, 0
    %vm904 = vcmask 1043456
    %vm905 = vcmask 1044480
    %v906 = vsel %vm904, 4294967295, 65535
    %v907 = vsel %vm905, %v906, 0
    %v909 = vand.u32 %v647, %v907
    %911 = vmatpush.bf16.msra.mxu0 0
    %912 = vmatpush.bf16.msra.mxu0 0
    %913 = vmatpush.bf16.msra.mxu0 0
    %914 = vmatpush.bf16.msra.mxu0 0
    %915 = vmatpush.bf16.msra.mxu0 0
    %916 = vmatpush.bf16.msra.mxu0 0
    %917 = vmatpush.bf16.msra.mxu0 0
    %918 = vmatpush.bf16.msra.mxu0 %v909
    %919 = vmatmul.bf16.gmra.mxu0 %v650
    %v920 = vpop.f32.mrf.mxu0
    %v921 = vadd.f32 %v218, %v920
    %v922 = vpop.f32.mrf.mxu0
    %v923 = vadd.f32 %v218, %v922
    %924 = vmatmul.bf16.gmra.mxu0 %v653
    %v925 = vpop.f32.mrf.mxu0
    %v926 = vadd.f32 %v218, %v925
    %v927 = vpop.f32.mrf.mxu0
    %v928 = vadd.f32 %v218, %v927
    %929 = vmatmul.bf16.gmra.mxu0 %v656
    %v930 = vpop.f32.mrf.mxu0
    %v931 = vadd.f32 %v218, %v930
    %v932 = vpop.f32.mrf.mxu0
    %v933 = vadd.f32 %v218, %v932
    %934 = vmatmul.bf16.gmra.mxu0 %v659
    %v935 = vpop.f32.mrf.mxu0
    %v936 = vadd.f32 %v218, %v935
    %v937 = vpop.f32.mrf.mxu0
    %v938 = vadd.f32 %v218, %v937
    %939 = vmatmul.bf16.gmra.mxu0 %v662
    %v940 = vpop.f32.mrf.mxu0
    %v941 = vadd.f32 %v218, %v940
    %v942 = vpop.f32.mrf.mxu0
    %v943 = vadd.f32 %v218, %v942
    %944 = vmatmul.bf16.gmra.mxu0 %v665
    %v945 = vpop.f32.mrf.mxu0
    %v946 = vadd.f32 %v218, %v945
    %v947 = vpop.f32.mrf.mxu0
    %v948 = vadd.f32 %v218, %v947
    %949 = vmatmul.bf16.gmra.mxu0 %v668
    %v950 = vpop.f32.mrf.mxu0
    %v951 = vadd.f32 %v218, %v950
    %v952 = vpop.f32.mrf.mxu0
    %v953 = vadd.f32 %v218, %v952
    %954 = vmatmul.bf16.gmra.mxu0 %v671
    %v955 = vpop.f32.mrf.mxu0
    %v956 = vadd.f32 %v218, %v955
    %v957 = vpop.f32.mrf.mxu0
    %v958 = vadd.f32 %v218, %v957
    %959 = vmatmul.bf16.gmra.mxu0 %v674
    %v960 = vpop.f32.mrf.mxu0
    %v961 = vadd.f32 %v218, %v960
    %v962 = vpop.f32.mrf.mxu0
    %v963 = vadd.f32 %v218, %v962
    %964 = vmatmul.bf16.gmra.mxu0 %v677
    %v965 = vpop.f32.mrf.mxu0
    %v966 = vadd.f32 %v218, %v965
    %v967 = vpop.f32.mrf.mxu0
    %v968 = vadd.f32 %v218, %v967
    %969 = vmatmul.bf16.gmra.mxu0 %v680
    %v970 = vpop.f32.mrf.mxu0
    %v971 = vadd.f32 %v218, %v970
    %v972 = vpop.f32.mrf.mxu0
    %v973 = vadd.f32 %v218, %v972
    %974 = vmatmul.bf16.gmra.mxu0 %v683
    %v975 = vpop.f32.mrf.mxu0
    %v976 = vadd.f32 %v218, %v975
    %v977 = vpop.f32.mrf.mxu0
    %v978 = vadd.f32 %v218, %v977
    %979 = vmatmul.bf16.gmra.mxu0 %v686
    %v980 = vpop.f32.mrf.mxu0
    %v981 = vadd.f32 %v218, %v980
    %v982 = vpop.f32.mrf.mxu0
    %v983 = vadd.f32 %v218, %v982
    %984 = vmatmul.bf16.gmra.mxu0 %v689
    %v985 = vpop.f32.mrf.mxu0
    %v986 = vadd.f32 %v218, %v985
    %v987 = vpop.f32.mrf.mxu0
    %v988 = vadd.f32 %v218, %v987
    %989 = vmatmul.bf16.gmra.mxu0 %v692
    %v990 = vpop.f32.mrf.mxu0
    %v991 = vadd.f32 %v218, %v990
    %v992 = vpop.f32.mrf.mxu0
    %v993 = vadd.f32 %v218, %v992
    %994 = vmatmul.bf16.gmra.mxu0 %v695
    %v995 = vpop.f32.mrf.mxu0
    %v996 = vadd.f32 %v218, %v995
    %v997 = vpop.f32.mrf.mxu0
    %v998 = vadd.f32 %v218, %v997
    %999 = vmatmul.bf16.gmra.mxu0 %v698
    %v1000 = vpop.f32.mrf.mxu0
    %v1001 = vadd.f32 %v218, %v1000
    %v1002 = vpop.f32.mrf.mxu0
    %v1003 = vadd.f32 %v218, %v1002
    %1004 = vmatmul.bf16.gmra.mxu0 %v701
    %v1005 = vpop.f32.mrf.mxu0
    %v1006 = vadd.f32 %v218, %v1005
    %v1007 = vpop.f32.mrf.mxu0
    %v1008 = vadd.f32 %v218, %v1007
    %1009 = vmatmul.bf16.gmra.mxu0 %v704
    %v1010 = vpop.f32.mrf.mxu0
    %v1011 = vadd.f32 %v218, %v1010
    %v1012 = vpop.f32.mrf.mxu0
    %v1013 = vadd.f32 %v218, %v1012
    %1014 = vmatmul.bf16.gmra.mxu0 %v707
    %v1015 = vpop.f32.mrf.mxu0
    %v1016 = vadd.f32 %v218, %v1015
    %v1017 = vpop.f32.mrf.mxu0
    %v1018 = vadd.f32 %v218, %v1017
    %1019 = vmatmul.bf16.gmra.mxu0 %v710
    %v1020 = vpop.f32.mrf.mxu0
    %v1021 = vadd.f32 %v218, %v1020
    %v1022 = vpop.f32.mrf.mxu0
    %v1023 = vadd.f32 %v218, %v1022
    %1024 = vmatmul.bf16.gmra.mxu0 %v713
    %v1025 = vpop.f32.mrf.mxu0
    %v1026 = vadd.f32 %v218, %v1025
    %v1027 = vpop.f32.mrf.mxu0
    %v1028 = vadd.f32 %v218, %v1027
    %1029 = vmatmul.bf16.gmra.mxu0 %v716
    %v1030 = vpop.f32.mrf.mxu0
    %v1031 = vadd.f32 %v218, %v1030
    %v1032 = vpop.f32.mrf.mxu0
    %v1033 = vadd.f32 %v218, %v1032
    %1034 = vmatmul.bf16.gmra.mxu0 %v719
    %v1035 = vpop.f32.mrf.mxu0
    %v1036 = vadd.f32 %v218, %v1035
    %v1037 = vpop.f32.mrf.mxu0
    %v1038 = vadd.f32 %v218, %v1037
    %1039 = vmatmul.bf16.gmra.mxu0 %v722
    %v1040 = vpop.f32.mrf.mxu0
    %v1041 = vadd.f32 %v218, %v1040
    %v1042 = vpop.f32.mrf.mxu0
    %v1043 = vadd.f32 %v218, %v1042
    %1044 = vmatmul.bf16.gmra.mxu0 %v725
    %v1045 = vpop.f32.mrf.mxu0
    %v1046 = vadd.f32 %v218, %v1045
    %v1047 = vpop.f32.mrf.mxu0
    %v1048 = vadd.f32 %v218, %v1047
    %1049 = vmatmul.bf16.gmra.mxu0 %v728
    %v1050 = vpop.f32.mrf.mxu0
    %v1051 = vadd.f32 %v218, %v1050
    %v1052 = vpop.f32.mrf.mxu0
    %v1053 = vadd.f32 %v218, %v1052
    %1054 = vmatmul.bf16.gmra.mxu0 %v731
    %v1055 = vpop.f32.mrf.mxu0
    %v1056 = vadd.f32 %v218, %v1055
    %v1057 = vpop.f32.mrf.mxu0
    %v1058 = vadd.f32 %v218, %v1057
    %1059 = vmatmul.bf16.gmra.mxu0 %v734
    %v1060 = vpop.f32.mrf.mxu0
    %v1061 = vadd.f32 %v218, %v1060
    %v1062 = vpop.f32.mrf.mxu0
    %v1063 = vadd.f32 %v218, %v1062
    %1064 = vmatmul.bf16.gmra.mxu0 %v737
    %v1065 = vpop.f32.mrf.mxu0
    %v1066 = vadd.f32 %v218, %v1065
    %v1067 = vpop.f32.mrf.mxu0
    %v1068 = vadd.f32 %v218, %v1067
    %1069 = vmatmul.bf16.gmra.mxu0 %v740
    %v1070 = vpop.f32.mrf.mxu0
    %v1071 = vadd.f32 %v218, %v1070
    %v1072 = vpop.f32.mrf.mxu0
    %v1073 = vadd.f32 %v218, %v1072
    %1074 = vmatmul.bf16.gmra.mxu0 %v743
    %v1075 = vpop.f32.mrf.mxu0
    %v1076 = vadd.f32 %v218, %v1075
    %v1077 = vpop.f32.mrf.mxu0
    %v1078 = vadd.f32 %v218, %v1077
    %1079 = vmatmul.bf16.gmra.mxu0 %v746
    %v1080 = vpop.f32.mrf.mxu0
    %v1081 = vadd.f32 %v218, %v1080
    %v1082 = vpop.f32.mrf.mxu0
    %v1083 = vadd.f32 %v218, %v1082
    %1084 = vmatmul.bf16.gmra.mxu0 %v749
    %v1085 = vpop.f32.mrf.mxu0
    %v1086 = vadd.f32 %v218, %v1085
    %v1087 = vpop.f32.mrf.mxu0
    %v1088 = vadd.f32 %v218, %v1087
    %1089 = vmatmul.bf16.gmra.mxu0 %v752
    %v1090 = vpop.f32.mrf.mxu0
    %v1091 = vadd.f32 %v218, %v1090
    %v1092 = vpop.f32.mrf.mxu0
    %v1093 = vadd.f32 %v218, %v1092
    %1094 = vmatmul.bf16.gmra.mxu0 %v755
    %v1095 = vpop.f32.mrf.mxu0
    %v1096 = vadd.f32 %v218, %v1095
    %v1097 = vpop.f32.mrf.mxu0
    %v1098 = vadd.f32 %v218, %v1097
    %1099 = vmatmul.bf16.gmra.mxu0 %v758
    %v1100 = vpop.f32.mrf.mxu0
    %v1101 = vadd.f32 %v218, %v1100
    %v1102 = vpop.f32.mrf.mxu0
    %v1103 = vadd.f32 %v218, %v1102
    %1104 = vmatmul.bf16.gmra.mxu0 %v761
    %v1105 = vpop.f32.mrf.mxu0
    %v1106 = vadd.f32 %v218, %v1105
    %v1107 = vpop.f32.mrf.mxu0
    %v1108 = vadd.f32 %v218, %v1107
    %1109 = vmatmul.bf16.gmra.mxu0 %v764
    %v1110 = vpop.f32.mrf.mxu0
    %v1111 = vadd.f32 %v218, %v1110
    %v1112 = vpop.f32.mrf.mxu0
    %v1113 = vadd.f32 %v218, %v1112
    %1114 = vmatmul.bf16.gmra.mxu0 %v767
    %v1115 = vpop.f32.mrf.mxu0
    %v1116 = vadd.f32 %v218, %v1115
    %v1117 = vpop.f32.mrf.mxu0
    %v1118 = vadd.f32 %v218, %v1117
    %1119 = vmatmul.bf16.gmra.mxu0 %v770
    %v1120 = vpop.f32.mrf.mxu0
    %v1121 = vadd.f32 %v218, %v1120
    %v1122 = vpop.f32.mrf.mxu0
    %v1123 = vadd.f32 %v218, %v1122
    %1124 = vmatmul.bf16.gmra.mxu0 %v773
    %v1125 = vpop.f32.mrf.mxu0
    %v1126 = vadd.f32 %v218, %v1125
    %v1127 = vpop.f32.mrf.mxu0
    %v1128 = vadd.f32 %v218, %v1127
    %1129 = vmatmul.bf16.gmra.mxu0 %v776
    %v1130 = vpop.f32.mrf.mxu0
    %v1131 = vadd.f32 %v218, %v1130
    %v1132 = vpop.f32.mrf.mxu0
    %v1133 = vadd.f32 %v218, %v1132
    %1134 = vmatmul.bf16.gmra.mxu0 %v779
    %v1135 = vpop.f32.mrf.mxu0
    %v1136 = vadd.f32 %v218, %v1135
    %v1137 = vpop.f32.mrf.mxu0
    %v1138 = vadd.f32 %v218, %v1137
    %1139 = vmatmul.bf16.gmra.mxu0 %v782
    %v1140 = vpop.f32.mrf.mxu0
    %v1141 = vadd.f32 %v218, %v1140
    %v1142 = vpop.f32.mrf.mxu0
    %v1143 = vadd.f32 %v218, %v1142
    %1144 = vmatmul.bf16.gmra.mxu0 %v785
    %v1145 = vpop.f32.mrf.mxu0
    %v1146 = vadd.f32 %v218, %v1145
    %v1147 = vpop.f32.mrf.mxu0
    %v1148 = vadd.f32 %v218, %v1147
    %1149 = vmatmul.bf16.gmra.mxu0 %v788
    %v1150 = vpop.f32.mrf.mxu0
    %v1151 = vadd.f32 %v218, %v1150
    %v1152 = vpop.f32.mrf.mxu0
    %v1153 = vadd.f32 %v218, %v1152
    %1154 = vmatmul.bf16.gmra.mxu0 %v791
    %v1155 = vpop.f32.mrf.mxu0
    %v1156 = vadd.f32 %v218, %v1155
    %v1157 = vpop.f32.mrf.mxu0
    %v1158 = vadd.f32 %v218, %v1157
    %1159 = vmatmul.bf16.gmra.mxu0 %v794
    %v1160 = vpop.f32.mrf.mxu0
    %v1161 = vadd.f32 %v218, %v1160
    %v1162 = vpop.f32.mrf.mxu0
    %v1163 = vadd.f32 %v218, %v1162
    %1164 = vmatmul.bf16.gmra.mxu0 %v797
    %v1165 = vpop.f32.mrf.mxu0
    %v1166 = vadd.f32 %v218, %v1165
    %v1167 = vpop.f32.mrf.mxu0
    %v1168 = vadd.f32 %v218, %v1167
    %1169 = vmatmul.bf16.gmra.mxu0 %v800
    %v1170 = vpop.f32.mrf.mxu0
    %v1171 = vadd.f32 %v218, %v1170
    %v1172 = vpop.f32.mrf.mxu0
    %v1173 = vadd.f32 %v218, %v1172
    %1174 = vmatmul.bf16.gmra.mxu0 %v803
    %v1175 = vpop.f32.mrf.mxu0
    %v1176 = vadd.f32 %v218, %v1175
    %v1177 = vpop.f32.mrf.mxu0
    %v1178 = vadd.f32 %v218, %v1177
    %1179 = vmatmul.bf16.gmra.mxu0 %v806
    %v1180 = vpop.f32.mrf.mxu0
    %v1181 = vadd.f32 %v218, %v1180
    %v1182 = vpop.f32.mrf.mxu0
    %v1183 = vadd.f32 %v218, %v1182
    %1184 = vmatmul.bf16.gmra.mxu0 %v809
    %v1185 = vpop.f32.mrf.mxu0
    %v1186 = vadd.f32 %v218, %v1185
    %v1187 = vpop.f32.mrf.mxu0
    %v1188 = vadd.f32 %v218, %v1187
    %1189 = vmatmul.bf16.gmra.mxu0 %v812
    %v1190 = vpop.f32.mrf.mxu0
    %v1191 = vadd.f32 %v218, %v1190
    %v1192 = vpop.f32.mrf.mxu0
    %v1193 = vadd.f32 %v218, %v1192
    %1194 = vmatmul.bf16.gmra.mxu0 %v815
    %v1195 = vpop.f32.mrf.mxu0
    %v1196 = vadd.f32 %v218, %v1195
    %v1197 = vpop.f32.mrf.mxu0
    %v1198 = vadd.f32 %v218, %v1197
    %1199 = vmatmul.bf16.gmra.mxu0 %v818
    %v1200 = vpop.f32.mrf.mxu0
    %v1201 = vadd.f32 %v218, %v1200
    %v1202 = vpop.f32.mrf.mxu0
    %v1203 = vadd.f32 %v218, %v1202
    %1204 = vmatmul.bf16.gmra.mxu0 %v821
    %v1205 = vpop.f32.mrf.mxu0
    %v1206 = vadd.f32 %v218, %v1205
    %v1207 = vpop.f32.mrf.mxu0
    %v1208 = vadd.f32 %v218, %v1207
    %1209 = vmatmul.bf16.gmra.mxu0 %v824
    %v1210 = vpop.f32.mrf.mxu0
    %v1211 = vadd.f32 %v218, %v1210
    %v1212 = vpop.f32.mrf.mxu0
    %v1213 = vadd.f32 %v218, %v1212
    %1214 = vmatmul.bf16.gmra.mxu0 %v827
    %v1215 = vpop.f32.mrf.mxu0
    %v1216 = vadd.f32 %v218, %v1215
    %v1217 = vpop.f32.mrf.mxu0
    %v1218 = vadd.f32 %v218, %v1217
    %1219 = vmatmul.bf16.gmra.mxu0 %v830
    %v1220 = vpop.f32.mrf.mxu0
    %v1221 = vadd.f32 %v218, %v1220
    %v1222 = vpop.f32.mrf.mxu0
    %v1223 = vadd.f32 %v218, %v1222
    %1224 = vmatmul.bf16.gmra.mxu0 %v833
    %v1225 = vpop.f32.mrf.mxu0
    %v1226 = vadd.f32 %v218, %v1225
    %v1227 = vpop.f32.mrf.mxu0
    %v1228 = vadd.f32 %v218, %v1227
    %1229 = vmatmul.bf16.gmra.mxu0 %v836
    %v1230 = vpop.f32.mrf.mxu0
    %v1231 = vadd.f32 %v218, %v1230
    %v1232 = vpop.f32.mrf.mxu0
    %v1233 = vadd.f32 %v218, %v1232
    %1234 = vmatmul.bf16.gmra.mxu0 %v839
    %v1235 = vpop.f32.mrf.mxu0
    %v1236 = vadd.f32 %v218, %v1235
    %v1237 = vpop.f32.mrf.mxu0
    %v1238 = vadd.f32 %v218, %v1237
    %1239 = vmatmul.bf16.gmra.mxu0 %v842
    %v1240 = vpop.f32.mrf.mxu0
    %v1241 = vadd.f32 %v218, %v1240
    %v1242 = vpop.f32.mrf.mxu0
    %v1243 = vadd.f32 %v218, %v1242
    %1244 = vmatmul.bf16.gmra.mxu0 %v845
    %v1245 = vpop.f32.mrf.mxu0
    %v1246 = vadd.f32 %v218, %v1245
    %v1247 = vpop.f32.mrf.mxu0
    %v1248 = vadd.f32 %v218, %v1247
    %1249 = vmatmul.bf16.gmra.mxu0 %v848
    %v1250 = vpop.f32.mrf.mxu0
    %v1251 = vadd.f32 %v218, %v1250
    %v1252 = vpop.f32.mrf.mxu0
    %v1253 = vadd.f32 %v218, %v1252
    %1254 = vmatmul.bf16.gmra.mxu0 %v851
    %v1255 = vpop.f32.mrf.mxu0
    %v1256 = vadd.f32 %v218, %v1255
    %v1257 = vpop.f32.mrf.mxu0
    %v1258 = vadd.f32 %v218, %v1257
    %1259 = vmatmul.bf16.gmra.mxu0 %v854
    %v1260 = vpop.f32.mrf.mxu0
    %v1261 = vadd.f32 %v218, %v1260
    %v1262 = vpop.f32.mrf.mxu0
    %v1263 = vadd.f32 %v218, %v1262
    %1264 = vmatmul.bf16.gmra.mxu0 %v857
    %v1265 = vpop.f32.mrf.mxu0
    %v1266 = vadd.f32 %v218, %v1265
    %v1267 = vpop.f32.mrf.mxu0
    %v1268 = vadd.f32 %v218, %v1267
    %1269 = vmatmul.bf16.gmra.mxu0 %v860
    %v1270 = vpop.f32.mrf.mxu0
    %v1271 = vadd.f32 %v218, %v1270
    %v1272 = vpop.f32.mrf.mxu0
    %v1273 = vadd.f32 %v218, %v1272
    %1274 = vmatmul.bf16.gmra.mxu0 %v863
    %v1275 = vpop.f32.mrf.mxu0
    %v1276 = vadd.f32 %v218, %v1275
    %v1277 = vpop.f32.mrf.mxu0
    %v1278 = vadd.f32 %v218, %v1277
    %1279 = vmatmul.bf16.gmra.mxu0 %v866
    %v1280 = vpop.f32.mrf.mxu0
    %v1281 = vadd.f32 %v218, %v1280
    %v1282 = vpop.f32.mrf.mxu0
    %v1283 = vadd.f32 %v218, %v1282
    %1284 = vmatmul.bf16.gmra.mxu0 %v869
    %v1285 = vpop.f32.mrf.mxu0
    %v1286 = vadd.f32 %v218, %v1285
    %v1287 = vpop.f32.mrf.mxu0
    %v1288 = vadd.f32 %v218, %v1287
    %1289 = vmatmul.bf16.gmra.mxu0 %v872
    %v1290 = vpop.f32.mrf.mxu0
    %v1291 = vadd.f32 %v218, %v1290
    %v1292 = vpop.f32.mrf.mxu0
    %v1293 = vadd.f32 %v218, %v1292
    %1294 = vmatmul.bf16.gmra.mxu0 %v875
    %v1295 = vpop.f32.mrf.mxu0
    %v1296 = vadd.f32 %v218, %v1295
    %v1297 = vpop.f32.mrf.mxu0
    %v1298 = vadd.f32 %v218, %v1297
    %1299 = vmatmul.bf16.gmra.mxu0 %v878
    %v1300 = vpop.f32.mrf.mxu0
    %v1301 = vadd.f32 %v218, %v1300
    %v1302 = vpop.f32.mrf.mxu0
    %v1303 = vadd.f32 %v218, %v1302
    %1304 = vmatmul.bf16.gmra.mxu0 %v881
    %v1305 = vpop.f32.mrf.mxu0
    %v1306 = vadd.f32 %v218, %v1305
    %v1307 = vpop.f32.mrf.mxu0
    %v1308 = vadd.f32 %v218, %v1307
    %1309 = vmatmul.bf16.gmra.mxu0 %v884
    %v1310 = vpop.f32.mrf.mxu0
    %v1311 = vadd.f32 %v218, %v1310
    %v1312 = vpop.f32.mrf.mxu0
    %v1313 = vadd.f32 %v218, %v1312
    %1314 = vmatmul.bf16.gmra.mxu0 %v887
    %v1315 = vpop.f32.mrf.mxu0
    %v1316 = vadd.f32 %v218, %v1315
    %v1317 = vpop.f32.mrf.mxu0
    %v1318 = vadd.f32 %v218, %v1317
    %1319 = vmatmul.bf16.gmra.mxu0 %v890
    %v1320 = vpop.f32.mrf.mxu0
    %v1321 = vadd.f32 %v218, %v1320
    %v1322 = vpop.f32.mrf.mxu0
    %v1323 = vadd.f32 %v218, %v1322
    %1324 = vmatmul.bf16.gmra.mxu0 %v893
    %v1325 = vpop.f32.mrf.mxu0
    %v1326 = vadd.f32 %v218, %v1325
    %v1327 = vpop.f32.mrf.mxu0
    %v1328 = vadd.f32 %v218, %v1327
    %1329 = vmatmul.bf16.gmra.mxu0 %v896
    %v1330 = vpop.f32.mrf.mxu0
    %v1331 = vadd.f32 %v218, %v1330
    %v1332 = vpop.f32.mrf.mxu0
    %v1333 = vadd.f32 %v218, %v1332
    %1334 = vmatmul.bf16.gmra.mxu0 %v899
    %v1335 = vpop.f32.mrf.mxu0
    %v1336 = vadd.f32 %v218, %v1335
    %v1337 = vpop.f32.mrf.mxu0
    %v1338 = vadd.f32 %v218, %v1337
    %1339 = vmatmul.bf16.gmra.mxu0 %v902
    %v1340 = vpop.f32.mrf.mxu0
    %v1341 = vadd.f32 %v218, %v1340
    %v1342 = vpop.f32.mrf.mxu0
    %1343 = vdwg.mxu0
    %v1344 = vmax.f32 %v921, 0.0
    %v1345 = vmax.f32 %v923, 0.0
    %v1346 = vmax.f32 %v926, 0.0
    %v1347 = vmax.f32 %v928, 0.0
    %v1348 = vmax.f32 %v931, 0.0
    %v1349 = vmax.f32 %v933, 0.0
    %v1350 = vmax.f32 %v936, 0.0
    %v1351 = vmax.f32 %v938, 0.0
    %v1352 = vmax.f32 %v941, 0.0
    %v1353 = vmax.f32 %v943, 0.0
    %v1354 = vmax.f32 %v946, 0.0
    %v1355 = vmax.f32 %v948, 0.0
    %v1356 = vmax.f32 %v951, 0.0
    %v1357 = vmax.f32 %v953, 0.0
    %v1358 = vmax.f32 %v956, 0.0
    %v1359 = vmax.f32 %v958, 0.0
    %v1360 = vmax.f32 %v961, 0.0
    %v1361 = vmax.f32 %v963, 0.0
    %v1362 = vmax.f32 %v966, 0.0
    %v1363 = vmax.f32 %v968, 0.0
    %v1364 = vmax.f32 %v971, 0.0
    %v1365 = vmax.f32 %v973, 0.0
    %v1366 = vmax.f32 %v976, 0.0
    %v1367 = vmax.f32 %v978, 0.0
    %v1368 = vmax.f32 %v981, 0.0
    %v1369 = vmax.f32 %v983, 0.0
    %v1370 = vmax.f32 %v986, 0.0
    %v1371 = vmax.f32 %v988, 0.0
    %v1372 = vmax.f32 %v991, 0.0
    %v1373 = vmax.f32 %v993, 0.0
    %v1374 = vmax.f32 %v996, 0.0
    %v1375 = vmax.f32 %v998, 0.0
    %v1376 = vmax.f32 %v1001, 0.0
    %v1377 = vmax.f32 %v1003, 0.0
    %v1378 = vmax.f32 %v1006, 0.0
    %v1379 = vmax.f32 %v1008, 0.0
    %v1380 = vmax.f32 %v1011, 0.0
    %v1381 = vmax.f32 %v1013, 0.0
    %v1382 = vmax.f32 %v1016, 0.0
    %v1383 = vmax.f32 %v1018, 0.0
    %v1384 = vmax.f32 %v1021, 0.0
    %v1385 = vmax.f32 %v1023, 0.0
    %v1386 = vmax.f32 %v1026, 0.0
    %v1387 = vmax.f32 %v1028, 0.0
    %v1388 = vmax.f32 %v1031, 0.0
    %v1389 = vmax.f32 %v1033, 0.0
    %v1390 = vmax.f32 %v1036, 0.0
    %v1391 = vmax.f32 %v1038, 0.0
    %v1392 = vmax.f32 %v1041, 0.0
    %v1393 = vmax.f32 %v1043, 0.0
    %v1394 = vmax.f32 %v1046, 0.0
    %v1395 = vmax.f32 %v1048, 0.0
    %v1396 = vmax.f32 %v1051, 0.0
    %v1397 = vmax.f32 %v1053, 0.0
    %v1398 = vmax.f32 %v1056, 0.0
    %v1399 = vmax.f32 %v1058, 0.0
    %v1400 = vmax.f32 %v1061, 0.0
    %v1401 = vmax.f32 %v1063, 0.0
    %v1402 = vmax.f32 %v1066, 0.0
    %v1403 = vmax.f32 %v1068, 0.0
    %v1404 = vmax.f32 %v1071, 0.0
    %v1405 = vmax.f32 %v1073, 0.0
    %v1406 = vmax.f32 %v1076, 0.0
    %v1407 = vmax.f32 %v1078, 0.0
    %v1408 = vmax.f32 %v1081, 0.0
    %v1409 = vmax.f32 %v1083, 0.0
    %v1410 = vmax.f32 %v1086, 0.0
    %v1411 = vmax.f32 %v1088, 0.0
    %v1412 = vmax.f32 %v1091, 0.0
    %v1413 = vmax.f32 %v1093, 0.0
    %v1414 = vmax.f32 %v1096, 0.0
    %v1415 = vmax.f32 %v1098, 0.0
    %v1416 = vmax.f32 %v1101, 0.0
    %v1417 = vmax.f32 %v1103, 0.0
    %v1418 = vmax.f32 %v1106, 0.0
    %v1419 = vmax.f32 %v1108, 0.0
    %v1420 = vmax.f32 %v1111, 0.0
    %v1421 = vmax.f32 %v1113, 0.0
    %v1422 = vmax.f32 %v1116, 0.0
    %v1423 = vmax.f32 %v1118, 0.0
    %v1424 = vmax.f32 %v1121, 0.0
    %v1425 = vmax.f32 %v1123, 0.0
    %v1426 = vmax.f32 %v1126, 0.0
    %v1427 = vmax.f32 %v1128, 0.0
    %v1428 = vmax.f32 %v1131, 0.0
    %v1429 = vmax.f32 %v1133, 0.0
    %v1430 = vmax.f32 %v1136, 0.0
    %v1431 = vmax.f32 %v1138, 0.0
    %v1432 = vmax.f32 %v1141, 0.0
    %v1433 = vmax.f32 %v1143, 0.0
    %v1434 = vmax.f32 %v1146, 0.0
    %v1435 = vmax.f32 %v1148, 0.0
    %v1436 = vmax.f32 %v1151, 0.0
    %v1437 = vmax.f32 %v1153, 0.0
    %v1438 = vmax.f32 %v1156, 0.0
    %v1439 = vmax.f32 %v1158, 0.0
    %v1440 = vmax.f32 %v1161, 0.0
    %v1441 = vmax.f32 %v1163, 0.0
    %v1442 = vmax.f32 %v1166, 0.0
    %v1443 = vmax.f32 %v1168, 0.0
    %v1444 = vmax.f32 %v1171, 0.0
    %v1445 = vmax.f32 %v1173, 0.0
    %v1446 = vmax.f32 %v1176, 0.0
    %v1447 = vmax.f32 %v1178, 0.0
    %v1448 = vmax.f32 %v1181, 0.0
    %v1449 = vmax.f32 %v1183, 0.0
    %v1450 = vmax.f32 %v1186, 0.0
    %v1451 = vmax.f32 %v1188, 0.0
    %v1452 = vmax.f32 %v1191, 0.0
    %v1453 = vmax.f32 %v1193, 0.0
    %v1454 = vmax.f32 %v1196, 0.0
    %v1455 = vmax.f32 %v1198, 0.0
    %v1456 = vmax.f32 %v1201, 0.0
    %v1457 = vmax.f32 %v1203, 0.0
    %v1458 = vmax.f32 %v1206, 0.0
    %v1459 = vmax.f32 %v1208, 0.0
    %v1460 = vmax.f32 %v1211, 0.0
    %v1461 = vmax.f32 %v1213, 0.0
    %v1462 = vmax.f32 %v1216, 0.0
    %v1463 = vmax.f32 %v1218, 0.0
    %v1464 = vmax.f32 %v1221, 0.0
    %v1465 = vmax.f32 %v1223, 0.0
    %v1466 = vmax.f32 %v1226, 0.0
    %v1467 = vmax.f32 %v1228, 0.0
    %v1468 = vmax.f32 %v1231, 0.0
    %v1469 = vmax.f32 %v1233, 0.0
    %v1470 = vmax.f32 %v1236, 0.0
    %v1471 = vmax.f32 %v1238, 0.0
    %v1472 = vmax.f32 %v1241, 0.0
    %v1473 = vmax.f32 %v1243, 0.0
    %v1474 = vmax.f32 %v1246, 0.0
    %v1475 = vmax.f32 %v1248, 0.0
    %v1476 = vmax.f32 %v1251, 0.0
    %v1477 = vmax.f32 %v1253, 0.0
    %v1478 = vmax.f32 %v1256, 0.0
    %v1479 = vmax.f32 %v1258, 0.0
    %v1480 = vmax.f32 %v1261, 0.0
    %v1481 = vmax.f32 %v1263, 0.0
    %v1482 = vmax.f32 %v1266, 0.0
    %v1483 = vmax.f32 %v1268, 0.0
    %v1484 = vmax.f32 %v1271, 0.0
    %v1485 = vmax.f32 %v1273, 0.0
    %v1486 = vmax.f32 %v1276, 0.0
    %v1487 = vmax.f32 %v1278, 0.0
    %v1488 = vmax.f32 %v1281, 0.0
    %v1489 = vmax.f32 %v1283, 0.0
    %v1490 = vmax.f32 %v1286, 0.0
    %v1491 = vmax.f32 %v1288, 0.0
    %v1492 = vmax.f32 %v1291, 0.0
    %v1493 = vmax.f32 %v1293, 0.0
    %v1494 = vmax.f32 %v1296, 0.0
    %v1495 = vmax.f32 %v1298, 0.0
    %v1496 = vmax.f32 %v1301, 0.0
    %v1497 = vmax.f32 %v1303, 0.0
    %v1498 = vmax.f32 %v1306, 0.0
    %v1499 = vmax.f32 %v1308, 0.0
    %v1500 = vmax.f32 %v1311, 0.0
    %v1501 = vmax.f32 %v1313, 0.0
    %v1502 = vmax.f32 %v1316, 0.0
    %v1503 = vmax.f32 %v1318, 0.0
    %v1504 = vmax.f32 %v1321, 0.0
    %v1505 = vmax.f32 %v1323, 0.0
    %v1506 = vmax.f32 %v1326, 0.0
    %v1507 = vmax.f32 %v1328, 0.0
    %v1508 = vmax.f32 %v1331, 0.0
    %v1509 = vmax.f32 %v1333, 0.0
    %v1510 = vmax.f32 %v1336, 0.0
    %v1511 = vmax.f32 %v1338, 0.0
    %v1512 = vmax.f32 %v1341, 0.0
    %v1513 = vpack.c.bf16 %v1344, %v1344
    %v1514 = vpack.c.bf16 %v1345, %v1345
    %v1515 = vpack.c.bf16 %v1346, %v1346
    %v1516 = vpack.c.bf16 %v1347, %v1347
    %v1517 = vpack.c.bf16 %v1348, %v1348
    %v1518 = vpack.c.bf16 %v1349, %v1349
    %v1519 = vpack.c.bf16 %v1350, %v1350
    %v1520 = vpack.c.bf16 %v1351, %v1351
    %v1521 = vpack.c.bf16 %v1352, %v1352
    %v1522 = vpack.c.bf16 %v1353, %v1353
    %v1523 = vpack.c.bf16 %v1354, %v1354
    %v1524 = vpack.c.bf16 %v1355, %v1355
    %v1525 = vpack.c.bf16 %v1356, %v1356
    %v1526 = vpack.c.bf16 %v1357, %v1357
    %v1527 = vpack.c.bf16 %v1358, %v1358
    %v1528 = vpack.c.bf16 %v1359, %v1359
    %v1529 = vpack.c.bf16 %v1360, %v1360
    %v1530 = vpack.c.bf16 %v1361, %v1361
    %v1531 = vpack.c.bf16 %v1362, %v1362
    %v1532 = vpack.c.bf16 %v1363, %v1363
    %v1533 = vpack.c.bf16 %v1364, %v1364
    %v1534 = vpack.c.bf16 %v1365, %v1365
    %v1535 = vpack.c.bf16 %v1366, %v1366
    %v1536 = vpack.c.bf16 %v1367, %v1367
    %v1537 = vpack.c.bf16 %v1368, %v1368
    %v1538 = vpack.c.bf16 %v1369, %v1369
    %v1539 = vpack.c.bf16 %v1370, %v1370
    %v1540 = vpack.c.bf16 %v1371, %v1371
    %v1541 = vpack.c.bf16 %v1372, %v1372
    %v1542 = vpack.c.bf16 %v1373, %v1373
    %v1543 = vpack.c.bf16 %v1374, %v1374
    %v1544 = vpack.c.bf16 %v1375, %v1375
    %v1545 = vpack.c.bf16 %v1376, %v1376
    %v1546 = vpack.c.bf16 %v1377, %v1377
    %v1547 = vpack.c.bf16 %v1378, %v1378
    %v1548 = vpack.c.bf16 %v1379, %v1379
    %v1549 = vpack.c.bf16 %v1380, %v1380
    %v1550 = vpack.c.bf16 %v1381, %v1381
    %v1551 = vpack.c.bf16 %v1382, %v1382
    %v1552 = vpack.c.bf16 %v1383, %v1383
    %v1553 = vpack.c.bf16 %v1384, %v1384
    %v1554 = vpack.c.bf16 %v1385, %v1385
    %v1555 = vpack.c.bf16 %v1386, %v1386
    %v1556 = vpack.c.bf16 %v1387, %v1387
    %v1557 = vpack.c.bf16 %v1388, %v1388
    %v1558 = vpack.c.bf16 %v1389, %v1389
    %v1559 = vpack.c.bf16 %v1390, %v1390
    %v1560 = vpack.c.bf16 %v1391, %v1391
    %v1561 = vpack.c.bf16 %v1392, %v1392
    %v1562 = vpack.c.bf16 %v1393, %v1393
    %v1563 = vpack.c.bf16 %v1394, %v1394
    %v1564 = vpack.c.bf16 %v1395, %v1395
    %v1565 = vpack.c.bf16 %v1396, %v1396
    %v1566 = vpack.c.bf16 %v1397, %v1397
    %v1567 = vpack.c.bf16 %v1398, %v1398
    %v1568 = vpack.c.bf16 %v1399, %v1399
    %v1569 = vpack.c.bf16 %v1400, %v1400
    %v1570 = vpack.c.bf16 %v1401, %v1401
    %v1571 = vpack.c.bf16 %v1402, %v1402
    %v1572 = vpack.c.bf16 %v1403, %v1403
    %v1573 = vpack.c.bf16 %v1404, %v1404
    %v1574 = vpack.c.bf16 %v1405, %v1405
    %v1575 = vpack.c.bf16 %v1406, %v1406
    %v1576 = vpack.c.bf16 %v1407, %v1407
    %v1577 = vpack.c.bf16 %v1408, %v1408
    %v1578 = vpack.c.bf16 %v1409, %v1409
    %v1579 = vpack.c.bf16 %v1410, %v1410
    %v1580 = vpack.c.bf16 %v1411, %v1411
    %v1581 = vpack.c.bf16 %v1412, %v1412
    %v1582 = vpack.c.bf16 %v1413, %v1413
    %v1583 = vpack.c.bf16 %v1414, %v1414
    %v1584 = vpack.c.bf16 %v1415, %v1415
    %v1585 = vpack.c.bf16 %v1416, %v1416
    %v1586 = vpack.c.bf16 %v1417, %v1417
    %v1587 = vpack.c.bf16 %v1418, %v1418
    %v1588 = vpack.c.bf16 %v1419, %v1419
    %v1589 = vpack.c.bf16 %v1420, %v1420
    %v1590 = vpack.c.bf16 %v1421, %v1421
    %v1591 = vpack.c.bf16 %v1422, %v1422
    %v1592 = vpack.c.bf16 %v1423, %v1423
    %v1593 = vpack.c.bf16 %v1424, %v1424
    %v1594 = vpack.c.bf16 %v1425, %v1425
    %v1595 = vpack.c.bf16 %v1426, %v1426
    %v1596 = vpack.c.bf16 %v1427, %v1427
    %v1597 = vpack.c.bf16 %v1428, %v1428
    %v1598 = vpack.c.bf16 %v1429, %v1429
    %v1599 = vpack.c.bf16 %v1430, %v1430
    %v1600 = vpack.c.bf16 %v1431, %v1431
    %v1601 = vpack.c.bf16 %v1432, %v1432
    %v1602 = vpack.c.bf16 %v1433, %v1433
    %v1603 = vpack.c.bf16 %v1434, %v1434
    %v1604 = vpack.c.bf16 %v1435, %v1435
    %v1605 = vpack.c.bf16 %v1436, %v1436
    %v1606 = vpack.c.bf16 %v1437, %v1437
    %v1607 = vpack.c.bf16 %v1438, %v1438
    %v1608 = vpack.c.bf16 %v1439, %v1439
    %v1609 = vpack.c.bf16 %v1440, %v1440
    %v1610 = vpack.c.bf16 %v1441, %v1441
    %v1611 = vpack.c.bf16 %v1442, %v1442
    %v1612 = vpack.c.bf16 %v1443, %v1443
    %v1613 = vpack.c.bf16 %v1444, %v1444
    %v1614 = vpack.c.bf16 %v1445, %v1445
    %v1615 = vpack.c.bf16 %v1446, %v1446
    %v1616 = vpack.c.bf16 %v1447, %v1447
    %v1617 = vpack.c.bf16 %v1448, %v1448
    %v1618 = vpack.c.bf16 %v1449, %v1449
    %v1619 = vpack.c.bf16 %v1450, %v1450
    %v1620 = vpack.c.bf16 %v1451, %v1451
    %v1621 = vpack.c.bf16 %v1452, %v1452
    %v1622 = vpack.c.bf16 %v1453, %v1453
    %v1623 = vpack.c.bf16 %v1454, %v1454
    %v1624 = vpack.c.bf16 %v1455, %v1455
    %v1625 = vpack.c.bf16 %v1456, %v1456
    %v1626 = vpack.c.bf16 %v1457, %v1457
    %v1627 = vpack.c.bf16 %v1458, %v1458
    %v1628 = vpack.c.bf16 %v1459, %v1459
    %v1629 = vpack.c.bf16 %v1460, %v1460
    %v1630 = vpack.c.bf16 %v1461, %v1461
    %v1631 = vpack.c.bf16 %v1462, %v1462
    %v1632 = vpack.c.bf16 %v1463, %v1463
    %v1633 = vpack.c.bf16 %v1464, %v1464
    %v1634 = vpack.c.bf16 %v1465, %v1465
    %v1635 = vpack.c.bf16 %v1466, %v1466
    %v1636 = vpack.c.bf16 %v1467, %v1467
    %v1637 = vpack.c.bf16 %v1468, %v1468
    %v1638 = vpack.c.bf16 %v1469, %v1469
    %v1639 = vpack.c.bf16 %v1470, %v1470
    %v1640 = vpack.c.bf16 %v1471, %v1471
    %v1641 = vpack.c.bf16 %v1472, %v1472
    %v1642 = vpack.c.bf16 %v1473, %v1473
    %v1643 = vpack.c.bf16 %v1474, %v1474
    %v1644 = vpack.c.bf16 %v1475, %v1475
    %v1645 = vpack.c.bf16 %v1476, %v1476
    %v1646 = vpack.c.bf16 %v1477, %v1477
    %v1647 = vpack.c.bf16 %v1478, %v1478
    %v1648 = vpack.c.bf16 %v1479, %v1479
    %v1649 = vpack.c.bf16 %v1480, %v1480
    %v1650 = vpack.c.bf16 %v1481, %v1481
    %v1651 = vpack.c.bf16 %v1482, %v1482
    %v1652 = vpack.c.bf16 %v1483, %v1483
    %v1653 = vpack.c.bf16 %v1484, %v1484
    %v1654 = vpack.c.bf16 %v1485, %v1485
    %v1655 = vpack.c.bf16 %v1486, %v1486
    %v1656 = vpack.c.bf16 %v1487, %v1487
    %v1657 = vpack.c.bf16 %v1488, %v1488
    %v1658 = vpack.c.bf16 %v1489, %v1489
    %v1659 = vpack.c.bf16 %v1490, %v1490
    %v1660 = vpack.c.bf16 %v1491, %v1491
    %v1661 = vpack.c.bf16 %v1492, %v1492
    %v1662 = vpack.c.bf16 %v1493, %v1493
    %v1663 = vpack.c.bf16 %v1494, %v1494
    %v1664 = vpack.c.bf16 %v1495, %v1495
    %v1665 = vpack.c.bf16 %v1496, %v1496
    %v1666 = vpack.c.bf16 %v1497, %v1497
    %v1667 = vpack.c.bf16 %v1498, %v1498
    %v1668 = vpack.c.bf16 %v1499, %v1499
    %v1669 = vpack.c.bf16 %v1500, %v1500
    %v1670 = vpack.c.bf16 %v1501, %v1501
    %v1671 = vpack.c.bf16 %v1502, %v1502
    %v1672 = vpack.c.bf16 %v1503, %v1503
    %v1673 = vpack.c.bf16 %v1504, %v1504
    %v1674 = vpack.c.bf16 %v1505, %v1505
    %v1675 = vpack.c.bf16 %v1506, %v1506
    %v1676 = vpack.c.bf16 %v1507, %v1507
    %v1677 = vpack.c.bf16 %v1508, %v1508
    %v1678 = vpack.c.bf16 %v1509, %v1509
    %v1679 = vpack.c.bf16 %v1510, %v1510
    %v1680 = vpack.c.bf16 %v1511, %v1511
    %v1681 = vpack.c.bf16 %v1512, %v1512
    %vm1682 = vcmask 257024
    %1683 = vst.msk [vmem:[%s3] sm:$0xf] %vm1682, %v1513
    %1684 = vst.msk [vmem:[%s3 + $0x4] sm:$0xf] %vm1682, %v1514
    %1685 = vst.msk [vmem:[%s3 + $0x8] sm:$0xf] %vm1682, %v1515
    %1686 = vst.msk [vmem:[%s3 + $0xc] sm:$0xf] %vm1682, %v1516
    %1687 = vst.msk [vmem:[%s3 + $0x10] sm:$0xf] %vm1682, %v1517
    %1688 = vst.msk [vmem:[%s3 + $0x14] sm:$0xf] %vm1682, %v1518
    %1689 = vst.msk [vmem:[%s3 + $0x18] sm:$0xf] %vm1682, %v1519
    %1690 = vst.msk [vmem:[%s3 + $0x1c] sm:$0xf] %vm1682, %v1520
    %1691 = vst.msk [vmem:[%s3 + $0x20] sm:$0xf] %vm1682, %v1521
    %1692 = vst.msk [vmem:[%s3 + $0x24] sm:$0xf] %vm1682, %v1522
    %1693 = vst.msk [vmem:[%s3 + $0x28] sm:$0xf] %vm1682, %v1523
    %1694 = vst.msk [vmem:[%s3 + $0x2c] sm:$0xf] %vm1682, %v1524
    %1695 = vst.msk [vmem:[%s3 + $0x30] sm:$0xf] %vm1682, %v1525
    %1696 = vst.msk [vmem:[%s3 + $0x34] sm:$0xf] %vm1682, %v1526
    %1697 = vst.msk [vmem:[%s3 + $0x38] sm:$0xf] %vm1682, %v1527
    %1698 = vst.msk [vmem:[%s3 + $0x3c] sm:$0xf] %vm1682, %v1528
    %1699 = vst.msk [vmem:[%s3 + $0x40] sm:$0xf] %vm1682, %v1529
    %1700 = vst.msk [vmem:[%s3 + $0x44] sm:$0xf] %vm1682, %v1530
    %1701 = vst.msk [vmem:[%s3 + $0x48] sm:$0xf] %vm1682, %v1531
    %1702 = vst.msk [vmem:[%s3 + $0x4c] sm:$0xf] %vm1682, %v1532
    %1703 = vst.msk [vmem:[%s3 + $0x50] sm:$0xf] %vm1682, %v1533
    %1704 = vst.msk [vmem:[%s3 + $0x54] sm:$0xf] %vm1682, %v1534
    %1705 = vst.msk [vmem:[%s3 + $0x58] sm:$0xf] %vm1682, %v1535
    %1706 = vst.msk [vmem:[%s3 + $0x5c] sm:$0xf] %vm1682, %v1536
    %1707 = vst.msk [vmem:[%s3 + $0x60] sm:$0xf] %vm1682, %v1537
    %1708 = vst.msk [vmem:[%s3 + $0x64] sm:$0xf] %vm1682, %v1538
    %1709 = vst.msk [vmem:[%s3 + $0x68] sm:$0xf] %vm1682, %v1539
    %1710 = vst.msk [vmem:[%s3 + $0x6c] sm:$0xf] %vm1682, %v1540
    %1711 = vst.msk [vmem:[%s3 + $0x70] sm:$0xf] %vm1682, %v1541
    %1712 = vst.msk [vmem:[%s3 + $0x74] sm:$0xf] %vm1682, %v1542
    %1713 = vst.msk [vmem:[%s3 + $0x78] sm:$0xf] %vm1682, %v1543
    %1714 = vst.msk [vmem:[%s3 + $0x7c] sm:$0xf] %vm1682, %v1544
    %1715 = vst.msk [vmem:[%s3 + $0x80] sm:$0xf] %vm1682, %v1545
    %1716 = vst.msk [vmem:[%s3 + $0x84] sm:$0xf] %vm1682, %v1546
    %1717 = vst.msk [vmem:[%s3 + $0x88] sm:$0xf] %vm1682, %v1547
    %1718 = vst.msk [vmem:[%s3 + $0x8c] sm:$0xf] %vm1682, %v1548
    %1719 = vst.msk [vmem:[%s3 + $0x90] sm:$0xf] %vm1682, %v1549
    %1720 = vst.msk [vmem:[%s3 + $0x94] sm:$0xf] %vm1682, %v1550
    %1721 = vst.msk [vmem:[%s3 + $0x98] sm:$0xf] %vm1682, %v1551
    %1722 = vst.msk [vmem:[%s3 + $0x9c] sm:$0xf] %vm1682, %v1552
    %1723 = vst.msk [vmem:[%s3 + $0xa0] sm:$0xf] %vm1682, %v1553
    %1724 = vst.msk [vmem:[%s3 + $0xa4] sm:$0xf] %vm1682, %v1554
    %1725 = vst.msk [vmem:[%s3 + $0xa8] sm:$0xf] %vm1682, %v1555
    %1726 = vst.msk [vmem:[%s3 + $0xac] sm:$0xf] %vm1682, %v1556
    %1727 = vst.msk [vmem:[%s3 + $0xb0] sm:$0xf] %vm1682, %v1557
    %1728 = vst.msk [vmem:[%s3 + $0xb4] sm:$0xf] %vm1682, %v1558
    %1729 = vst.msk [vmem:[%s3 + $0xb8] sm:$0xf] %vm1682, %v1559
    %1730 = vst.msk [vmem:[%s3 + $0xbc] sm:$0xf] %vm1682, %v1560
    %1731 = vst.msk [vmem:[%s3 + $0xc0] sm:$0xf] %vm1682, %v1561
    %1732 = vst.msk [vmem:[%s3 + $0xc4] sm:$0xf] %vm1682, %v1562
    %1733 = vst.msk [vmem:[%s3 + $0xc8] sm:$0xf] %vm1682, %v1563
    %1734 = vst.msk [vmem:[%s3 + $0xcc] sm:$0xf] %vm1682, %v1564
    %1735 = vst.msk [vmem:[%s3 + $0xd0] sm:$0xf] %vm1682, %v1565
    %1736 = vst.msk [vmem:[%s3 + $0xd4] sm:$0xf] %vm1682, %v1566
    %1737 = vst.msk [vmem:[%s3 + $0xd8] sm:$0xf] %vm1682, %v1567
    %1738 = vst.msk [vmem:[%s3 + $0xdc] sm:$0xf] %vm1682, %v1568
    %1739 = vst.msk [vmem:[%s3 + $0xe0] sm:$0xf] %vm1682, %v1569
    %1740 = vst.msk [vmem:[%s3 + $0xe4] sm:$0xf] %vm1682, %v1570
    %1741 = vst.msk [vmem:[%s3 + $0xe8] sm:$0xf] %vm1682, %v1571
    %1742 = vst.msk [vmem:[%s3 + $0xec] sm:$0xf] %vm1682, %v1572
    %1743 = vst.msk [vmem:[%s3 + $0xf0] sm:$0xf] %vm1682, %v1573
    %1744 = vst.msk [vmem:[%s3 + $0xf4] sm:$0xf] %vm1682, %v1574
    %1745 = vst.msk [vmem:[%s3 + $0xf8] sm:$0xf] %vm1682, %v1575
    %1746 = vst.msk [vmem:[%s3 + $0xfc] sm:$0xf] %vm1682, %v1576
    %1747 = vst.msk [vmem:[%s3 + $0x100] sm:$0xf] %vm1682, %v1577
    %1748 = vst.msk [vmem:[%s3 + $0x104] sm:$0xf] %vm1682, %v1578
    %1749 = vst.msk [vmem:[%s3 + $0x108] sm:$0xf] %vm1682, %v1579
    %1750 = vst.msk [vmem:[%s3 + $0x10c] sm:$0xf] %vm1682, %v1580
    %1751 = vst.msk [vmem:[%s3 + $0x110] sm:$0xf] %vm1682, %v1581
    %1752 = vst.msk [vmem:[%s3 + $0x114] sm:$0xf] %vm1682, %v1582
    %1753 = vst.msk [vmem:[%s3 + $0x118] sm:$0xf] %vm1682, %v1583
    %1754 = vst.msk [vmem:[%s3 + $0x11c] sm:$0xf] %vm1682, %v1584
    %1755 = vst.msk [vmem:[%s3 + $0x120] sm:$0xf] %vm1682, %v1585
    %1756 = vst.msk [vmem:[%s3 + $0x124] sm:$0xf] %vm1682, %v1586
    %1757 = vst.msk [vmem:[%s3 + $0x128] sm:$0xf] %vm1682, %v1587
    %1758 = vst.msk [vmem:[%s3 + $0x12c] sm:$0xf] %vm1682, %v1588
    %1759 = vst.msk [vmem:[%s3 + $0x130] sm:$0xf] %vm1682, %v1589
    %1760 = vst.msk [vmem:[%s3 + $0x134] sm:$0xf] %vm1682, %v1590
    %1761 = vst.msk [vmem:[%s3 + $0x138] sm:$0xf] %vm1682, %v1591
    %1762 = vst.msk [vmem:[%s3 + $0x13c] sm:$0xf] %vm1682, %v1592
    %1763 = vst.msk [vmem:[%s3 + $0x140] sm:$0xf] %vm1682, %v1593
    %1764 = vst.msk [vmem:[%s3 + $0x144] sm:$0xf] %vm1682, %v1594
    %1765 = vst.msk [vmem:[%s3 + $0x148] sm:$0xf] %vm1682, %v1595
    %1766 = vst.msk [vmem:[%s3 + $0x14c] sm:$0xf] %vm1682, %v1596
    %1767 = vst.msk [vmem:[%s3 + $0x150] sm:$0xf] %vm1682, %v1597
    %1768 = vst.msk [vmem:[%s3 + $0x154] sm:$0xf] %vm1682, %v1598
    %1769 = vst.msk [vmem:[%s3 + $0x158] sm:$0xf] %vm1682, %v1599
    %1770 = vst.msk [vmem:[%s3 + $0x15c] sm:$0xf] %vm1682, %v1600
    %1771 = vst.msk [vmem:[%s3 + $0x160] sm:$0xf] %vm1682, %v1601
    %1772 = vst.msk [vmem:[%s3 + $0x164] sm:$0xf] %vm1682, %v1602
    %1773 = vst.msk [vmem:[%s3 + $0x168] sm:$0xf] %vm1682, %v1603
    %1774 = vst.msk [vmem:[%s3 + $0x16c] sm:$0xf] %vm1682, %v1604
    %1775 = vst.msk [vmem:[%s3 + $0x170] sm:$0xf] %vm1682, %v1605
    %1776 = vst.msk [vmem:[%s3 + $0x174] sm:$0xf] %vm1682, %v1606
    %1777 = vst.msk [vmem:[%s3 + $0x178] sm:$0xf] %vm1682, %v1607
    %1778 = vst.msk [vmem:[%s3 + $0x17c] sm:$0xf] %vm1682, %v1608
    %1779 = vst.msk [vmem:[%s3 + $0x180] sm:$0xf] %vm1682, %v1609
    %1780 = vst.msk [vmem:[%s3 + $0x184] sm:$0xf] %vm1682, %v1610
    %1781 = vst.msk [vmem:[%s3 + $0x188] sm:$0xf] %vm1682, %v1611
    %1782 = vst.msk [vmem:[%s3 + $0x18c] sm:$0xf] %vm1682, %v1612
    %1783 = vst.msk [vmem:[%s3 + $0x190] sm:$0xf] %vm1682, %v1613
    %1784 = vst.msk [vmem:[%s3 + $0x194] sm:$0xf] %vm1682, %v1614
    %1785 = vst.msk [vmem:[%s3 + $0x198] sm:$0xf] %vm1682, %v1615
    %1786 = vst.msk [vmem:[%s3 + $0x19c] sm:$0xf] %vm1682, %v1616
    %1787 = vst.msk [vmem:[%s3 + $0x1a0] sm:$0xf] %vm1682, %v1617
    %1788 = vst.msk [vmem:[%s3 + $0x1a4] sm:$0xf] %vm1682, %v1618
    %1789 = vst.msk [vmem:[%s3 + $0x1a8] sm:$0xf] %vm1682, %v1619
    %1790 = vst.msk [vmem:[%s3 + $0x1ac] sm:$0xf] %vm1682, %v1620
    %1791 = vst.msk [vmem:[%s3 + $0x1b0] sm:$0xf] %vm1682, %v1621
    %1792 = vst.msk [vmem:[%s3 + $0x1b4] sm:$0xf] %vm1682, %v1622
    %1793 = vst.msk [vmem:[%s3 + $0x1b8] sm:$0xf] %vm1682, %v1623
    %1794 = vst.msk [vmem:[%s3 + $0x1bc] sm:$0xf] %vm1682, %v1624
    %1795 = vst.msk [vmem:[%s3 + $0x1c0] sm:$0xf] %vm1682, %v1625
    %1796 = vst.msk [vmem:[%s3 + $0x1c4] sm:$0xf] %vm1682, %v1626
    %1797 = vst.msk [vmem:[%s3 + $0x1c8] sm:$0xf] %vm1682, %v1627
    %1798 = vst.msk [vmem:[%s3 + $0x1cc] sm:$0xf] %vm1682, %v1628
    %1799 = vst.msk [vmem:[%s3 + $0x1d0] sm:$0xf] %vm1682, %v1629
    %1800 = vst.msk [vmem:[%s3 + $0x1d4] sm:$0xf] %vm1682, %v1630
    %1801 = vst.msk [vmem:[%s3 + $0x1d8] sm:$0xf] %vm1682, %v1631
    %1802 = vst.msk [vmem:[%s3 + $0x1dc] sm:$0xf] %vm1682, %v1632
    %1803 = vst.msk [vmem:[%s3 + $0x1e0] sm:$0xf] %vm1682, %v1633
    %1804 = vst.msk [vmem:[%s3 + $0x1e4] sm:$0xf] %vm1682, %v1634
    %1805 = vst.msk [vmem:[%s3 + $0x1e8] sm:$0xf] %vm1682, %v1635
    %1806 = vst.msk [vmem:[%s3 + $0x1ec] sm:$0xf] %vm1682, %v1636
    %1807 = vst.msk [vmem:[%s3 + $0x1f0] sm:$0xf] %vm1682, %v1637
    %1808 = vst.msk [vmem:[%s3 + $0x1f4] sm:$0xf] %vm1682, %v1638
    %1809 = vst.msk [vmem:[%s3 + $0x1f8] sm:$0xf] %vm1682, %v1639
    %1810 = vst.msk [vmem:[%s3 + $0x1fc] sm:$0xf] %vm1682, %v1640
    %1811 = vst.msk [vmem:[%s3 + $0x200] sm:$0xf] %vm1682, %v1641
    %1812 = vst.msk [vmem:[%s3 + $0x204] sm:$0xf] %vm1682, %v1642
    %1813 = vst.msk [vmem:[%s3 + $0x208] sm:$0xf] %vm1682, %v1643
    %1814 = vst.msk [vmem:[%s3 + $0x20c] sm:$0xf] %vm1682, %v1644
    %1815 = vst.msk [vmem:[%s3 + $0x210] sm:$0xf] %vm1682, %v1645
    %1816 = vst.msk [vmem:[%s3 + $0x214] sm:$0xf] %vm1682, %v1646
    %1817 = vst.msk [vmem:[%s3 + $0x218] sm:$0xf] %vm1682, %v1647
    %1818 = vst.msk [vmem:[%s3 + $0x21c] sm:$0xf] %vm1682, %v1648
    %1819 = vst.msk [vmem:[%s3 + $0x220] sm:$0xf] %vm1682, %v1649
    %1820 = vst.msk [vmem:[%s3 + $0x224] sm:$0xf] %vm1682, %v1650
    %1821 = vst.msk [vmem:[%s3 + $0x228] sm:$0xf] %vm1682, %v1651
    %1822 = vst.msk [vmem:[%s3 + $0x22c] sm:$0xf] %vm1682, %v1652
    %1823 = vst.msk [vmem:[%s3 + $0x230] sm:$0xf] %vm1682, %v1653
    %1824 = vst.msk [vmem:[%s3 + $0x234] sm:$0xf] %vm1682, %v1654
    %1825 = vst.msk [vmem:[%s3 + $0x238] sm:$0xf] %vm1682, %v1655
    %1826 = vst.msk [vmem:[%s3 + $0x23c] sm:$0xf] %vm1682, %v1656
    %1827 = vst.msk [vmem:[%s3 + $0x240] sm:$0xf] %vm1682, %v1657
    %1828 = vst.msk [vmem:[%s3 + $0x244] sm:$0xf] %vm1682, %v1658
    %1829 = vst.msk [vmem:[%s3 + $0x248] sm:$0xf] %vm1682, %v1659
    %1830 = vst.msk [vmem:[%s3 + $0x24c] sm:$0xf] %vm1682, %v1660
    %1831 = vst.msk [vmem:[%s3 + $0x250] sm:$0xf] %vm1682, %v1661
    %1832 = vst.msk [vmem:[%s3 + $0x254] sm:$0xf] %vm1682, %v1662
    %1833 = vst.msk [vmem:[%s3 + $0x258] sm:$0xf] %vm1682, %v1663
    %1834 = vst.msk [vmem:[%s3 + $0x25c] sm:$0xf] %vm1682, %v1664
    %1835 = vst.msk [vmem:[%s3 + $0x260] sm:$0xf] %vm1682, %v1665
    %1836 = vst.msk [vmem:[%s3 + $0x264] sm:$0xf] %vm1682, %v1666
    %1837 = vst.msk [vmem:[%s3 + $0x268] sm:$0xf] %vm1682, %v1667
    %1838 = vst.msk [vmem:[%s3 + $0x26c] sm:$0xf] %vm1682, %v1668
    %1839 = vst.msk [vmem:[%s3 + $0x270] sm:$0xf] %vm1682, %v1669
    %1840 = vst.msk [vmem:[%s3 + $0x274] sm:$0xf] %vm1682, %v1670
    %1841 = vst.msk [vmem:[%s3 + $0x278] sm:$0xf] %vm1682, %v1671
    %1842 = vst.msk [vmem:[%s3 + $0x27c] sm:$0xf] %vm1682, %v1672
    %1843 = vst.msk [vmem:[%s3 + $0x280] sm:$0xf] %vm1682, %v1673
    %1844 = vst.msk [vmem:[%s3 + $0x284] sm:$0xf] %vm1682, %v1674
    %1845 = vst.msk [vmem:[%s3 + $0x288] sm:$0xf] %vm1682, %v1675
    %1846 = vst.msk [vmem:[%s3 + $0x28c] sm:$0xf] %vm1682, %v1676
    %1847 = vst.msk [vmem:[%s3 + $0x290] sm:$0xf] %vm1682, %v1677
    %1848 = vst.msk [vmem:[%s3 + $0x294] sm:$0xf] %vm1682, %v1678
    %1849 = vst.msk [vmem:[%s3 + $0x298] sm:$0xf] %vm1682, %v1679
    %1850 = vst.msk [vmem:[%s3 + $0x29c] sm:$0xf] %vm1682, %v1680
    %1851 = vst.msk [vmem:[%s3 + $0x2a0] sm:$0xf] %vm1682, %v1681
    // Predicated region
    $region22: #{cnn_forward.3} parent=1 // pred_check
      _
    $region23: #{cnn_forward.3} parent=1 // pred_check_branch
      %1853 = sbr.rel (0) target = $region25
    $region24: #{cnn_forward.3} parent=1 // pred_region
      _
    $region25: #{cnn_forward.3} parent=1 // pred_fallthru
      _
    // Predicated region
    $region26: #{cnn_forward.3} parent=1 // pred_check
      _
    $region27: #{cnn_forward.3} parent=1 // pred_check_branch
      %1855 = sbr.rel (0) target = $region29
    $region28: #{cnn_forward.3} parent=1 // pred_region
      _
    $region29: #{cnn_forward.3} parent=1 // pred_fallthru
      _
    %1856 = vsyncpa [#allocation3], 1
    %1857 = vsyncpa [#allocation5], 1

// kernel: cnn_forward.5
$region0: #{cnn_forward.5}
  #allocation0 [shape = 'u32[]', space=smem, size = 0x4, offset = 0x4, fixed_abs, tag = 'smem constant byte address 0x4 - core index']
  #allocation1 [shape = 'u32[72,128]{1,0:T(1,128)}', space=vmem, size = 0x9000, scoped, tag = 'internal scratch']
  #allocation2 [shape = 'f32[2,256]{1,0:T(2,128)}', space=vmem, size = 0x800, scoped, tag = 'scratch operand']
  %s0 = inlined_call_operand.vmem [shape: bf16[2,9216], index: 0, kind: input, shape index: {}]
  %s1 = inlined_call_operand.vmem [shape: bf16[9216,256], index: 1, kind: input, shape index: {}]
  %s2 = inlined_call_operand.vmem [shape: f32[1,256], index: 2, kind: input, shape index: {}]
  %s3 = inlined_call_operand.vmem [shape: bf16[256,10], index: 3, kind: input, shape index: {}]
  %s4 = inlined_call_operand.vmem [shape: f32[1,10], index: 4, kind: input, shape index: {}]
  %s5 = inlined_call_operand.hbm [shape: f32[2,10], index: 5, kind: output, shape index: {}]
  %s6 = sld [smem:[#allocation0]]
  $region61: #{cnn_forward.5} parent=0
    _
  %s8 = ssub.s32 1, %s6
  %s9 = scalar_select 0, %s8, %s6
  $region1: #{cnn_forward.5} parent=0
    #allocation3 [shape = 'u8[1024]{0}', space=vmem, size = 0x400, scoped, tag = 'output window, operand 0, single buffered']
    #allocation4 [shape = 's32[2]{0}', space=sflag, size = 0x8, scoped, tag = 'scoped memory for cnn_forward.5']
    %10 = vsyncpa [#allocation4], 0
    loop: start=0, step=1, limit=10
    $region2: #{cnn_forward.5} parent=1 // loop_pre_header
      _
    $region3: #{cnn_forward.5} parent=1 // loop_header
      %s12 = sphi 0, %s16
      %p13 = scmp.ge.s32.totalorder %s12, 10
      %s19 = sphi 0, %s31
      %s20 = sphi 0, %s27
      %s21 = sphi 0, %s19
      %s22 = sphi 0, %s20
      %s23 = sphi 0, %s21
      %s24 = sphi 0, %s22
      %s36 = sphi 0, %s38
      %s39 = sphi 0, %s36
      %s40 = sphi 0, %s39
      %s56 = sphi 0, %s40
      %s62 = sphi 0, %s64
      %s65 = sphi 0, %s62
      %s66 = sphi 0, %s65
      %s82 = sphi 0, %s66
      %s86 = sphi 0, %s86
      %s88 = sphi 0, %s86
      %s89 = sphi 0, %s88
      %s103 = sphi 0, %s89
      %s107 = sphi 0, %s107
      %s109 = sphi 0, %s107
      %s110 = sphi 0, %s109
      %s124 = sphi 0, %s110
      %s128 = sphi 0, %s128
      %s130 = sphi 0, %s128
      %s131 = sphi 0, %s130
      %s145 = sphi 0, %s131
      %s151 = sphi 0, %s153
      %s154 = sphi 0, %s151
      %s155 = sphi 0, %s154
      %s171 = sphi 0, %s155
    $region4: #{cnn_forward.5} parent=1 // loop_header_branch
      %15 = sbr.rel (%p13) target = $region8
    $region5: #{cnn_forward.5} parent=1 // loop_body
      %s17 = ssub.s32 %s12, 1
      %s18 = ssub.s32 %s12, 2
      %s25 = sadd.s32 1, %s20
      %p26 = scmp.ge.s32.totalorder %s25, 8
      %s27 = scalar_select %p26, 0, %s25
      %s28 = sadd.s32 1, %s19
      %s29 = scalar_select %p26, %s28, %s19
      %p30 = scmp.ge.s32.totalorder %s29, 1
      %s31 = scalar_select %p30, 0, %s29
      %s32 = ssub.s32 %s19, %s31
      %s33 = ssub.s32 %s20, %s27
      %s34 = sor.u32 %s32, %s33
      %p35 = scmp.eq.s32.totalorder %s34, 0
      %s37 = sadd.s32 %s36, 1
      %s38 = scalar_select %p35, %s36, %s37
      %p41 = pneg %p35
      %p42 = scmp.eq.s32.totalorder %s12, 7
      %p43 = por %p41, %p42
      %p44 = scmp.ne.s32.totalorder %s36, %s39
      %p45 = scmp.eq.s32.totalorder %s12, 0
      %p46 = por %p44, %p45
      %p47 = scmp.ne.s32.totalorder %s36, %s39
      %p48 = scmp.eq.s32.totalorder %s17, 7
      %p49 = por %p47, %p48
      %p50 = scmp.ne.s32.totalorder %s39, %s40
      %p51 = scmp.eq.s32.totalorder %s17, 0
      %p52 = por %p50, %p51
      %p53 = scmp.ne.s32.totalorder %s39, %s40
      %p54 = scmp.eq.s32.totalorder %s18, 7
      %p55 = por %p53, %p54
      %p57 = scmp.ne.s32.totalorder %s40, %s56
      %p58 = scmp.eq.s32.totalorder %s18, 0
      %p59 = por %p57, %p58
      %s60 = ssub.s32 %s20, %s27
      %p61 = scmp.eq.s32.totalorder %s60, 0
      %s63 = sadd.s32 %s62, 1
      %s64 = scalar_select %p61, %s62, %s63
      %p67 = pneg %p61
      %p68 = scmp.eq.s32.totalorder %s12, 7
      %p69 = por %p67, %p68
      %p70 = scmp.ne.s32.totalorder %s62, %s65
      %p71 = scmp.eq.s32.totalorder %s12, 0
      %p72 = por %p70, %p71
      %p73 = scmp.ne.s32.totalorder %s62, %s65
      %p74 = scmp.eq.s32.totalorder %s17, 7
      %p75 = por %p73, %p74
      %p76 = scmp.ne.s32.totalorder %s65, %s66
      %p77 = scmp.eq.s32.totalorder %s17, 0
      %p78 = por %p76, %p77
      %p79 = scmp.ne.s32.totalorder %s65, %s66
      %p80 = scmp.eq.s32.totalorder %s18, 7
      %p81 = por %p79, %p80
      %p83 = scmp.ne.s32.totalorder %s66, %s82
      %p84 = scmp.eq.s32.totalorder %s18, 0
      %p85 = por %p83, %p84
      %s87 = sadd.s32 %s86, 1
      %p90 = scmp.eq.s32.totalorder %s12, 7
      %p91 = scmp.ne.s32.totalorder %s86, %s88
      %p92 = scmp.eq.s32.totalorder %s12, 0
      %p93 = por %p91, %p92
      %p94 = scmp.ne.s32.totalorder %s86, %s88
      %p95 = scmp.eq.s32.totalorder %s17, 7
      %p96 = por %p94, %p95
      %p97 = scmp.ne.s32.totalorder %s88, %s89
      %p98 = scmp.eq.s32.totalorder %s17, 0
      %p99 = por %p97, %p98
      %p100 = scmp.ne.s32.totalorder %s88, %s89
      %p101 = scmp.eq.s32.totalorder %s18, 7
      %p102 = por %p100, %p101
      %p104 = scmp.ne.s32.totalorder %s89, %s103
      %p105 = scmp.eq.s32.totalorder %s18, 0
      %p106 = por %p104, %p105
      %s108 = sadd.s32 %s107, 1
      %p111 = scmp.eq.s32.totalorder %s12, 7
      %p112 = scmp.ne.s32.totalorder %s107, %s109
      %p113 = scmp.eq.s32.totalorder %s12, 0
      %p114 = por %p112, %p113
      %p115 = scmp.ne.s32.totalorder %s107, %s109
      %p116 = scmp.eq.s32.totalorder %s17, 7
      %p117 = por %p115, %p116
      %p118 = scmp.ne.s32.totalorder %s109, %s110
      %p119 = scmp.eq.s32.totalorder %s17, 0
      %p120 = por %p118, %p119
      %p121 = scmp.ne.s32.totalorder %s109, %s110
      %p122 = scmp.eq.s32.totalorder %s18, 7
      %p123 = por %p121, %p122
      %p125 = scmp.ne.s32.totalorder %s110, %s124
      %p126 = scmp.eq.s32.totalorder %s18, 0
      %p127 = por %p125, %p126
      %s129 = sadd.s32 %s128, 1
      %p132 = scmp.eq.s32.totalorder %s12, 7
      %p133 = scmp.ne.s32.totalorder %s128, %s130
      %p134 = scmp.eq.s32.totalorder %s12, 0
      %p135 = por %p133, %p134
      %p136 = scmp.ne.s32.totalorder %s128, %s130
      %p137 = scmp.eq.s32.totalorder %s17, 7
      %p138 = por %p136, %p137
      %p139 = scmp.ne.s32.totalorder %s130, %s131
      %p140 = scmp.eq.s32.totalorder %s17, 0
      %p141 = por %p139, %p140
      %p142 = scmp.ne.s32.totalorder %s130, %s131
      %p143 = scmp.eq.s32.totalorder %s18, 7
      %p144 = por %p142, %p143
      %p146 = scmp.ne.s32.totalorder %s131, %s145
      %p147 = scmp.eq.s32.totalorder %s18, 0
      %p148 = por %p146, %p147
      %s149 = ssub.s32 %s19, %s31
      %p150 = scmp.eq.s32.totalorder %s149, 0
      %s152 = sadd.s32 %s151, 1
      %s153 = scalar_select %p150, %s151, %s152
      %p156 = pneg %p150
      %p157 = scmp.eq.s32.totalorder %s12, 7
      %p158 = por %p156, %p157
      %p159 = scmp.ne.s32.totalorder %s151, %s154
      %p160 = scmp.eq.s32.totalorder %s12, 0
      %p161 = por %p159, %p160
      %p162 = scmp.ne.s32.totalorder %s151, %s154
      %p163 = scmp.eq.s32.totalorder %s17, 7
      %p164 = por %p162, %p163
      %p165 = scmp.ne.s32.totalorder %s154, %s155
      %p166 = scmp.eq.s32.totalorder %s17, 0
      %p167 = por %p165, %p166
      %p168 = scmp.ne.s32.totalorder %s154, %s155
      %p169 = scmp.eq.s32.totalorder %s18, 7
      %p170 = por %p168, %p169
      %p172 = scmp.ne.s32.totalorder %s155, %s171
      %p173 = scmp.eq.s32.totalorder %s18, 0
      %p174 = por %p172, %p173
      %p175 = scmp.le.s32.totalorder 1, %s12
      %p176 = scmp.lt.s32.totalorder %s12, 9
      %p177 = pnand %p175, %p176
      %p178 = pneg %p177
      // Predicated region
      $region9: #{cnn_forward.5} parent=5 // pred_check
        _
      $region10: #{cnn_forward.5} parent=5 // pred_check_branch
        %180 = sbr.rel (%p177) target = $region12
      $region11: #{cnn_forward.5} parent=5 // pred_region
        %s181 = ssub.s32 %s12, 1
        // Predicated region
        $region13: #{cnn_forward.5} parent=11 // pred_check
          %p182 = pneg %p99
        $region14: #{cnn_forward.5} parent=11 // pred_check_branch
          %184 = sbr.rel (%p182) target = $region16
        $region15: #{cnn_forward.5} parent=11 // pred_region
          _
        $region16: #{cnn_forward.5} parent=11 // pred_fallthru
          _
        // Predicated region
        $region17: #{cnn_forward.5} parent=11 // pred_check
          %p185 = pneg %p120
        $region18: #{cnn_forward.5} parent=11 // pred_check_branch
          %187 = sbr.rel (%p185) target = $region20
        $region19: #{cnn_forward.5} parent=11 // pred_region
          _
        $region20: #{cnn_forward.5} parent=11 // pred_fallthru
          _
        // Predicated region
        $region21: #{cnn_forward.5} parent=11 // pred_check
          %p188 = pneg %p141
        $region22: #{cnn_forward.5} parent=11 // pred_check_branch
          %190 = sbr.rel (%p188) target = $region24
        $region23: #{cnn_forward.5} parent=11 // pred_region
          _
        $region24: #{cnn_forward.5} parent=11 // pred_fallthru
          _
      $region12: #{cnn_forward.5} parent=5 // pred_fallthru
        _
      %p191 = scmp.lt.s32.totalorder %s12, 8
      // Predicated region
      $region25: #{cnn_forward.5} parent=5 // pred_check
        %p192 = pneg %p191
      $region26: #{cnn_forward.5} parent=5 // pred_check_branch
        %194 = sbr.rel (%p192) target = $region28
      $region27: #{cnn_forward.5} parent=5 // pred_region
        // Predicated region
        $region29: #{cnn_forward.5} parent=27 // pred_check
          %p195 = pneg %p46
        $region30: #{cnn_forward.5} parent=27 // pred_check_branch
          %197 = sbr.rel (%p195) target = $region32
        $region31: #{cnn_forward.5} parent=27 // pred_region
          %s198 = smul.u32 9, %s20
          %p199 = scmp.lt.s32.totalorder %s19, 0
          %s200 = scalar_select %p199, %s19, 0
          %p201 = scmp.lt.s32.totalorder %s198, 71
          %s202 = scalar_select %p201, %s198, 71
          %s203 = smul.addr %s200, 72
          %s204 = sadd.s32 %s202, %s203
          %s205 = scalar_lea.vmem %s0, %s204
          %s206 = smul.u32 9, %s20
        $region32: #{cnn_forward.5} parent=27 // pred_fallthru
          _
        // Predicated region
        $region33: #{cnn_forward.5} parent=27 // pred_check
          %p207 = pneg %p72
        $region34: #{cnn_forward.5} parent=27 // pred_check_branch
          %209 = sbr.rel (%p207) target = $region36
        $region35: #{cnn_forward.5} parent=27 // pred_region
          %s210 = smul.u32 144, %s20
          %p211 = scmp.lt.s32.totalorder %s210, 1151
          %s212 = scalar_select %p211, %s210, 1151
          %s213 = smul.addr %s212, 2
          %s214 = smul.addr %s213, 4
          %s215 = scalar_lea.vmem %s1, %s214
          %s216 = smul.u32 144, %s20
        $region36: #{cnn_forward.5} parent=27 // pred_fallthru
          _
      $region28: #{cnn_forward.5} parent=5 // pred_fallthru
        _
      %p217 = scmp.le.s32.totalorder 1, %s12
      %p218 = scmp.lt.s32.totalorder %s12, 9
      %p219 = pnand %p217, %p218
      %p220 = pneg %p219
      // Predicated region
      $region37: #{cnn_forward.5} parent=5 // pred_check
        _
      $region38: #{cnn_forward.5} parent=5 // pred_check_branch
        %222 = sbr.rel (%p219) target = $region40
      $region39: #{cnn_forward.5} parent=5 // pred_region
        %s223 = ssub.s32 %s12, 1
        %s224 = smul.u32 9, %s22
        %p225 = scmp.lt.s32.totalorder %s21, 0
        %s226 = scalar_select %p225, %s21, 0
        %p227 = scmp.lt.s32.totalorder %s224, 71
        %s228 = scalar_select %p227, %s224, 71
        %s229 = smul.addr %s226, 72
        %s230 = sadd.s32 %s228, %s229
        %s231 = scalar_lea.vmem %s0, %s230
        %p232 = pneg %p52
        %p233 = pneg %p49
        %s234 = smul.u32 144, %s22
        %p235 = scmp.lt.s32.totalorder %s234, 1151
        %s236 = scalar_select %p235, %s234, 1151
        %s237 = smul.addr %s236, 2
        %s238 = smul.addr %s237, 4
        %s239 = scalar_lea.vmem %s1, %s238
        %p240 = pneg %p78
        %p241 = pneg %p75
        %p242 = pneg %p99
        %p243 = pneg %p96
        %p244 = pneg %p120
        %p245 = pneg %p117
        %p246 = pneg %p141
        %p247 = pneg %p138
        %p248 = pneg %p167
        %p249 = pneg %p164
        %s250 = smul.u32 9, %s22
        %p251 = scmp.lt.s32.totalorder %s21, 0
        %s252 = scalar_select %p251, %s21, 0
        %p253 = scmp.lt.s32.totalorder %s250, 71
        %s254 = scalar_select %p253, %s250, 71
        %s255 = smul.addr %s252, 72
        %s256 = sadd.s32 %s254, %s255
        %s257 = scalar_lea.vmem %s0, %s256
        %s258 = smul.u32 9, %s22
        %s259 = smul.u32 144, %s22
        %p260 = scmp.lt.s32.totalorder %s259, 1151
        %s261 = scalar_select %p260, %s259, 1151
        %s262 = smul.addr %s261, 2
        %s263 = smul.addr %s262, 4
        %s264 = scalar_lea.vmem %s1, %s263
        %s265 = smul.u32 144, %s22
        %p266 = scmp.eq.s32.totalorder %s22, 0
        // Predicated region
        $region41: #{cnn_forward.5} parent=39 // pred_check
          %p267 = pneg %p266
        $region42: #{cnn_forward.5} parent=39 // pred_check_branch
          %269 = sbr.rel (%p267) target = $region44
        $region43: #{cnn_forward.5} parent=39 // pred_region
          %270 = vst [vmem:[#allocation2] sm:$0xf] 0.0
        $region44: #{cnn_forward.5} parent=39 // pred_fallthru
          _
        %v271 = vld [vmem:[#allocation2] sm:$0xf]
        %v272 = vld [vmem:[%s257] sm:$0xff]
        %v273 = vld [vmem:[%s257 + $0x8] sm:$0x1]
        %v274 = vld [vmem:[%s264] sm:$0xff]
        %v275 = vld [vmem:[%s264 + $0x8] sm:$0xff]
        %v276 = vld [vmem:[%s264 + $0x10] sm:$0xff]
        %v277 = vld [vmem:[%s264 + $0x18] sm:$0xff]
        %v278 = vld [vmem:[%s264 + $0x20] sm:$0xff]
        %v279 = vld [vmem:[%s264 + $0x28] sm:$0xff]
        %v280 = vld [vmem:[%s264 + $0x30] sm:$0xff]
        %v281 = vld [vmem:[%s264 + $0x38] sm:$0xff]
        %v282 = vld [vmem:[%s264 + $0x40] sm:$0xff]
        %v283 = vld [vmem:[%s264 + $0x48] sm:$0xff]
        %v284 = vld [vmem:[%s264 + $0x50] sm:$0xff]
        %v285 = vld [vmem:[%s264 + $0x58] sm:$0xff]
        %v286 = vld [vmem:[%s264 + $0x60] sm:$0xff]
        %v287 = vld [vmem:[%s264 + $0x68] sm:$0xff]
        %v288 = vld [vmem:[%s264 + $0x70] sm:$0xff]
        %v289 = vld [vmem:[%s264 + $0x78] sm:$0xff]
        %v290 = vld [vmem:[%s264 + $0x80] sm:$0xff]
        %v291 = vld [vmem:[%s264 + $0x88] sm:$0xff]
        %v292 = vld [vmem:[%s264 + $0x90] sm:$0xff]
        %v293 = vld [vmem:[%s264 + $0x98] sm:$0xff]
        %v294 = vld [vmem:[%s264 + $0xa0] sm:$0xff]
        %v295 = vld [vmem:[%s264 + $0xa8] sm:$0xff]
        %v296 = vld [vmem:[%s264 + $0xb0] sm:$0xff]
        %v297 = vld [vmem:[%s264 + $0xb8] sm:$0xff]
        %v298 = vld [vmem:[%s264 + $0xc0] sm:$0xff]
        %v299 = vld [vmem:[%s264 + $0xc8] sm:$0xff]
        %v300 = vld [vmem:[%s264 + $0xd0] sm:$0xff]
        %v301 = vld [vmem:[%s264 + $0xd8] sm:$0xff]
        %v302 = vld [vmem:[%s264 + $0xe0] sm:$0xff]
        %v303 = vld [vmem:[%s264 + $0xe8] sm:$0xff]
        %v304 = vld [vmem:[%s264 + $0xf0] sm:$0xff]
        %v305 = vld [vmem:[%s264 + $0xf8] sm:$0xff]
        %v306 = vld [vmem:[%s264 + $0x100] sm:$0xff]
        %v307 = vld [vmem:[%s264 + $0x108] sm:$0xff]
        %v308 = vld [vmem:[%s264 + $0x110] sm:$0xff]
        %v309 = vld [vmem:[%s264 + $0x118] sm:$0xff]
        %v310 = vld [vmem:[%s264 + $0x120] sm:$0xff]
        %v311 = vld [vmem:[%s264 + $0x128] sm:$0xff]
        %v312 = vld [vmem:[%s264 + $0x130] sm:$0xff]
        %v313 = vld [vmem:[%s264 + $0x138] sm:$0xff]
        %v314 = vld [vmem:[%s264 + $0x140] sm:$0xff]
        %v315 = vld [vmem:[%s264 + $0x148] sm:$0xff]
        %v316 = vld [vmem:[%s264 + $0x150] sm:$0xff]
        %v317 = vld [vmem:[%s264 + $0x158] sm:$0xff]
        %v318 = vld [vmem:[%s264 + $0x160] sm:$0xff]
        %v319 = vld [vmem:[%s264 + $0x168] sm:$0xff]
        %v320 = vld [vmem:[%s264 + $0x170] sm:$0xff]
        %v321 = vld [vmem:[%s264 + $0x178] sm:$0xff]
        %v322 = vld [vmem:[%s264 + $0x180] sm:$0xff]
        %v323 = vld [vmem:[%s264 + $0x188] sm:$0xff]
        %v324 = vld [vmem:[%s264 + $0x190] sm:$0xff]
        %v325 = vld [vmem:[%s264 + $0x198] sm:$0xff]
        %v326 = vld [vmem:[%s264 + $0x1a0] sm:$0xff]
        %v327 = vld [vmem:[%s264 + $0x1a8] sm:$0xff]
        %v328 = vld [vmem:[%s264 + $0x1b0] sm:$0xff]
        %v329 = vld [vmem:[%s264 + $0x1b8] sm:$0xff]
        %v330 = vld [vmem:[%s264 + $0x1c0] sm:$0xff]
        %v331 = vld [vmem:[%s264 + $0x1c8] sm:$0xff]
        %v332 = vld [vmem:[%s264 + $0x1d0] sm:$0xff]
        %v333 = vld [vmem:[%s264 + $0x1d8] sm:$0xff]
        %v334 = vld [vmem:[%s264 + $0x1e0] sm:$0xff]
        %v335 = vld [vmem:[%s264 + $0x1e8] sm:$0xff]
        %v336 = vld [vmem:[%s264 + $0x1f0] sm:$0xff]
        %v337 = vld [vmem:[%s264 + $0x1f8] sm:$0xff]
        %v338 = vld [vmem:[%s264 + $0x200] sm:$0xff]
        %v339 = vld [vmem:[%s264 + $0x208] sm:$0xff]
        %v340 = vld [vmem:[%s264 + $0x210] sm:$0xff]
        %v341 = vld [vmem:[%s264 + $0x218] sm:$0xff]
        %v342 = vld [vmem:[%s264 + $0x220] sm:$0xff]
        %v343 = vld [vmem:[%s264 + $0x228] sm:$0xff]
        %v344 = vld [vmem:[%s264 + $0x230] sm:$0xff]
        %v345 = vld [vmem:[%s264 + $0x238] sm:$0xff]
        %v346 = vld [vmem:[%s264 + $0x240] sm:$0xff]
        %v347 = vld [vmem:[%s264 + $0x248] sm:$0xff]
        %v348 = vld [vmem:[%s264 + $0x250] sm:$0xff]
        %v349 = vld [vmem:[%s264 + $0x258] sm:$0xff]
        %v350 = vld [vmem:[%s264 + $0x260] sm:$0xff]
        %v351 = vld [vmem:[%s264 + $0x268] sm:$0xff]
        %v352 = vld [vmem:[%s264 + $0x270] sm:$0xff]
        %v353 = vld [vmem:[%s264 + $0x278] sm:$0xff]
        %v354 = vld [vmem:[%s264 + $0x280] sm:$0xff]
        %v355 = vld [vmem:[%s264 + $0x288] sm:$0xff]
        %v356 = vld [vmem:[%s264 + $0x290] sm:$0xff]
        %v357 = vld [vmem:[%s264 + $0x298] sm:$0xff]
        %v358 = vld [vmem:[%s264 + $0x2a0] sm:$0xff]
        %v359 = vld [vmem:[%s264 + $0x2a8] sm:$0xff]
        %v360 = vld [vmem:[%s264 + $0x2b0] sm:$0xff]
        %v361 = vld [vmem:[%s264 + $0x2b8] sm:$0xff]
        %v362 = vld [vmem:[%s264 + $0x2c0] sm:$0xff]
        %v363 = vld [vmem:[%s264 + $0x2c8] sm:$0xff]
        %v364 = vld [vmem:[%s264 + $0x2d0] sm:$0xff]
        %v365 = vld [vmem:[%s264 + $0x2d8] sm:$0xff]
        %v366 = vld [vmem:[%s264 + $0x2e0] sm:$0xff]
        %v367 = vld [vmem:[%s264 + $0x2e8] sm:$0xff]
        %v368 = vld [vmem:[%s264 + $0x2f0] sm:$0xff]
        %v369 = vld [vmem:[%s264 + $0x2f8] sm:$0xff]
        %v370 = vld [vmem:[%s264 + $0x300] sm:$0xff]
        %v371 = vld [vmem:[%s264 + $0x308] sm:$0xff]
        %v372 = vld [vmem:[%s264 + $0x310] sm:$0xff]
        %v373 = vld [vmem:[%s264 + $0x318] sm:$0xff]
        %v374 = vld [vmem:[%s264 + $0x320] sm:$0xff]
        %v375 = vld [vmem:[%s264 + $0x328] sm:$0xff]
        %v376 = vld [vmem:[%s264 + $0x330] sm:$0xff]
        %v377 = vld [vmem:[%s264 + $0x338] sm:$0xff]
        %v378 = vld [vmem:[%s264 + $0x340] sm:$0xff]
        %v379 = vld [vmem:[%s264 + $0x348] sm:$0xff]
        %v380 = vld [vmem:[%s264 + $0x350] sm:$0xff]
        %v381 = vld [vmem:[%s264 + $0x358] sm:$0xff]
        %v382 = vld [vmem:[%s264 + $0x360] sm:$0xff]
        %v383 = vld [vmem:[%s264 + $0x368] sm:$0xff]
        %v384 = vld [vmem:[%s264 + $0x370] sm:$0xff]
        %v385 = vld [vmem:[%s264 + $0x378] sm:$0xff]
        %v386 = vld [vmem:[%s264 + $0x380] sm:$0xff]
        %v387 = vld [vmem:[%s264 + $0x388] sm:$0xff]
        %v388 = vld [vmem:[%s264 + $0x390] sm:$0xff]
        %v389 = vld [vmem:[%s264 + $0x398] sm:$0xff]
        %v390 = vld [vmem:[%s264 + $0x3a0] sm:$0xff]
        %v391 = vld [vmem:[%s264 + $0x3a8] sm:$0xff]
        %v392 = vld [vmem:[%s264 + $0x3b0] sm:$0xff]
        %v393 = vld [vmem:[%s264 + $0x3b8] sm:$0xff]
        %v394 = vld [vmem:[%s264 + $0x3c0] sm:$0xff]
        %v395 = vld [vmem:[%s264 + $0x3c8] sm:$0xff]
        %v396 = vld [vmem:[%s264 + $0x3d0] sm:$0xff]
        %v397 = vld [vmem:[%s264 + $0x3d8] sm:$0xff]
        %v398 = vld [vmem:[%s264 + $0x3e0] sm:$0xff]
        %v399 = vld [vmem:[%s264 + $0x3e8] sm:$0xff]
        %v400 = vld [vmem:[%s264 + $0x3f0] sm:$0xff]
        %v401 = vld [vmem:[%s264 + $0x3f8] sm:$0xff]
        %v402 = vld [vmem:[%s264 + $0x400] sm:$0xff]
        %v403 = vld [vmem:[%s264 + $0x408] sm:$0xff]
        %v404 = vld [vmem:[%s264 + $0x410] sm:$0xff]
        %v405 = vld [vmem:[%s264 + $0x418] sm:$0xff]
        %v406 = vld [vmem:[%s264 + $0x420] sm:$0xff]
        %v407 = vld [vmem:[%s264 + $0x428] sm:$0xff]
        %v408 = vld [vmem:[%s264 + $0x430] sm:$0xff]
        %v409 = vld [vmem:[%s264 + $0x438] sm:$0xff]
        %v410 = vld [vmem:[%s264 + $0x440] sm:$0xff]
        %v411 = vld [vmem:[%s264 + $0x448] sm:$0xff]
        %v412 = vld [vmem:[%s264 + $0x450] sm:$0xff]
        %v413 = vld [vmem:[%s264 + $0x458] sm:$0xff]
        %v414 = vld [vmem:[%s264 + $0x460] sm:$0xff]
        %v415 = vld [vmem:[%s264 + $0x468] sm:$0xff]
        %v416 = vld [vmem:[%s264 + $0x470] sm:$0xff]
        %v417 = vld [vmem:[%s264 + $0x478] sm:$0xff]
        %419 = vst [vmem:[#allocation1] ss:$9 sm:$0xff] %v272
        %v420 = vld [vmem:[#allocation1] sm:$0xff]
        %v421 = vld [vmem:[#allocation1 + $0x9] sm:$0xff]
        %v422 = vld [vmem:[#allocation1 + $0x12] sm:$0xff]
        %v423 = vld [vmem:[#allocation1 + $0x1b] sm:$0xff]
        %v424 = vld [vmem:[#allocation1 + $0x24] sm:$0xff]
        %v425 = vld [vmem:[#allocation1 + $0x2d] sm:$0xff]
        %v426 = vld [vmem:[#allocation1 + $0x36] sm:$0xff]
        %v427 = vld [vmem:[#allocation1 + $0x3f] sm:$0xff]
        %429 = vst [vmem:[#allocation1] ss:$9 sm:$0xff] %v273
        %v430 = vld [vmem:[#allocation1] sm:$0xff]
        %v584 = vunpack.c.l.b16 %v274
        %v585 = vunpack.c.h.b16 %v274
        %v586 = vunpack.c.l.b16 %v275
        %v587 = vunpack.c.h.b16 %v275
        %v588 = vunpack.c.l.b16 %v276
        %v589 = vunpack.c.h.b16 %v276
        %v590 = vunpack.c.l.b16 %v277
        %v591 = vunpack.c.h.b16 %v277
        %v592 = vunpack.c.l.b16 %v278
        %v593 = vunpack.c.h.b16 %v278
        %v594 = vunpack.c.l.b16 %v279
        %v595 = vunpack.c.h.b16 %v279
        %v596 = vunpack.c.l.b16 %v280
        %v597 = vunpack.c.h.b16 %v280
        %v598 = vunpack.c.l.b16 %v281
        %v599 = vunpack.c.h.b16 %v281
        %v600 = vunpack.c.l.b16 %v282
        %v601 = vunpack.c.h.b16 %v282
        %v602 = vunpack.c.l.b16 %v283
        %v603 = vunpack.c.h.b16 %v283
        %v604 = vunpack.c.l.b16 %v284
        %v605 = vunpack.c.h.b16 %v284
        %v606 = vunpack.c.l.b16 %v285
        %v607 = vunpack.c.h.b16 %v285
        %v608 = vunpack.c.l.b16 %v286
        %v609 = vunpack.c.h.b16 %v286
        %v610 = vunpack.c.l.b16 %v287
        %v611 = vunpack.c.h.b16 %v287
        %v612 = vunpack.c.l.b16 %v288
        %v613 = vunpack.c.h.b16 %v288
        %v614 = vunpack.c.l.b16 %v289
        %v615 = vunpack.c.h.b16 %v289
        %v616 = vunpack.c.l.b16 %v290
        %v617 = vunpack.c.h.b16 %v290
        %v618 = vunpack.c.l.b16 %v291
        %v619 = vunpack.c.h.b16 %v291
        %v620 = vunpack.c.l.b16 %v292
        %v621 = vunpack.c.h.b16 %v292
        %v622 = vunpack.c.l.b16 %v293
        %v623 = vunpack.c.h.b16 %v293
        %v624 = vunpack.c.l.b16 %v294
        %v625 = vunpack.c.h.b16 %v294
        %v626 = vunpack.c.l.b16 %v295
        %v627 = vunpack.c.h.b16 %v295
        %v628 = vunpack.c.l.b16 %v296
        %v629 = vunpack.c.h.b16 %v296
        %v630 = vunpack.c.l.b16 %v297
        %v631 = vunpack.c.h.b16 %v297
        %v632 = vunpack.c.l.b16 %v298
        %v633 = vunpack.c.h.b16 %v298
        %v634 = vunpack.c.l.b16 %v299
        %v635 = vunpack.c.h.b16 %v299
        %v636 = vunpack.c.l.b16 %v300
        %v637 = vunpack.c.h.b16 %v300
        %v638 = vunpack.c.l.b16 %v301
        %v639 = vunpack.c.h.b16 %v301
        %v640 = vunpack.c.l.b16 %v302
        %v641 = vunpack.c.h.b16 %v302
        %v642 = vunpack.c.l.b16 %v303
        %v643 = vunpack.c.h.b16 %v303
        %v644 = vunpack.c.l.b16 %v304
        %v645 = vunpack.c.h.b16 %v304
        %v646 = vunpack.c.l.b16 %v305
        %v647 = vunpack.c.h.b16 %v305
        %v648 = vunpack.c.l.b16 %v306
        %v649 = vunpack.c.h.b16 %v306
        %v650 = vunpack.c.l.b16 %v307
        %v651 = vunpack.c.h.b16 %v307
        %v652 = vunpack.c.l.b16 %v308
        %v653 = vunpack.c.h.b16 %v308
        %v654 = vunpack.c.l.b16 %v309
        %v655 = vunpack.c.h.b16 %v309
        %v656 = vunpack.c.l.b16 %v310
        %v657 = vunpack.c.h.b16 %v310
        %v658 = vunpack.c.l.b16 %v311
        %v659 = vunpack.c.h.b16 %v311
        %v660 = vunpack.c.l.b16 %v312
        %v661 = vunpack.c.h.b16 %v312
        %v662 = vunpack.c.l.b16 %v313
        %v663 = vunpack.c.h.b16 %v313
        %v664 = vunpack.c.l.b16 %v314
        %v665 = vunpack.c.h.b16 %v314
        %v666 = vunpack.c.l.b16 %v315
        %v667 = vunpack.c.h.b16 %v315
        %v668 = vunpack.c.l.b16 %v316
        %v669 = vunpack.c.h.b16 %v316
        %v670 = vunpack.c.l.b16 %v317
        %v671 = vunpack.c.h.b16 %v317
        %v672 = vunpack.c.l.b16 %v318
        %v673 = vunpack.c.h.b16 %v318
        %v674 = vunpack.c.l.b16 %v319
        %v675 = vunpack.c.h.b16 %v319
        %v676 = vunpack.c.l.b16 %v320
        %v677 = vunpack.c.h.b16 %v320
        %v678 = vunpack.c.l.b16 %v321
        %v679 = vunpack.c.h.b16 %v321
        %v680 = vunpack.c.l.b16 %v322
        %v681 = vunpack.c.h.b16 %v322
        %v682 = vunpack.c.l.b16 %v323
        %v683 = vunpack.c.h.b16 %v323
        %v684 = vunpack.c.l.b16 %v324
        %v685 = vunpack.c.h.b16 %v324
        %v686 = vunpack.c.l.b16 %v325
        %v687 = vunpack.c.h.b16 %v325
        %v688 = vunpack.c.l.b16 %v326
        %v689 = vunpack.c.h.b16 %v326
        %v690 = vunpack.c.l.b16 %v327
        %v691 = vunpack.c.h.b16 %v327
        %v692 = vunpack.c.l.b16 %v328
        %v693 = vunpack.c.h.b16 %v328
        %v694 = vunpack.c.l.b16 %v329
        %v695 = vunpack.c.h.b16 %v329
        %v696 = vunpack.c.l.b16 %v330
        %v697 = vunpack.c.h.b16 %v330
        %v698 = vunpack.c.l.b16 %v331
        %v699 = vunpack.c.h.b16 %v331
        %v700 = vunpack.c.l.b16 %v332
        %v701 = vunpack.c.h.b16 %v332
        %v702 = vunpack.c.l.b16 %v333
        %v703 = vunpack.c.h.b16 %v333
        %v704 = vunpack.c.l.b16 %v334
        %v705 = vunpack.c.h.b16 %v334
        %v706 = vunpack.c.l.b16 %v335
        %v707 = vunpack.c.h.b16 %v335
        %v708 = vunpack.c.l.b16 %v336
        %v709 = vunpack.c.h.b16 %v336
        %v710 = vunpack.c.l.b16 %v337
        %v711 = vunpack.c.h.b16 %v337
        %v712 = vunpack.c.l.b16 %v338
        %v713 = vunpack.c.h.b16 %v338
        %v714 = vunpack.c.l.b16 %v339
        %v715 = vunpack.c.h.b16 %v339
        %v716 = vunpack.c.l.b16 %v340
        %v717 = vunpack.c.h.b16 %v340
        %v718 = vunpack.c.l.b16 %v341
        %v719 = vunpack.c.h.b16 %v341
        %v720 = vunpack.c.l.b16 %v342
        %v721 = vunpack.c.h.b16 %v342
        %v722 = vunpack.c.l.b16 %v343
        %v723 = vunpack.c.h.b16 %v343
        %v724 = vunpack.c.l.b16 %v344
        %v725 = vunpack.c.h.b16 %v344
        %v726 = vunpack.c.l.b16 %v345
        %v727 = vunpack.c.h.b16 %v345
        %v728 = vunpack.c.l.b16 %v346
        %v729 = vunpack.c.h.b16 %v346
        %v730 = vunpack.c.l.b16 %v347
        %v731 = vunpack.c.h.b16 %v347
        %v732 = vunpack.c.l.b16 %v348
        %v733 = vunpack.c.h.b16 %v348
        %v734 = vunpack.c.l.b16 %v349
        %v735 = vunpack.c.h.b16 %v349
        %v736 = vunpack.c.l.b16 %v350
        %v737 = vunpack.c.h.b16 %v350
        %v738 = vunpack.c.l.b16 %v351
        %v739 = vunpack.c.h.b16 %v351
        %v740 = vunpack.c.l.b16 %v352
        %v741 = vunpack.c.h.b16 %v352
        %v742 = vunpack.c.l.b16 %v353
        %v743 = vunpack.c.h.b16 %v353
        %v744 = vunpack.c.l.b16 %v354
        %v745 = vunpack.c.h.b16 %v354
        %v746 = vunpack.c.l.b16 %v355
        %v747 = vunpack.c.h.b16 %v355
        %v748 = vunpack.c.l.b16 %v356
        %v749 = vunpack.c.h.b16 %v356
        %v750 = vunpack.c.l.b16 %v357
        %v751 = vunpack.c.h.b16 %v357
        %v752 = vunpack.c.l.b16 %v358
        %v753 = vunpack.c.h.b16 %v358
        %v754 = vunpack.c.l.b16 %v359
        %v755 = vunpack.c.h.b16 %v359
        %v756 = vunpack.c.l.b16 %v360
        %v757 = vunpack.c.h.b16 %v360
        %v758 = vunpack.c.l.b16 %v361
        %v759 = vunpack.c.h.b16 %v361
        %v760 = vunpack.c.l.b16 %v362
        %v761 = vunpack.c.h.b16 %v362
        %v762 = vunpack.c.l.b16 %v363
        %v763 = vunpack.c.h.b16 %v363
        %v764 = vunpack.c.l.b16 %v364
        %v765 = vunpack.c.h.b16 %v364
        %v766 = vunpack.c.l.b16 %v365
        %v767 = vunpack.c.h.b16 %v365
        %v768 = vunpack.c.l.b16 %v366
        %v769 = vunpack.c.h.b16 %v366
        %v770 = vunpack.c.l.b16 %v367
        %v771 = vunpack.c.h.b16 %v367
        %v772 = vunpack.c.l.b16 %v368
        %v773 = vunpack.c.h.b16 %v368
        %v774 = vunpack.c.l.b16 %v369
        %v775 = vunpack.c.h.b16 %v369
        %v776 = vunpack.c.l.b16 %v370
        %v777 = vunpack.c.h.b16 %v370
        %v778 = vunpack.c.l.b16 %v371
        %v779 = vunpack.c.h.b16 %v371
        %v780 = vunpack.c.l.b16 %v372
        %v781 = vunpack.c.h.b16 %v372
        %v782 = vunpack.c.l.b16 %v373
        %v783 = vunpack.c.h.b16 %v373
        %v784 = vunpack.c.l.b16 %v374
        %v785 = vunpack.c.h.b16 %v374
        %v786 = vunpack.c.l.b16 %v375
        %v787 = vunpack.c.h.b16 %v375
        %v788 = vunpack.c.l.b16 %v376
        %v789 = vunpack.c.h.b16 %v376
        %v790 = vunpack.c.l.b16 %v377
        %v791 = vunpack.c.h.b16 %v377
        %v792 = vunpack.c.l.b16 %v378
        %v793 = vunpack.c.h.b16 %v378
        %v794 = vunpack.c.l.b16 %v379
        %v795 = vunpack.c.h.b16 %v379
        %v796 = vunpack.c.l.b16 %v380
        %v797 = vunpack.c.h.b16 %v380
        %v798 = vunpack.c.l.b16 %v381
        %v799 = vunpack.c.h.b16 %v381
        %v800 = vunpack.c.l.b16 %v382
        %v801 = vunpack.c.h.b16 %v382
        %v802 = vunpack.c.l.b16 %v383
        %v803 = vunpack.c.h.b16 %v383
        %v804 = vunpack.c.l.b16 %v384
        %v805 = vunpack.c.h.b16 %v384
        %v806 = vunpack.c.l.b16 %v385
        %v807 = vunpack.c.h.b16 %v385
        %v808 = vunpack.c.l.b16 %v386
        %v809 = vunpack.c.h.b16 %v386
        %v810 = vunpack.c.l.b16 %v387
        %v811 = vunpack.c.h.b16 %v387
        %v812 = vunpack.c.l.b16 %v388
        %v813 = vunpack.c.h.b16 %v388
        %v814 = vunpack.c.l.b16 %v389
        %v815 = vunpack.c.h.b16 %v389
        %v816 = vunpack.c.l.b16 %v390
        %v817 = vunpack.c.h.b16 %v390
        %v818 = vunpack.c.l.b16 %v391
        %v819 = vunpack.c.h.b16 %v391
        %v820 = vunpack.c.l.b16 %v392
        %v821 = vunpack.c.h.b16 %v392
        %v822 = vunpack.c.l.b16 %v393
        %v823 = vunpack.c.h.b16 %v393
        %v824 = vunpack.c.l.b16 %v394
        %v825 = vunpack.c.h.b16 %v394
        %v826 = vunpack.c.l.b16 %v395
        %v827 = vunpack.c.h.b16 %v395
        %v828 = vunpack.c.l.b16 %v396
        %v829 = vunpack.c.h.b16 %v396
        %v830 = vunpack.c.l.b16 %v397
        %v831 = vunpack.c.h.b16 %v397
        %v832 = vunpack.c.l.b16 %v398
        %v833 = vunpack.c.h.b16 %v398
        %v834 = vunpack.c.l.b16 %v399
        %v835 = vunpack.c.h.b16 %v399
        %v836 = vunpack.c.l.b16 %v400
        %v837 = vunpack.c.h.b16 %v400
        %v838 = vunpack.c.l.b16 %v401
        %v839 = vunpack.c.h.b16 %v401
        %v840 = vunpack.c.l.b16 %v402
        %v841 = vunpack.c.h.b16 %v402
        %v842 = vunpack.c.l.b16 %v403
        %v843 = vunpack.c.h.b16 %v403
        %v844 = vunpack.c.l.b16 %v404
        %v845 = vunpack.c.h.b16 %v404
        %v846 = vunpack.c.l.b16 %v405
        %v847 = vunpack.c.h.b16 %v405
        %v848 = vunpack.c.l.b16 %v406
        %v849 = vunpack.c.h.b16 %v406
        %v850 = vunpack.c.l.b16 %v407
        %v851 = vunpack.c.h.b16 %v407
        %v852 = vunpack.c.l.b16 %v408
        %v853 = vunpack.c.h.b16 %v408
        %v854 = vunpack.c.l.b16 %v409
        %v855 = vunpack.c.h.b16 %v409
        %v856 = vunpack.c.l.b16 %v410
        %v857 = vunpack.c.h.b16 %v410
        %v858 = vunpack.c.l.b16 %v411
        %v859 = vunpack.c.h.b16 %v411
        %v860 = vunpack.c.l.b16 %v412
        %v861 = vunpack.c.h.b16 %v412
        %v862 = vunpack.c.l.b16 %v413
        %v863 = vunpack.c.h.b16 %v413
        %v864 = vunpack.c.l.b16 %v414
        %v865 = vunpack.c.h.b16 %v414
        %v866 = vunpack.c.l.b16 %v415
        %v867 = vunpack.c.h.b16 %v415
        %v868 = vunpack.c.l.b16 %v416
        %v869 = vunpack.c.h.b16 %v416
        %v870 = vunpack.c.l.b16 %v417
        %v871 = vunpack.c.h.b16 %v417
        %v872 = vpack.c.b16 %v586, %v584
        %v873 = vpack.c.b16 %v587, %v585
        %v874 = vpack.c.b16 %v590, %v588
        %v875 = vpack.c.b16 %v591, %v589
        %v876 = vpack.c.b16 %v594, %v592
        %v877 = vpack.c.b16 %v595, %v593
        %v878 = vpack.c.b16 %v598, %v596
        %v879 = vpack.c.b16 %v599, %v597
        %v880 = vpack.c.b16 %v602, %v600
        %v881 = vpack.c.b16 %v603, %v601
        %v882 = vpack.c.b16 %v606, %v604
        %v883 = vpack.c.b16 %v607, %v605
        %v884 = vpack.c.b16 %v610, %v608
        %v885 = vpack.c.b16 %v611, %v609
        %v886 = vpack.c.b16 %v614, %v612
        %v887 = vpack.c.b16 %v615, %v613
        %v888 = vpack.c.b16 %v618, %v616
        %v889 = vpack.c.b16 %v619, %v617
        %v890 = vpack.c.b16 %v622, %v620
        %v891 = vpack.c.b16 %v623, %v621
        %v892 = vpack.c.b16 %v626, %v624
        %v893 = vpack.c.b16 %v627, %v625
        %v894 = vpack.c.b16 %v630, %v628
        %v895 = vpack.c.b16 %v631, %v629
        %v896 = vpack.c.b16 %v634, %v632
        %v897 = vpack.c.b16 %v635, %v633
        %v898 = vpack.c.b16 %v638, %v636
        %v899 = vpack.c.b16 %v639, %v637
        %v900 = vpack.c.b16 %v642, %v640
        %v901 = vpack.c.b16 %v643, %v641
        %v902 = vpack.c.b16 %v646, %v644
        %v903 = vpack.c.b16 %v647, %v645
        %v904 = vpack.c.b16 %v650, %v648
        %v905 = vpack.c.b16 %v651, %v649
        %v906 = vpack.c.b16 %v654, %v652
        %v907 = vpack.c.b16 %v655, %v653
        %v908 = vpack.c.b16 %v658, %v656
        %v909 = vpack.c.b16 %v659, %v657
        %v910 = vpack.c.b16 %v662, %v660
        %v911 = vpack.c.b16 %v663, %v661
        %v912 = vpack.c.b16 %v666, %v664
        %v913 = vpack.c.b16 %v667, %v665
        %v914 = vpack.c.b16 %v670, %v668
        %v915 = vpack.c.b16 %v671, %v669
        %v916 = vpack.c.b16 %v674, %v672
        %v917 = vpack.c.b16 %v675, %v673
        %v918 = vpack.c.b16 %v678, %v676
        %v919 = vpack.c.b16 %v679, %v677
        %v920 = vpack.c.b16 %v682, %v680
        %v921 = vpack.c.b16 %v683, %v681
        %v922 = vpack.c.b16 %v686, %v684
        %v923 = vpack.c.b16 %v687, %v685
        %v924 = vpack.c.b16 %v690, %v688
        %v925 = vpack.c.b16 %v691, %v689
        %v926 = vpack.c.b16 %v694, %v692
        %v927 = vpack.c.b16 %v695, %v693
        %v928 = vpack.c.b16 %v698, %v696
        %v929 = vpack.c.b16 %v699, %v697
        %v930 = vpack.c.b16 %v702, %v700
        %v931 = vpack.c.b16 %v703, %v701
        %v932 = vpack.c.b16 %v706, %v704
        %v933 = vpack.c.b16 %v707, %v705
        %v934 = vpack.c.b16 %v710, %v708
        %v935 = vpack.c.b16 %v711, %v709
        %v936 = vpack.c.b16 %v714, %v712
        %v937 = vpack.c.b16 %v715, %v713
        %v938 = vpack.c.b16 %v718, %v716
        %v939 = vpack.c.b16 %v719, %v717
        %v940 = vpack.c.b16 %v722, %v720
        %v941 = vpack.c.b16 %v723, %v721
        %v942 = vpack.c.b16 %v726, %v724
        %v943 = vpack.c.b16 %v727, %v725
        %v944 = vpack.c.b16 %v730, %v728
        %v945 = vpack.c.b16 %v731, %v729
        %v946 = vpack.c.b16 %v734, %v732
        %v947 = vpack.c.b16 %v735, %v733
        %v948 = vpack.c.b16 %v738, %v736
        %v949 = vpack.c.b16 %v739, %v737
        %v950 = vpack.c.b16 %v742, %v740
        %v951 = vpack.c.b16 %v743, %v741
        %v952 = vpack.c.b16 %v746, %v744
        %v953 = vpack.c.b16 %v747, %v745
        %v954 = vpack.c.b16 %v750, %v748
        %v955 = vpack.c.b16 %v751, %v749
        %v956 = vpack.c.b16 %v754, %v752
        %v957 = vpack.c.b16 %v755, %v753
        %v958 = vpack.c.b16 %v758, %v756
        %v959 = vpack.c.b16 %v759, %v757
        %v960 = vpack.c.b16 %v762, %v760
        %v961 = vpack.c.b16 %v763, %v761
        %v962 = vpack.c.b16 %v766, %v764
        %v963 = vpack.c.b16 %v767, %v765
        %v964 = vpack.c.b16 %v770, %v768
        %v965 = vpack.c.b16 %v771, %v769
        %v966 = vpack.c.b16 %v774, %v772
        %v967 = vpack.c.b16 %v775, %v773
        %v968 = vpack.c.b16 %v778, %v776
        %v969 = vpack.c.b16 %v779, %v777
        %v970 = vpack.c.b16 %v782, %v780
        %v971 = vpack.c.b16 %v783, %v781
        %v972 = vpack.c.b16 %v786, %v784
        %v973 = vpack.c.b16 %v787, %v785
        %v974 = vpack.c.b16 %v790, %v788
        %v975 = vpack.c.b16 %v791, %v789
        %v976 = vpack.c.b16 %v794, %v792
        %v977 = vpack.c.b16 %v795, %v793
        %v978 = vpack.c.b16 %v798, %v796
        %v979 = vpack.c.b16 %v799, %v797
        %v980 = vpack.c.b16 %v802, %v800
        %v981 = vpack.c.b16 %v803, %v801
        %v982 = vpack.c.b16 %v806, %v804
        %v983 = vpack.c.b16 %v807, %v805
        %v984 = vpack.c.b16 %v810, %v808
        %v985 = vpack.c.b16 %v811, %v809
        %v986 = vpack.c.b16 %v814, %v812
        %v987 = vpack.c.b16 %v815, %v813
        %v988 = vpack.c.b16 %v818, %v816
        %v989 = vpack.c.b16 %v819, %v817
        %v990 = vpack.c.b16 %v822, %v820
        %v991 = vpack.c.b16 %v823, %v821
        %v992 = vpack.c.b16 %v826, %v824
        %v993 = vpack.c.b16 %v827, %v825
        %v994 = vpack.c.b16 %v830, %v828
        %v995 = vpack.c.b16 %v831, %v829
        %v996 = vpack.c.b16 %v834, %v832
        %v997 = vpack.c.b16 %v835, %v833
        %v998 = vpack.c.b16 %v838, %v836
        %v999 = vpack.c.b16 %v839, %v837
        %v1000 = vpack.c.b16 %v842, %v840
        %v1001 = vpack.c.b16 %v843, %v841
        %v1002 = vpack.c.b16 %v846, %v844
        %v1003 = vpack.c.b16 %v847, %v845
        %v1004 = vpack.c.b16 %v850, %v848
        %v1005 = vpack.c.b16 %v851, %v849
        %v1006 = vpack.c.b16 %v854, %v852
        %v1007 = vpack.c.b16 %v855, %v853
        %v1008 = vpack.c.b16 %v858, %v856
        %v1009 = vpack.c.b16 %v859, %v857
        %v1010 = vpack.c.b16 %v862, %v860
        %v1011 = vpack.c.b16 %v863, %v861
        %v1012 = vpack.c.b16 %v866, %v864
        %v1013 = vpack.c.b16 %v867, %v865
        %v1014 = vpack.c.b16 %v870, %v868
        %v1015 = vpack.c.b16 %v871, %v869
        %1160 = vmatpush.bf16.msra.mxu0 %v886
        %1161 = vmatpush.bf16.msra.mxu0 %v884
        %1162 = vmatpush.bf16.msra.mxu0 %v882
        %1163 = vmatpush.bf16.msra.mxu0 %v880
        %1164 = vmatpush.bf16.msra.mxu0 %v878
        %1165 = vmatpush.bf16.msra.mxu0 %v876
        %1166 = vmatpush.bf16.msra.mxu0 %v874
        %1167 = vmatpush.bf16.msra.mxu0 %v872
        %1168 = vmatmul.bf16.gmra.mxu0 %v420
        %v1169 = vpop.f32.mrf.mxu0
        %v1170 = vadd.f32 0.0, %v1169
        %v1171 = vpop.f32.mrf.mxu0
        %1172 = vdwg.mxu0
        %1173 = vmatpush.bf16.msra.mxu0 %v902
        %1174 = vmatpush.bf16.msra.mxu0 %v900
        %1175 = vmatpush.bf16.msra.mxu0 %v898
        %1176 = vmatpush.bf16.msra.mxu0 %v896
        %1177 = vmatpush.bf16.msra.mxu0 %v894
        %1178 = vmatpush.bf16.msra.mxu0 %v892
        %1179 = vmatpush.bf16.msra.mxu0 %v890
        %1180 = vmatpush.bf16.msra.mxu0 %v888
        %1181 = vmatmul.bf16.gmra.mxu0 %v421
        %v1182 = vpop.f32.mrf.mxu0
        %v1183 = vadd.f32 %v1170, %v1182
        %v1184 = vpop.f32.mrf.mxu0
        %1185 = vdwg.mxu0
        %1186 = vmatpush.bf16.msra.mxu0 %v918
        %1187 = vmatpush.bf16.msra.mxu0 %v916
        %1188 = vmatpush.bf16.msra.mxu0 %v914
        %1189 = vmatpush.bf16.msra.mxu0 %v912
        %1190 = vmatpush.bf16.msra.mxu0 %v910
        %1191 = vmatpush.bf16.msra.mxu0 %v908
        %1192 = vmatpush.bf16.msra.mxu0 %v906
        %1193 = vmatpush.bf16.msra.mxu0 %v904
        %1194 = vmatmul.bf16.gmra.mxu0 %v422
        %v1195 = vpop.f32.mrf.mxu0
        %v1196 = vadd.f32 %v1183, %v1195
        %v1197 = vpop.f32.mrf.mxu0
        %1198 = vdwg.mxu0
        %1199 = vmatpush.bf16.msra.mxu0 %v934
        %1200 = vmatpush.bf16.msra.mxu0 %v932
        %1201 = vmatpush.bf16.msra.mxu0 %v930
        %1202 = vmatpush.bf16.msra.mxu0 %v928
        %1203 = vmatpush.bf16.msra.mxu0 %v926
        %1204 = vmatpush.bf16.msra.mxu0 %v924
        %1205 = vmatpush.bf16.msra.mxu0 %v922
        %1206 = vmatpush.bf16.msra.mxu0 %v920
        %1207 = vmatmul.bf16.gmra.mxu0 %v423
        %v1208 = vpop.f32.mrf.mxu0
        %v1209 = vadd.f32 %v1196, %v1208
        %v1210 = vpop.f32.mrf.mxu0
        %1211 = vdwg.mxu0
        %1212 = vmatpush.bf16.msra.mxu0 %v950
        %1213 = vmatpush.bf16.msra.mxu0 %v948
        %1214 = vmatpush.bf16.msra.mxu0 %v946
        %1215 = vmatpush.bf16.msra.mxu0 %v944
        %1216 = vmatpush.bf16.msra.mxu0 %v942
        %1217 = vmatpush.bf16.msra.mxu0 %v940
        %1218 = vmatpush.bf16.msra.mxu0 %v938
        %1219 = vmatpush.bf16.msra.mxu0 %v936
        %1220 = vmatmul.bf16.gmra.mxu0 %v424
        %v1221 = vpop.f32.mrf.mxu0
        %v1222 = vadd.f32 %v1209, %v1221
        %v1223 = vpop.f32.mrf.mxu0
        %1224 = vdwg.mxu0
        %1225 = vmatpush.bf16.msra.mxu0 %v966
        %1226 = vmatpush.bf16.msra.mxu0 %v964
        %1227 = vmatpush.bf16.msra.mxu0 %v962
        %1228 = vmatpush.bf16.msra.mxu0 %v960
        %1229 = vmatpush.bf16.msra.mxu0 %v958
        %1230 = vmatpush.bf16.msra.mxu0 %v956
        %1231 = vmatpush.bf16.msra.mxu0 %v954
        %1232 = vmatpush.bf16.msra.mxu0 %v952
        %1233 = vmatmul.bf16.gmra.mxu0 %v425
        %v1234 = vpop.f32.mrf.mxu0
        %v1235 = vadd.f32 %v1222, %v1234
        %v1236 = vpop.f32.mrf.mxu0
        %1237 = vdwg.mxu0
        %1238 = vmatpush.bf16.msra.mxu0 %v982
        %1239 = vmatpush.bf16.msra.mxu0 %v980
        %1240 = vmatpush.bf16.msra.mxu0 %v978
        %1241 = vmatpush.bf16.msra.mxu0 %v976
        %1242 = vmatpush.bf16.msra.mxu0 %v974
        %1243 = vmatpush.bf16.msra.mxu0 %v972
        %1244 = vmatpush.bf16.msra.mxu0 %v970
        %1245 = vmatpush.bf16.msra.mxu0 %v968
        %1246 = vmatmul.bf16.gmra.mxu0 %v426
        %v1247 = vpop.f32.mrf.mxu0
        %v1248 = vadd.f32 %v1235, %v1247
        %v1249 = vpop.f32.mrf.mxu0
        %1250 = vdwg.mxu0
        %1251 = vmatpush.bf16.msra.mxu0 %v998
        %1252 = vmatpush.bf16.msra.mxu0 %v996
        %1253 = vmatpush.bf16.msra.mxu0 %v994
        %1254 = vmatpush.bf16.msra.mxu0 %v992
        %1255 = vmatpush.bf16.msra.mxu0 %v990
        %1256 = vmatpush.bf16.msra.mxu0 %v988
        %1257 = vmatpush.bf16.msra.mxu0 %v986
        %1258 = vmatpush.bf16.msra.mxu0 %v984
        %1259 = vmatmul.bf16.gmra.mxu0 %v427
        %v1260 = vpop.f32.mrf.mxu0
        %v1261 = vadd.f32 %v1248, %v1260
        %v1262 = vpop.f32.mrf.mxu0
        %1263 = vdwg.mxu0
        %1264 = vmatpush.bf16.msra.mxu0 %v1014
        %1265 = vmatpush.bf16.msra.mxu0 %v1012
        %1266 = vmatpush.bf16.msra.mxu0 %v1010
        %1267 = vmatpush.bf16.msra.mxu0 %v1008
        %1268 = vmatpush.bf16.msra.mxu0 %v1006
        %1269 = vmatpush.bf16.msra.mxu0 %v1004
        %1270 = vmatpush.bf16.msra.mxu0 %v1002
        %1271 = vmatpush.bf16.msra.mxu0 %v1000
        %1272 = vmatmul.bf16.gmra.mxu0 %v430
        %v1273 = vpop.f32.mrf.mxu0
        %v1274 = vadd.f32 %v1261, %v1273
        %v1275 = vpop.f32.mrf.mxu0
        %1276 = vdwg.mxu0
        %1277 = vmatpush.bf16.msra.mxu0 %v887
        %1278 = vmatpush.bf16.msra.mxu0 %v885
        %1279 = vmatpush.bf16.msra.mxu0 %v883
        %1280 = vmatpush.bf16.msra.mxu0 %v881
        %1281 = vmatpush.bf16.msra.mxu0 %v879
        %1282 = vmatpush.bf16.msra.mxu0 %v877
        %1283 = vmatpush.bf16.msra.mxu0 %v875
        %1284 = vmatpush.bf16.msra.mxu0 %v873
        %1285 = vmatmul.bf16.gmra.mxu0 %v420
        %v1286 = vpop.f32.mrf.mxu0
        %v1287 = vadd.f32 0.0, %v1286
        %v1288 = vpop.f32.mrf.mxu0
        %1289 = vdwg.mxu0
        %1290 = vmatpush.bf16.msra.mxu0 %v903
        %1291 = vmatpush.bf16.msra.mxu0 %v901
        %1292 = vmatpush.bf16.msra.mxu0 %v899
        %1293 = vmatpush.bf16.msra.mxu0 %v897
        %1294 = vmatpush.bf16.msra.mxu0 %v895
        %1295 = vmatpush.bf16.msra.mxu0 %v893
        %1296 = vmatpush.bf16.msra.mxu0 %v891
        %1297 = vmatpush.bf16.msra.mxu0 %v889
        %1298 = vmatmul.bf16.gmra.mxu0 %v421
        %v1299 = vpop.f32.mrf.mxu0
        %v1300 = vadd.f32 %v1287, %v1299
        %v1301 = vpop.f32.mrf.mxu0
        %1302 = vdwg.mxu0
        %1303 = vmatpush.bf16.msra.mxu0 %v919
        %1304 = vmatpush.bf16.msra.mxu0 %v917
        %1305 = vmatpush.bf16.msra.mxu0 %v915
        %1306 = vmatpush.bf16.msra.mxu0 %v913
        %1307 = vmatpush.bf16.msra.mxu0 %v911
        %1308 = vmatpush.bf16.msra.mxu0 %v909
        %1309 = vmatpush.bf16.msra.mxu0 %v907
        %1310 = vmatpush.bf16.msra.mxu0 %v905
        %1311 = vmatmul.bf16.gmra.mxu0 %v422
        %v1312 = vpop.f32.mrf.mxu0
        %v1313 = vadd.f32 %v1300, %v1312
        %v1314 = vpop.f32.mrf.mxu0
        %1315 = vdwg.mxu0
        %1316 = vmatpush.bf16.msra.mxu0 %v935
        %1317 = vmatpush.bf16.msra.mxu0 %v933
        %1318 = vmatpush.bf16.msra.mxu0 %v931
        %1319 = vmatpush.bf16.msra.mxu0 %v929
        %1320 = vmatpush.bf16.msra.mxu0 %v927
        %1321 = vmatpush.bf16.msra.mxu0 %v925
        %1322 = vmatpush.bf16.msra.mxu0 %v923
        %1323 = vmatpush.bf16.msra.mxu0 %v921
        %1324 = vmatmul.bf16.gmra.mxu0 %v423
        %v1325 = vpop.f32.mrf.mxu0
        %v1326 = vadd.f32 %v1313, %v1325
        %v1327 = vpop.f32.mrf.mxu0
        %1328 = vdwg.mxu0
        %1329 = vmatpush.bf16.msra.mxu0 %v951
        %1330 = vmatpush.bf16.msra.mxu0 %v949
        %1331 = vmatpush.bf16.msra.mxu0 %v947
        %1332 = vmatpush.bf16.msra.mxu0 %v945
        %1333 = vmatpush.bf16.msra.mxu0 %v943
        %1334 = vmatpush.bf16.msra.mxu0 %v941
        %1335 = vmatpush.bf16.msra.mxu0 %v939
        %1336 = vmatpush.bf16.msra.mxu0 %v937
        %1337 = vmatmul.bf16.gmra.mxu0 %v424
        %v1338 = vpop.f32.mrf.mxu0
        %v1339 = vadd.f32 %v1326, %v1338
        %v1340 = vpop.f32.mrf.mxu0
        %1341 = vdwg.mxu0
        %1342 = vmatpush.bf16.msra.mxu0 %v967
        %1343 = vmatpush.bf16.msra.mxu0 %v965
        %1344 = vmatpush.bf16.msra.mxu0 %v963
        %1345 = vmatpush.bf16.msra.mxu0 %v961
        %1346 = vmatpush.bf16.msra.mxu0 %v959
        %1347 = vmatpush.bf16.msra.mxu0 %v957
        %1348 = vmatpush.bf16.msra.mxu0 %v955
        %1349 = vmatpush.bf16.msra.mxu0 %v953
        %1350 = vmatmul.bf16.gmra.mxu0 %v425
        %v1351 = vpop.f32.mrf.mxu0
        %v1352 = vadd.f32 %v1339, %v1351
        %v1353 = vpop.f32.mrf.mxu0
        %1354 = vdwg.mxu0
        %1355 = vmatpush.bf16.msra.mxu0 %v983
        %1356 = vmatpush.bf16.msra.mxu0 %v981
        %1357 = vmatpush.bf16.msra.mxu0 %v979
        %1358 = vmatpush.bf16.msra.mxu0 %v977
        %1359 = vmatpush.bf16.msra.mxu0 %v975
        %1360 = vmatpush.bf16.msra.mxu0 %v973
        %1361 = vmatpush.bf16.msra.mxu0 %v971
        %1362 = vmatpush.bf16.msra.mxu0 %v969
        %1363 = vmatmul.bf16.gmra.mxu0 %v426
        %v1364 = vpop.f32.mrf.mxu0
        %v1365 = vadd.f32 %v1352, %v1364
        %v1366 = vpop.f32.mrf.mxu0
        %1367 = vdwg.mxu0
        %1368 = vmatpush.bf16.msra.mxu0 %v999
        %1369 = vmatpush.bf16.msra.mxu0 %v997
        %1370 = vmatpush.bf16.msra.mxu0 %v995
        %1371 = vmatpush.bf16.msra.mxu0 %v993
        %1372 = vmatpush.bf16.msra.mxu0 %v991
        %1373 = vmatpush.bf16.msra.mxu0 %v989
        %1374 = vmatpush.bf16.msra.mxu0 %v987
        %1375 = vmatpush.bf16.msra.mxu0 %v985
        %1376 = vmatmul.bf16.gmra.mxu0 %v427
        %v1377 = vpop.f32.mrf.mxu0
        %v1378 = vadd.f32 %v1365, %v1377
        %v1379 = vpop.f32.mrf.mxu0
        %1380 = vdwg.mxu0
        %1381 = vmatpush.bf16.msra.mxu0 %v1015
        %1382 = vmatpush.bf16.msra.mxu0 %v1013
        %1383 = vmatpush.bf16.msra.mxu0 %v1011
        %1384 = vmatpush.bf16.msra.mxu0 %v1009
        %1385 = vmatpush.bf16.msra.mxu0 %v1007
        %1386 = vmatpush.bf16.msra.mxu0 %v1005
        %1387 = vmatpush.bf16.msra.mxu0 %v1003
        %1388 = vmatpush.bf16.msra.mxu0 %v1001
        %1389 = vmatmul.bf16.gmra.mxu0 %v430
        %v1390 = vpop.f32.mrf.mxu0
        %v1391 = vadd.f32 %v1378, %v1390
        %v1392 = vpop.f32.mrf.mxu0
        %1393 = vdwg.mxu0
        %v1396 = vrot.slane %v1391, 6
        %vm1397 = vcmask 1041408
        %v1398 = vsel %vm1397, %v1274, %v1396
        %v1400 = vadd.f32 %v271, %v1398
        %1401 = vst [vmem:[#allocation2] sm:$0xf] %v1400
        %p1402 = scmp.eq.s32.totalorder %s22, 7
        // Predicated region
        $region45: #{cnn_forward.5} parent=39 // pred_check
          %p1403 = pneg %p1402
        $region46: #{cnn_forward.5} parent=39 // pred_check_branch
          %1405 = sbr.rel (%p1403) target = $region48
        $region47: #{cnn_forward.5} parent=39 // pred_region
          %v1406 = vld [vmem:[#allocation2] sm:$0xf]
          %v1407 = vld [vmem:[%s2] sm:$0x3]
          %v1409 = vperm.slane %v1407, 0
          %v1410 = vperm.slane %v1407, 1
          %v1411 = vrot.slane %v1410, 6
          %v1412 = vsel %vm1397, %v1409, %v1411
          %v1414 = vadd.f32 %v1406, %v1412
          %v1415 = vmax.f32 %v1414, 0.0
          %1417 = vst [vmem:[#allocation1] ss:$4 sm:$0xff] %v1415
          %v1418 = vld.sshfl [vmem:[#allocation1] sm:$0xff pattern:$0x73625140]
          %v1419 = vld.sshfl [vmem:[#allocation1 + $0x8] sm:$0xff pattern:$0x73625140]
          %v1422 = vpack.c.bf16 %v1418, %v1418
          %v1423 = vpack.c.bf16 %v1419, %v1419
          %v1424 = vld [vmem:[%s3] sm:$0xf]
          %v1425 = vld [vmem:[%s3 + $0x4] sm:$0xf]
          %v1426 = vld [vmem:[%s3 + $0x8] sm:$0xf]
          %v1427 = vld [vmem:[%s3 + $0xc] sm:$0xf]
          %v1428 = vld [vmem:[%s3 + $0x10] sm:$0xf]
          %v1429 = vld [vmem:[%s3 + $0x14] sm:$0xf]
          %v1430 = vld [vmem:[%s3 + $0x18] sm:$0xf]
          %v1431 = vld [vmem:[%s3 + $0x1c] sm:$0xf]
          %v1432 = vld [vmem:[%s3 + $0x20] sm:$0xf]
          %v1433 = vld [vmem:[%s3 + $0x24] sm:$0xf]
          %v1434 = vld [vmem:[%s3 + $0x28] sm:$0xf]
          %v1435 = vld [vmem:[%s3 + $0x2c] sm:$0xf]
          %v1436 = vld [vmem:[%s3 + $0x30] sm:$0xf]
          %v1437 = vld [vmem:[%s3 + $0x34] sm:$0xf]
          %v1438 = vld [vmem:[%s3 + $0x38] sm:$0xf]
          %v1439 = vld [vmem:[%s3 + $0x3c] sm:$0xf]
          %v1440 = vld [vmem:[%s3 + $0x40] sm:$0xf]
          %v1441 = vld [vmem:[%s3 + $0x44] sm:$0xf]
          %v1442 = vld [vmem:[%s3 + $0x48] sm:$0xf]
          %v1443 = vld [vmem:[%s3 + $0x4c] sm:$0xf]
          %v1444 = vld [vmem:[%s3 + $0x50] sm:$0xf]
          %v1445 = vld [vmem:[%s3 + $0x54] sm:$0xf]
          %v1446 = vld [vmem:[%s3 + $0x58] sm:$0xf]
          %v1447 = vld [vmem:[%s3 + $0x5c] sm:$0xf]
          %v1448 = vld [vmem:[%s3 + $0x60] sm:$0xf]
          %v1449 = vld [vmem:[%s3 + $0x64] sm:$0xf]
          %v1450 = vld [vmem:[%s3 + $0x68] sm:$0xf]
          %v1451 = vld [vmem:[%s3 + $0x6c] sm:$0xf]
          %v1452 = vld [vmem:[%s3 + $0x70] sm:$0xf]
          %v1453 = vld [vmem:[%s3 + $0x74] sm:$0xf]
          %v1454 = vld [vmem:[%s3 + $0x78] sm:$0xf]
          %v1455 = vld [vmem:[%s3 + $0x7c] sm:$0xf]
          %v1456 = vld [vmem:[%s4] sm:$0x1]
          %v1458 = vperm.slane %v1456, 0
          %v1492 = vunpack.c.l.b16 %v1424
          %v1493 = vunpack.c.l.b16 %v1425
          %v1494 = vunpack.c.l.b16 %v1426
          %v1495 = vunpack.c.l.b16 %v1427
          %v1496 = vunpack.c.l.b16 %v1428
          %v1497 = vunpack.c.l.b16 %v1429
          %v1498 = vunpack.c.l.b16 %v1430
          %v1499 = vunpack.c.l.b16 %v1431
          %v1500 = vunpack.c.l.b16 %v1432
          %v1501 = vunpack.c.l.b16 %v1433
          %v1502 = vunpack.c.l.b16 %v1434
          %v1503 = vunpack.c.l.b16 %v1435
          %v1504 = vunpack.c.l.b16 %v1436
          %v1505 = vunpack.c.l.b16 %v1437
          %v1506 = vunpack.c.l.b16 %v1438
          %v1507 = vunpack.c.l.b16 %v1439
          %v1508 = vunpack.c.l.b16 %v1440
          %v1509 = vunpack.c.l.b16 %v1441
          %v1510 = vunpack.c.l.b16 %v1442
          %v1511 = vunpack.c.l.b16 %v1443
          %v1512 = vunpack.c.l.b16 %v1444
          %v1513 = vunpack.c.l.b16 %v1445
          %v1514 = vunpack.c.l.b16 %v1446
          %v1515 = vunpack.c.l.b16 %v1447
          %v1516 = vunpack.c.l.b16 %v1448
          %v1517 = vunpack.c.l.b16 %v1449
          %v1518 = vunpack.c.l.b16 %v1450
          %v1519 = vunpack.c.l.b16 %v1451
          %v1520 = vunpack.c.l.b16 %v1452
          %v1521 = vunpack.c.l.b16 %v1453
          %v1522 = vunpack.c.l.b16 %v1454
          %v1523 = vunpack.c.l.b16 %v1455
          %v1524 = vpack.c.b16 %v1493, %v1492
          %v1525 = vpack.c.b16 %v1495, %v1494
          %v1526 = vpack.c.b16 %v1497, %v1496
          %v1527 = vpack.c.b16 %v1499, %v1498
          %v1528 = vpack.c.b16 %v1501, %v1500
          %v1529 = vpack.c.b16 %v1503, %v1502
          %v1530 = vpack.c.b16 %v1505, %v1504
          %v1531 = vpack.c.b16 %v1507, %v1506
          %v1532 = vpack.c.b16 %v1509, %v1508
          %v1533 = vpack.c.b16 %v1511, %v1510
          %v1534 = vpack.c.b16 %v1513, %v1512
          %v1535 = vpack.c.b16 %v1515, %v1514
          %v1536 = vpack.c.b16 %v1517, %v1516
          %v1537 = vpack.c.b16 %v1519, %v1518
          %v1538 = vpack.c.b16 %v1521, %v1520
          %v1539 = vpack.c.b16 %v1523, %v1522
          %1556 = vmatpush.bf16.msra.mxu0 %v1531
          %1557 = vmatpush.bf16.msra.mxu0 %v1530
          %1558 = vmatpush.bf16.msra.mxu0 %v1529
          %1559 = vmatpush.bf16.msra.mxu0 %v1528
          %1560 = vmatpush.bf16.msra.mxu0 %v1527
          %1561 = vmatpush.bf16.msra.mxu0 %v1526
          %1562 = vmatpush.bf16.msra.mxu0 %v1525
          %1563 = vmatpush.bf16.msra.mxu0 %v1524
          %1564 = vmatmul.bf16.gmra.mxu0 %v1422
          %v1565 = vpop.f32.mrf.mxu0
          %v1566 = vadd.f32 %v1458, %v1565
          %v1567 = vpop.f32.mrf.mxu0
          %1568 = vdwg.mxu0
          %1569 = vmatpush.bf16.msra.mxu0 %v1539
          %1570 = vmatpush.bf16.msra.mxu0 %v1538
          %1571 = vmatpush.bf16.msra.mxu0 %v1537
          %1572 = vmatpush.bf16.msra.mxu0 %v1536
          %1573 = vmatpush.bf16.msra.mxu0 %v1535
          %1574 = vmatpush.bf16.msra.mxu0 %v1534
          %1575 = vmatpush.bf16.msra.mxu0 %v1533
          %1576 = vmatpush.bf16.msra.mxu0 %v1532
          %1577 = vmatmul.bf16.gmra.mxu0 %v1423
          %v1578 = vpop.f32.mrf.mxu0
          %v1579 = vadd.f32 %v1566, %v1578
          %v1580 = vpop.f32.mrf.mxu0
          %1581 = vdwg.mxu0
          %vm1582 = vcmask 74752
          %v1583 = vsel %vm1582, %v1579, -inf
          %1584 = vmax.xlane.f32.xlu0 %v1583
          %v1585 = vpop.xlane.xlu0 %1584
          %v1586 = vsub.f32 %v1579, %v1585
          %v1587 = vmul.f32 %v1586, 1.442695
          %v1588 = vpow.pop %v1587
          %v1589 = vsel %vm1582, %v1588, 0.0
          %1590 = vadd.xlane.f32.xlu0 %v1589
          %v1591 = vpop.xlane.xlu0 %1590
          %v1592 = vlog2.pop %v1591
          %v1593 = vmul.f32 %v1592, 0.6931472
          %v1594 = vsub.f32 %v1586, %v1593
          %1595 = vst.msk [vmem:[#allocation3] sm:$0x3] %vm1582, %v1594
        $region48: #{cnn_forward.5} parent=39 // pred_fallthru
          _
        // Predicated region
        $region49: #{cnn_forward.5} parent=39 // pred_check
          %p1596 = pneg %p164
        $region50: #{cnn_forward.5} parent=39 // pred_check_branch
          %1598 = sbr.rel (%p1596) target = $region52
        $region51: #{cnn_forward.5} parent=39 // pred_region
          %1600 = vsyncadd [#allocation4], 0
          %s1601 = smul.addr %s21, 2
          %s1602 = scalar_lea.hbm %s5, %s1601
          %s1604 = sshll.u32 [#allocation3], 4
          %s1605 = int_to_ptr.vmem [resolvable:$true] %s1604
          %s1606 = sshll.u32 %s1602, 4
          %s1607 = int_to_ptr.hbm [resolvable:$true] %s1606
          %1609 = dma.vmem_to_hbm [thread:$0]  %s1605, 32, %s1607, [#allocation4]
        $region52: #{cnn_forward.5} parent=39 // pred_fallthru
          _
        // Predicated region
        $region53: #{cnn_forward.5} parent=39 // pred_check
          %p1610 = pneg %p164
        $region54: #{cnn_forward.5} parent=39 // pred_check_branch
          %1612 = sbr.rel (%p1610) target = $region56
        $region55: #{cnn_forward.5} parent=39 // pred_region
          %1614 = dma.done [#allocation4], 32
        $region56: #{cnn_forward.5} parent=39 // pred_fallthru
          _
      $region40: #{cnn_forward.5} parent=5 // pred_fallthru
        _
      %p1615 = scmp.le.s32.totalorder 2, %s12
      // Predicated region
      $region57: #{cnn_forward.5} parent=5 // pred_check
        %p1616 = pneg %p1615
      $region58: #{cnn_forward.5} parent=5 // pred_check_branch
        %1618 = sbr.rel (%p1616) target = $region60
      $region59: #{cnn_forward.5} parent=5 // pred_region
        %s1619 = ssub.s32 %s12, 2
      $region60: #{cnn_forward.5} parent=5 // pred_fallthru
        _
    $region6: #{cnn_forward.5} parent=1 // loop_footer
      %s16 = sadd.s32 1, %s12
    $region7: #{cnn_forward.5} parent=1 // loop_footer_branch
      %11 = sbr.rel target = $region3
    $region8: #{cnn_forward.5} parent=1 // loop_exit
      _
    %1620 = vsyncpa [#allocation4], 1
    %s1621 = scalar_lea.sflag [#allocation4], 1
    %1622 = vsyncpa %s1621, 1

// kernel: cnn_forward.4
$region0: #{cnn_forward.4}
  #allocation0 [shape = 'u32[]', space=smem, size = 0x4, offset = 0x4, fixed_abs, tag = 'smem constant byte address 0x4 - core index']
  #allocation1 [shape = 'u32[72,128]{1,0:T(1,128)}', space=vmem, size = 0x9000, scoped, tag = 'internal scratch']
  %s0 = inlined_call_operand.vmem [shape: bf16[288,288], index: 0, kind: input, shape index: {}]
  %s1 = inlined_call_operand.vmem [shape: bf16[288,288], index: 1, kind: input, shape index: {}]
  %s2 = inlined_call_operand.vmem [shape: bf16[288,288], index: 2, kind: input, shape index: {}]
  %s3 = inlined_call_operand.vmem [shape: bf16[288,288], index: 3, kind: input, shape index: {}]
  %s4 = inlined_call_operand.vmem [shape: bf16[288,64], index: 4, kind: input, shape index: {}]
  %s5 = inlined_call_operand.vmem [shape: f32[1,64], index: 5, kind: input, shape index: {}]
  %s6 = inlined_call_operand.vmem [shape: bf16[288,64], index: 6, kind: output, shape index: {}]
  %s7 = sld [smem:[#allocation0]]
  $region34: #{cnn_forward.4} parent=0
    _
  %s9 = ssub.s32 1, %s7
  %s10 = scalar_select 0, %s9, %s7
  // Predicated region
  $region2: #{cnn_forward.4} parent=0 // pred_check
    _
  $region3: #{cnn_forward.4} parent=0 // pred_check_branch
    %12 = sbr.rel (0) target = $region5
  $region4: #{cnn_forward.4} parent=0 // pred_region
    _
  $region5: #{cnn_forward.4} parent=0 // pred_fallthru
    _
  // Predicated region
  $region6: #{cnn_forward.4} parent=0 // pred_check
    _
  $region7: #{cnn_forward.4} parent=0 // pred_check_branch
    %14 = sbr.rel (0) target = $region9
  $region8: #{cnn_forward.4} parent=0 // pred_region
    _
  $region9: #{cnn_forward.4} parent=0 // pred_fallthru
    _
  // Predicated region
  $region10: #{cnn_forward.4} parent=0 // pred_check
    _
  $region11: #{cnn_forward.4} parent=0 // pred_check_branch
    %16 = sbr.rel (0) target = $region13
  $region12: #{cnn_forward.4} parent=0 // pred_region
    _
  $region13: #{cnn_forward.4} parent=0 // pred_fallthru
    _
  // Predicated region
  $region14: #{cnn_forward.4} parent=0 // pred_check
    _
  $region15: #{cnn_forward.4} parent=0 // pred_check_branch
    %18 = sbr.rel (0) target = $region17
  $region16: #{cnn_forward.4} parent=0 // pred_region
    _
  $region17: #{cnn_forward.4} parent=0 // pred_fallthru
    _
  // Predicated region
  $region18: #{cnn_forward.4} parent=0 // pred_check
    _
  $region19: #{cnn_forward.4} parent=0 // pred_check_branch
    %20 = sbr.rel (0) target = $region21
  $region20: #{cnn_forward.4} parent=0 // pred_region
    _
  $region21: #{cnn_forward.4} parent=0 // pred_fallthru
    _
  // Predicated region
  $region22: #{cnn_forward.4} parent=0 // pred_check
    _
  $region23: #{cnn_forward.4} parent=0 // pred_check_branch
    %22 = sbr.rel (0) target = $region25
  $region24: #{cnn_forward.4} parent=0 // pred_region
    _
  $region25: #{cnn_forward.4} parent=0 // pred_fallthru
    _
  %v24 = vld [vmem:[%s4] sm:$0xf]
  %v25 = vld [vmem:[%s4 + $0x4] sm:$0xf]
  %v26 = vld [vmem:[%s4 + $0x8] sm:$0xf]
  %v27 = vld [vmem:[%s4 + $0xc] sm:$0xf]
  %v28 = vld [vmem:[%s4 + $0x10] sm:$0xf]
  %v29 = vld [vmem:[%s4 + $0x14] sm:$0xf]
  %v30 = vld [vmem:[%s4 + $0x18] sm:$0xf]
  %v31 = vld [vmem:[%s4 + $0x1c] sm:$0xf]
  %v32 = vld [vmem:[%s4 + $0x20] sm:$0xf]
  %v33 = vld [vmem:[%s4 + $0x24] sm:$0xf]
  %v34 = vld [vmem:[%s4 + $0x28] sm:$0xf]
  %v35 = vld [vmem:[%s4 + $0x2c] sm:$0xf]
  %v36 = vld [vmem:[%s4 + $0x30] sm:$0xf]
  %v37 = vld [vmem:[%s4 + $0x34] sm:$0xf]
  %v38 = vld [vmem:[%s4 + $0x38] sm:$0xf]
  %v39 = vld [vmem:[%s4 + $0x3c] sm:$0xf]
  %v40 = vld [vmem:[%s4 + $0x40] sm:$0xf]
  %v41 = vld [vmem:[%s4 + $0x44] sm:$0xf]
  %v42 = vld [vmem:[%s4 + $0x48] sm:$0xf]
  %v43 = vld [vmem:[%s4 + $0x4c] sm:$0xf]
  %v44 = vld [vmem:[%s4 + $0x50] sm:$0xf]
  %v45 = vld [vmem:[%s4 + $0x54] sm:$0xf]
  %v46 = vld [vmem:[%s4 + $0x58] sm:$0xf]
  %v47 = vld [vmem:[%s4 + $0x5c] sm:$0xf]
  %v48 = vld [vmem:[%s4 + $0x60] sm:$0xf]
  %v49 = vld [vmem:[%s4 + $0x64] sm:$0xf]
  %v50 = vld [vmem:[%s4 + $0x68] sm:$0xf]
  %v51 = vld [vmem:[%s4 + $0x6c] sm:$0xf]
  %v52 = vld [vmem:[%s4 + $0x70] sm:$0xf]
  %v53 = vld [vmem:[%s4 + $0x74] sm:$0xf]
  %v54 = vld [vmem:[%s4 + $0x78] sm:$0xf]
  %v55 = vld [vmem:[%s4 + $0x7c] sm:$0xf]
  %v56 = vld [vmem:[%s4 + $0x80] sm:$0xf]
  %v57 = vld [vmem:[%s4 + $0x84] sm:$0xf]
  %v58 = vld [vmem:[%s4 + $0x88] sm:$0xf]
  %v59 = vld [vmem:[%s4 + $0x8c] sm:$0xf]
  %v60 = vld [vmem:[%s0] sm:$0xff]
  %v61 = vld [vmem:[%s0 + $0x8] sm:$0xf]
  %v62 = vld [vmem:[%s0 + $0xc] sm:$0xff]
  %v63 = vld [vmem:[%s0 + $0x14] sm:$0xf]
  %v64 = vld [vmem:[%s0 + $0x18] sm:$0xff]
  %v65 = vld [vmem:[%s0 + $0x20] sm:$0xf]
  %v66 = vld [vmem:[%s0 + $0x24] sm:$0xff]
  %v67 = vld [vmem:[%s0 + $0x2c] sm:$0xf]
  %v68 = vld [vmem:[%s0 + $0x30] sm:$0xff]
  %v69 = vld [vmem:[%s0 + $0x38] sm:$0xf]
  %v70 = vld [vmem:[%s0 + $0x3c] sm:$0xff]
  %v71 = vld [vmem:[%s0 + $0x44] sm:$0xf]
  %v72 = vld [vmem:[%s0 + $0x48] sm:$0xff]
  %v73 = vld [vmem:[%s0 + $0x50] sm:$0xf]
  %v74 = vld [vmem:[%s0 + $0x54] sm:$0xff]
  %v75 = vld [vmem:[%s0 + $0x5c] sm:$0xf]
  %v76 = vld [vmem:[%s0 + $0x60] sm:$0xff]
  %v77 = vld [vmem:[%s0 + $0x68] sm:$0xf]
  %v78 = vld [vmem:[%s0 + $0x6c] sm:$0xff]
  %v79 = vld [vmem:[%s0 + $0x74] sm:$0xf]
  %v80 = vld [vmem:[%s0 + $0x78] sm:$0xff]
  %v81 = vld [vmem:[%s0 + $0x80] sm:$0xf]
  %v82 = vld [vmem:[%s0 + $0x84] sm:$0xff]
  %v83 = vld [vmem:[%s0 + $0x8c] sm:$0xf]
  %v84 = vld [vmem:[%s0 + $0x90] sm:$0xff]
  %v85 = vld [vmem:[%s0 + $0x98] sm:$0xf]
  %v86 = vld [vmem:[%s0 + $0x9c] sm:$0xff]
  %v87 = vld [vmem:[%s0 + $0xa4] sm:$0xf]
  %v88 = vld [vmem:[%s0 + $0xa8] sm:$0xff]
  %v89 = vld [vmem:[%s0 + $0xb0] sm:$0xf]
  %v90 = vld [vmem:[%s0 + $0xb4] sm:$0xff]
  %v91 = vld [vmem:[%s0 + $0xbc] sm:$0xf]
  %v92 = vld [vmem:[%s0 + $0xc0] sm:$0xff]
  %v93 = vld [vmem:[%s0 + $0xc8] sm:$0xf]
  %v94 = vld [vmem:[%s0 + $0xcc] sm:$0xff]
  %v95 = vld [vmem:[%s0 + $0xd4] sm:$0xf]
  %v96 = vld [vmem:[%s0 + $0xd8] sm:$0xff]
  %v97 = vld [vmem:[%s0 + $0xe0] sm:$0xf]
  %v98 = vld [vmem:[%s0 + $0xe4] sm:$0xff]
  %v99 = vld [vmem:[%s0 + $0xec] sm:$0xf]
  %v100 = vld [vmem:[%s0 + $0xf0] sm:$0xff]
  %v101 = vld [vmem:[%s0 + $0xf8] sm:$0xf]
  %v102 = vld [vmem:[%s0 + $0xfc] sm:$0xff]
  %v103 = vld [vmem:[%s0 + $0x104] sm:$0xf]
  %v104 = vld [vmem:[%s0 + $0x108] sm:$0xff]
  %v105 = vld [vmem:[%s0 + $0x110] sm:$0xf]
  %v106 = vld [vmem:[%s0 + $0x114] sm:$0xff]
  %v107 = vld [vmem:[%s0 + $0x11c] sm:$0xf]
  %v108 = vld [vmem:[%s0 + $0x120] sm:$0xff]
  %v109 = vld [vmem:[%s0 + $0x128] sm:$0xf]
  %v110 = vld [vmem:[%s0 + $0x12c] sm:$0xff]
  %v111 = vld [vmem:[%s0 + $0x134] sm:$0xf]
  %v112 = vld [vmem:[%s0 + $0x138] sm:$0xff]
  %v113 = vld [vmem:[%s0 + $0x140] sm:$0xf]
  %v114 = vld [vmem:[%s0 + $0x144] sm:$0xff]
  %v115 = vld [vmem:[%s0 + $0x14c] sm:$0xf]
  %v116 = vld [vmem:[%s0 + $0x150] sm:$0xff]
  %v117 = vld [vmem:[%s0 + $0x158] sm:$0xf]
  %v118 = vld [vmem:[%s0 + $0x15c] sm:$0xff]
  %v119 = vld [vmem:[%s0 + $0x164] sm:$0xf]
  %v120 = vld [vmem:[%s0 + $0x168] sm:$0xff]
  %v121 = vld [vmem:[%s0 + $0x170] sm:$0xf]
  %v122 = vld [vmem:[%s0 + $0x174] sm:$0xff]
  %v123 = vld [vmem:[%s0 + $0x17c] sm:$0xf]
  %v124 = vld [vmem:[%s0 + $0x180] sm:$0xff]
  %v125 = vld [vmem:[%s0 + $0x188] sm:$0xf]
  %v126 = vld [vmem:[%s0 + $0x18c] sm:$0xff]
  %v127 = vld [vmem:[%s0 + $0x194] sm:$0xf]
  %v128 = vld [vmem:[%s0 + $0x198] sm:$0xff]
  %v129 = vld [vmem:[%s0 + $0x1a0] sm:$0xf]
  %v130 = vld [vmem:[%s0 + $0x1a4] sm:$0xff]
  %v131 = vld [vmem:[%s0 + $0x1ac] sm:$0xf]
  %v204 = vunpack.c.l.b16 %v60
  %v205 = vunpack.c.h.b16 %v60
  %v206 = vunpack.c.l.b16 %v61
  %v207 = vunpack.c.l.b16 %v62
  %v208 = vunpack.c.h.b16 %v62
  %v209 = vunpack.c.l.b16 %v63
  %v210 = vunpack.c.l.b16 %v64
  %v211 = vunpack.c.h.b16 %v64
  %v212 = vunpack.c.l.b16 %v65
  %v213 = vunpack.c.l.b16 %v66
  %v214 = vunpack.c.h.b16 %v66
  %v215 = vunpack.c.l.b16 %v67
  %v216 = vunpack.c.l.b16 %v68
  %v217 = vunpack.c.h.b16 %v68
  %v218 = vunpack.c.l.b16 %v69
  %v219 = vunpack.c.l.b16 %v70
  %v220 = vunpack.c.h.b16 %v70
  %v221 = vunpack.c.l.b16 %v71
  %v222 = vunpack.c.l.b16 %v72
  %v223 = vunpack.c.h.b16 %v72
  %v224 = vunpack.c.l.b16 %v73
  %v225 = vunpack.c.l.b16 %v74
  %v226 = vunpack.c.h.b16 %v74
  %v227 = vunpack.c.l.b16 %v75
  %v228 = vunpack.c.l.b16 %v76
  %v229 = vunpack.c.h.b16 %v76
  %v230 = vunpack.c.l.b16 %v77
  %v231 = vunpack.c.l.b16 %v78
  %v232 = vunpack.c.h.b16 %v78
  %v233 = vunpack.c.l.b16 %v79
  %v234 = vunpack.c.l.b16 %v80
  %v235 = vunpack.c.h.b16 %v80
  %v236 = vunpack.c.l.b16 %v81
  %v237 = vunpack.c.l.b16 %v82
  %v238 = vunpack.c.h.b16 %v82
  %v239 = vunpack.c.l.b16 %v83
  %v240 = vunpack.c.l.b16 %v84
  %v241 = vunpack.c.h.b16 %v84
  %v242 = vunpack.c.l.b16 %v85
  %v243 = vunpack.c.l.b16 %v86
  %v244 = vunpack.c.h.b16 %v86
  %v245 = vunpack.c.l.b16 %v87
  %v246 = vunpack.c.l.b16 %v88
  %v247 = vunpack.c.h.b16 %v88
  %v248 = vunpack.c.l.b16 %v89
  %v249 = vunpack.c.l.b16 %v90
  %v250 = vunpack.c.h.b16 %v90
  %v251 = vunpack.c.l.b16 %v91
  %v252 = vunpack.c.l.b16 %v92
  %v253 = vunpack.c.h.b16 %v92
  %v254 = vunpack.c.l.b16 %v93
  %v255 = vunpack.c.l.b16 %v94
  %v256 = vunpack.c.h.b16 %v94
  %v257 = vunpack.c.l.b16 %v95
  %v258 = vunpack.c.l.b16 %v96
  %v259 = vunpack.c.h.b16 %v96
  %v260 = vunpack.c.l.b16 %v97
  %v261 = vunpack.c.l.b16 %v98
  %v262 = vunpack.c.h.b16 %v98
  %v263 = vunpack.c.l.b16 %v99
  %v264 = vunpack.c.l.b16 %v100
  %v265 = vunpack.c.h.b16 %v100
  %v266 = vunpack.c.l.b16 %v101
  %v267 = vunpack.c.l.b16 %v102
  %v268 = vunpack.c.h.b16 %v102
  %v269 = vunpack.c.l.b16 %v103
  %v270 = vunpack.c.l.b16 %v104
  %v271 = vunpack.c.h.b16 %v104
  %v272 = vunpack.c.l.b16 %v105
  %v273 = vunpack.c.l.b16 %v106
  %v274 = vunpack.c.h.b16 %v106
  %v275 = vunpack.c.l.b16 %v107
  %v276 = vunpack.c.l.b16 %v108
  %v277 = vunpack.c.h.b16 %v108
  %v278 = vunpack.c.l.b16 %v109
  %v279 = vunpack.c.l.b16 %v110
  %v280 = vunpack.c.h.b16 %v110
  %v281 = vunpack.c.l.b16 %v111
  %v282 = vunpack.c.l.b16 %v112
  %v283 = vunpack.c.h.b16 %v112
  %v284 = vunpack.c.l.b16 %v113
  %v285 = vunpack.c.l.b16 %v114
  %v286 = vunpack.c.h.b16 %v114
  %v287 = vunpack.c.l.b16 %v115
  %v288 = vunpack.c.l.b16 %v116
  %v289 = vunpack.c.h.b16 %v116
  %v290 = vunpack.c.l.b16 %v117
  %v291 = vunpack.c.l.b16 %v118
  %v292 = vunpack.c.h.b16 %v118
  %v293 = vunpack.c.l.b16 %v119
  %v294 = vunpack.c.l.b16 %v120
  %v295 = vunpack.c.h.b16 %v120
  %v296 = vunpack.c.l.b16 %v121
  %v297 = vunpack.c.l.b16 %v122
  %v298 = vunpack.c.h.b16 %v122
  %v299 = vunpack.c.l.b16 %v123
  %v300 = vunpack.c.l.b16 %v124
  %v301 = vunpack.c.h.b16 %v124
  %v302 = vunpack.c.l.b16 %v125
  %v303 = vunpack.c.l.b16 %v126
  %v304 = vunpack.c.h.b16 %v126
  %v305 = vunpack.c.l.b16 %v127
  %v306 = vunpack.c.l.b16 %v128
  %v307 = vunpack.c.h.b16 %v128
  %v308 = vunpack.c.l.b16 %v129
  %v309 = vunpack.c.l.b16 %v130
  %v310 = vunpack.c.h.b16 %v130
  %v311 = vunpack.c.l.b16 %v131
  %v312 = vpack.c.b16 %v207, %v204
  %v313 = vpack.c.b16 %v208, %v205
  %v314 = vpack.c.b16 %v209, %v206
  %v315 = vpack.c.b16 %v213, %v210
  %v316 = vpack.c.b16 %v214, %v211
  %v317 = vpack.c.b16 %v215, %v212
  %v318 = vpack.c.b16 %v219, %v216
  %v319 = vpack.c.b16 %v220, %v217
  %v320 = vpack.c.b16 %v221, %v218
  %v321 = vpack.c.b16 %v225, %v222
  %v322 = vpack.c.b16 %v226, %v223
  %v323 = vpack.c.b16 %v227, %v224
  %v324 = vpack.c.b16 %v231, %v228
  %v325 = vpack.c.b16 %v232, %v229
  %v326 = vpack.c.b16 %v233, %v230
  %v327 = vpack.c.b16 %v237, %v234
  %v328 = vpack.c.b16 %v238, %v235
  %v329 = vpack.c.b16 %v239, %v236
  %v330 = vpack.c.b16 %v243, %v240
  %v331 = vpack.c.b16 %v244, %v241
  %v332 = vpack.c.b16 %v245, %v242
  %v333 = vpack.c.b16 %v249, %v246
  %v334 = vpack.c.b16 %v250, %v247
  %v335 = vpack.c.b16 %v251, %v248
  %v336 = vpack.c.b16 %v255, %v252
  %v337 = vpack.c.b16 %v256, %v253
  %v338 = vpack.c.b16 %v257, %v254
  %v339 = vpack.c.b16 %v261, %v258
  %v340 = vpack.c.b16 %v262, %v259
  %v341 = vpack.c.b16 %v263, %v260
  %v342 = vpack.c.b16 %v267, %v264
  %v343 = vpack.c.b16 %v268, %v265
  %v344 = vpack.c.b16 %v269, %v266
  %v345 = vpack.c.b16 %v273, %v270
  %v346 = vpack.c.b16 %v274, %v271
  %v347 = vpack.c.b16 %v275, %v272
  %v348 = vpack.c.b16 %v279, %v276
  %v349 = vpack.c.b16 %v280, %v277
  %v350 = vpack.c.b16 %v281, %v278
  %v351 = vpack.c.b16 %v285, %v282
  %v352 = vpack.c.b16 %v286, %v283
  %v353 = vpack.c.b16 %v287, %v284
  %v354 = vpack.c.b16 %v291, %v288
  %v355 = vpack.c.b16 %v292, %v289
  %v356 = vpack.c.b16 %v293, %v290
  %v357 = vpack.c.b16 %v297, %v294
  %v358 = vpack.c.b16 %v298, %v295
  %v359 = vpack.c.b16 %v299, %v296
  %v360 = vpack.c.b16 %v303, %v300
  %v361 = vpack.c.b16 %v304, %v301
  %v362 = vpack.c.b16 %v305, %v302
  %v363 = vpack.c.b16 %v309, %v306
  %v364 = vpack.c.b16 %v310, %v307
  %v365 = vpack.c.b16 %v311, %v308
  %v438 = vunpack.c.l.b16 %v24
  %v439 = vunpack.c.l.b16 %v25
  %v440 = vunpack.c.l.b16 %v26
  %v441 = vunpack.c.l.b16 %v27
  %v442 = vunpack.c.l.b16 %v28
  %v443 = vunpack.c.l.b16 %v29
  %v444 = vunpack.c.l.b16 %v30
  %v445 = vunpack.c.l.b16 %v31
  %v446 = vunpack.c.l.b16 %v32
  %v447 = vunpack.c.l.b16 %v33
  %v448 = vunpack.c.l.b16 %v34
  %v449 = vunpack.c.l.b16 %v35
  %v450 = vunpack.c.l.b16 %v36
  %v451 = vunpack.c.l.b16 %v37
  %v452 = vunpack.c.l.b16 %v38
  %v453 = vunpack.c.l.b16 %v39
  %v454 = vunpack.c.l.b16 %v40
  %v455 = vunpack.c.l.b16 %v41
  %v456 = vunpack.c.l.b16 %v42
  %v457 = vunpack.c.l.b16 %v43
  %v458 = vunpack.c.l.b16 %v44
  %v459 = vunpack.c.l.b16 %v45
  %v460 = vunpack.c.l.b16 %v46
  %v461 = vunpack.c.l.b16 %v47
  %v462 = vunpack.c.l.b16 %v48
  %v463 = vunpack.c.l.b16 %v49
  %v464 = vunpack.c.l.b16 %v50
  %v465 = vunpack.c.l.b16 %v51
  %v466 = vunpack.c.l.b16 %v52
  %v467 = vunpack.c.l.b16 %v53
  %v468 = vunpack.c.l.b16 %v54
  %v469 = vunpack.c.l.b16 %v55
  %v470 = vunpack.c.l.b16 %v56
  %v471 = vunpack.c.l.b16 %v57
  %v472 = vunpack.c.l.b16 %v58
  %v473 = vunpack.c.l.b16 %v59
  %v474 = vpack.c.b16 %v439, %v438
  %v475 = vpack.c.b16 %v441, %v440
  %v476 = vpack.c.b16 %v443, %v442
  %v477 = vpack.c.b16 %v445, %v444
  %v478 = vpack.c.b16 %v447, %v446
  %v479 = vpack.c.b16 %v449, %v448
  %v480 = vpack.c.b16 %v451, %v450
  %v481 = vpack.c.b16 %v453, %v452
  %v482 = vpack.c.b16 %v455, %v454
  %v483 = vpack.c.b16 %v457, %v456
  %v484 = vpack.c.b16 %v459, %v458
  %v485 = vpack.c.b16 %v461, %v460
  %v486 = vpack.c.b16 %v463, %v462
  %v487 = vpack.c.b16 %v465, %v464
  %v488 = vpack.c.b16 %v467, %v466
  %v489 = vpack.c.b16 %v469, %v468
  %v490 = vpack.c.b16 %v471, %v470
  %v491 = vpack.c.b16 %v473, %v472
  %vm510 = vcmask 261120
  %v512 = vsel %vm510, %v314, 0
  %v515 = vsel %vm510, %v317, 0
  %v518 = vsel %vm510, %v320, 0
  %v521 = vsel %vm510, %v323, 0
  %v524 = vsel %vm510, %v326, 0
  %v527 = vsel %vm510, %v329, 0
  %v530 = vsel %vm510, %v332, 0
  %v533 = vsel %vm510, %v335, 0
  %v536 = vsel %vm510, %v338, 0
  %v539 = vsel %vm510, %v341, 0
  %v542 = vsel %vm510, %v344, 0
  %v545 = vsel %vm510, %v347, 0
  %v548 = vsel %vm510, %v350, 0
  %v551 = vsel %vm510, %v353, 0
  %v554 = vsel %vm510, %v356, 0
  %v557 = vsel %vm510, %v359, 0
  %v560 = vsel %vm510, %v362, 0
  %v563 = vsel %vm510, %v365, 0
  %565 = vmatpush.bf16.msra.mxu0 %v481
  %566 = vmatpush.bf16.msra.mxu0 %v480
  %567 = vmatpush.bf16.msra.mxu0 %v479
  %568 = vmatpush.bf16.msra.mxu0 %v478
  %569 = vmatpush.bf16.msra.mxu0 %v477
  %570 = vmatpush.bf16.msra.mxu0 %v476
  %571 = vmatpush.bf16.msra.mxu0 %v475
  %572 = vmatpush.bf16.msra.mxu0 %v474
  %573 = vmatmul.bf16.gmra.mxu0 %v312
  %v574 = vpop.f32.mrf.mxu0
  %v575 = vadd.f32 0.0, %v574
  %v576 = vpop.f32.mrf.mxu0
  %v577 = vadd.f32 0.0, %v576
  %578 = vmatmul.bf16.gmra.mxu0 %v315
  %v579 = vpop.f32.mrf.mxu0
  %v580 = vadd.f32 0.0, %v579
  %v581 = vpop.f32.mrf.mxu0
  %v582 = vadd.f32 0.0, %v581
  %583 = vmatmul.bf16.gmra.mxu0 %v318
  %v584 = vpop.f32.mrf.mxu0
  %v585 = vadd.f32 0.0, %v584
  %v586 = vpop.f32.mrf.mxu0
  %v587 = vadd.f32 0.0, %v586
  %588 = vmatmul.bf16.gmra.mxu0 %v321
  %v589 = vpop.f32.mrf.mxu0
  %v590 = vadd.f32 0.0, %v589
  %v591 = vpop.f32.mrf.mxu0
  %v592 = vadd.f32 0.0, %v591
  %593 = vmatmul.bf16.gmra.mxu0 %v324
  %v594 = vpop.f32.mrf.mxu0
  %v595 = vadd.f32 0.0, %v594
  %v596 = vpop.f32.mrf.mxu0
  %v597 = vadd.f32 0.0, %v596
  %598 = vmatmul.bf16.gmra.mxu0 %v327
  %v599 = vpop.f32.mrf.mxu0
  %v600 = vadd.f32 0.0, %v599
  %v601 = vpop.f32.mrf.mxu0
  %v602 = vadd.f32 0.0, %v601
  %603 = vmatmul.bf16.gmra.mxu0 %v330
  %v604 = vpop.f32.mrf.mxu0
  %v605 = vadd.f32 0.0, %v604
  %v606 = vpop.f32.mrf.mxu0
  %v607 = vadd.f32 0.0, %v606
  %608 = vmatmul.bf16.gmra.mxu0 %v333
  %v609 = vpop.f32.mrf.mxu0
  %v610 = vadd.f32 0.0, %v609
  %v611 = vpop.f32.mrf.mxu0
  %v612 = vadd.f32 0.0, %v611
  %613 = vmatmul.bf16.gmra.mxu0 %v336
  %v614 = vpop.f32.mrf.mxu0
  %v615 = vadd.f32 0.0, %v614
  %v616 = vpop.f32.mrf.mxu0
  %v617 = vadd.f32 0.0, %v616
  %618 = vmatmul.bf16.gmra.mxu0 %v339
  %v619 = vpop.f32.mrf.mxu0
  %v620 = vadd.f32 0.0, %v619
  %v621 = vpop.f32.mrf.mxu0
  %v622 = vadd.f32 0.0, %v621
  %623 = vmatmul.bf16.gmra.mxu0 %v342
  %v624 = vpop.f32.mrf.mxu0
  %v625 = vadd.f32 0.0, %v624
  %v626 = vpop.f32.mrf.mxu0
  %v627 = vadd.f32 0.0, %v626
  %628 = vmatmul.bf16.gmra.mxu0 %v345
  %v629 = vpop.f32.mrf.mxu0
  %v630 = vadd.f32 0.0, %v629
  %v631 = vpop.f32.mrf.mxu0
  %v632 = vadd.f32 0.0, %v631
  %633 = vmatmul.bf16.gmra.mxu0 %v348
  %v634 = vpop.f32.mrf.mxu0
  %v635 = vadd.f32 0.0, %v634
  %v636 = vpop.f32.mrf.mxu0
  %v637 = vadd.f32 0.0, %v636
  %638 = vmatmul.bf16.gmra.mxu0 %v351
  %v639 = vpop.f32.mrf.mxu0
  %v640 = vadd.f32 0.0, %v639
  %v641 = vpop.f32.mrf.mxu0
  %v642 = vadd.f32 0.0, %v641
  %643 = vmatmul.bf16.gmra.mxu0 %v354
  %v644 = vpop.f32.mrf.mxu0
  %v645 = vadd.f32 0.0, %v644
  %v646 = vpop.f32.mrf.mxu0
  %v647 = vadd.f32 0.0, %v646
  %648 = vmatmul.bf16.gmra.mxu0 %v357
  %v649 = vpop.f32.mrf.mxu0
  %v650 = vadd.f32 0.0, %v649
  %v651 = vpop.f32.mrf.mxu0
  %v652 = vadd.f32 0.0, %v651
  %653 = vmatmul.bf16.gmra.mxu0 %v360
  %v654 = vpop.f32.mrf.mxu0
  %v655 = vadd.f32 0.0, %v654
  %v656 = vpop.f32.mrf.mxu0
  %v657 = vadd.f32 0.0, %v656
  %658 = vmatmul.bf16.gmra.mxu0 %v363
  %v659 = vpop.f32.mrf.mxu0
  %v660 = vadd.f32 0.0, %v659
  %v661 = vpop.f32.mrf.mxu0
  %v662 = vadd.f32 0.0, %v661
  %663 = vdwg.mxu0
  %664 = vmatpush.bf16.msra.mxu0 %v489
  %665 = vmatpush.bf16.msra.mxu0 %v488
  %666 = vmatpush.bf16.msra.mxu0 %v487
  %667 = vmatpush.bf16.msra.mxu0 %v486
  %668 = vmatpush.bf16.msra.mxu0 %v485
  %669 = vmatpush.bf16.msra.mxu0 %v484
  %670 = vmatpush.bf16.msra.mxu0 %v483
  %671 = vmatpush.bf16.msra.mxu0 %v482
  %672 = vmatmul.bf16.gmra.mxu0 %v313
  %v673 = vpop.f32.mrf.mxu0
  %v674 = vadd.f32 %v575, %v673
  %v675 = vpop.f32.mrf.mxu0
  %v676 = vadd.f32 %v577, %v675
  %677 = vmatmul.bf16.gmra.mxu0 %v316
  %v678 = vpop.f32.mrf.mxu0
  %v679 = vadd.f32 %v580, %v678
  %v680 = vpop.f32.mrf.mxu0
  %v681 = vadd.f32 %v582, %v680
  %682 = vmatmul.bf16.gmra.mxu0 %v319
  %v683 = vpop.f32.mrf.mxu0
  %v684 = vadd.f32 %v585, %v683
  %v685 = vpop.f32.mrf.mxu0
  %v686 = vadd.f32 %v587, %v685
  %687 = vmatmul.bf16.gmra.mxu0 %v322
  %v688 = vpop.f32.mrf.mxu0
  %v689 = vadd.f32 %v590, %v688
  %v690 = vpop.f32.mrf.mxu0
  %v691 = vadd.f32 %v592, %v690
  %692 = vmatmul.bf16.gmra.mxu0 %v325
  %v693 = vpop.f32.mrf.mxu0
  %v694 = vadd.f32 %v595, %v693
  %v695 = vpop.f32.mrf.mxu0
  %v696 = vadd.f32 %v597, %v695
  %697 = vmatmul.bf16.gmra.mxu0 %v328
  %v698 = vpop.f32.mrf.mxu0
  %v699 = vadd.f32 %v600, %v698
  %v700 = vpop.f32.mrf.mxu0
  %v701 = vadd.f32 %v602, %v700
  %702 = vmatmul.bf16.gmra.mxu0 %v331
  %v703 = vpop.f32.mrf.mxu0
  %v704 = vadd.f32 %v605, %v703
  %v705 = vpop.f32.mrf.mxu0
  %v706 = vadd.f32 %v607, %v705
  %707 = vmatmul.bf16.gmra.mxu0 %v334
  %v708 = vpop.f32.mrf.mxu0
  %v709 = vadd.f32 %v610, %v708
  %v710 = vpop.f32.mrf.mxu0
  %v711 = vadd.f32 %v612, %v710
  %712 = vmatmul.bf16.gmra.mxu0 %v337
  %v713 = vpop.f32.mrf.mxu0
  %v714 = vadd.f32 %v615, %v713
  %v715 = vpop.f32.mrf.mxu0
  %v716 = vadd.f32 %v617, %v715
  %717 = vmatmul.bf16.gmra.mxu0 %v340
  %v718 = vpop.f32.mrf.mxu0
  %v719 = vadd.f32 %v620, %v718
  %v720 = vpop.f32.mrf.mxu0
  %v721 = vadd.f32 %v622, %v720
  %722 = vmatmul.bf16.gmra.mxu0 %v343
  %v723 = vpop.f32.mrf.mxu0
  %v724 = vadd.f32 %v625, %v723
  %v725 = vpop.f32.mrf.mxu0
  %v726 = vadd.f32 %v627, %v725
  %727 = vmatmul.bf16.gmra.mxu0 %v346
  %v728 = vpop.f32.mrf.mxu0
  %v729 = vadd.f32 %v630, %v728
  %v730 = vpop.f32.mrf.mxu0
  %v731 = vadd.f32 %v632, %v730
  %732 = vmatmul.bf16.gmra.mxu0 %v349
  %v733 = vpop.f32.mrf.mxu0
  %v734 = vadd.f32 %v635, %v733
  %v735 = vpop.f32.mrf.mxu0
  %v736 = vadd.f32 %v637, %v735
  %737 = vmatmul.bf16.gmra.mxu0 %v352
  %v738 = vpop.f32.mrf.mxu0
  %v739 = vadd.f32 %v640, %v738
  %v740 = vpop.f32.mrf.mxu0
  %v741 = vadd.f32 %v642, %v740
  %742 = vmatmul.bf16.gmra.mxu0 %v355
  %v743 = vpop.f32.mrf.mxu0
  %v744 = vadd.f32 %v645, %v743
  %v745 = vpop.f32.mrf.mxu0
  %v746 = vadd.f32 %v647, %v745
  %747 = vmatmul.bf16.gmra.mxu0 %v358
  %v748 = vpop.f32.mrf.mxu0
  %v749 = vadd.f32 %v650, %v748
  %v750 = vpop.f32.mrf.mxu0
  %v751 = vadd.f32 %v652, %v750
  %752 = vmatmul.bf16.gmra.mxu0 %v361
  %v753 = vpop.f32.mrf.mxu0
  %v754 = vadd.f32 %v655, %v753
  %v755 = vpop.f32.mrf.mxu0
  %v756 = vadd.f32 %v657, %v755
  %757 = vmatmul.bf16.gmra.mxu0 %v364
  %v758 = vpop.f32.mrf.mxu0
  %v759 = vadd.f32 %v660, %v758
  %v760 = vpop.f32.mrf.mxu0
  %v761 = vadd.f32 %v662, %v760
  %762 = vdwg.mxu0
  %763 = vmatpush.bf16.msra.mxu0 0
  %764 = vmatpush.bf16.msra.mxu0 0
  %765 = vmatpush.bf16.msra.mxu0 0
  %766 = vmatpush.bf16.msra.mxu0 0
  %767 = vmatpush.bf16.msra.mxu0 0
  %768 = vmatpush.bf16.msra.mxu0 0
  %769 = vmatpush.bf16.msra.mxu0 %v491
  %770 = vmatpush.bf16.msra.mxu0 %v490
  %771 = vmatmul.bf16.gmra.mxu0 %v512
  %v772 = vpop.f32.mrf.mxu0
  %v773 = vadd.f32 %v674, %v772
  %v774 = vpop.f32.mrf.mxu0
  %v775 = vadd.f32 %v676, %v774
  %776 = vmatmul.bf16.gmra.mxu0 %v515
  %v777 = vpop.f32.mrf.mxu0
  %v778 = vadd.f32 %v679, %v777
  %v779 = vpop.f32.mrf.mxu0
  %v780 = vadd.f32 %v681, %v779
  %781 = vmatmul.bf16.gmra.mxu0 %v518
  %v782 = vpop.f32.mrf.mxu0
  %v783 = vadd.f32 %v684, %v782
  %v784 = vpop.f32.mrf.mxu0
  %v785 = vadd.f32 %v686, %v784
  %786 = vmatmul.bf16.gmra.mxu0 %v521
  %v787 = vpop.f32.mrf.mxu0
  %v788 = vadd.f32 %v689, %v787
  %v789 = vpop.f32.mrf.mxu0
  %v790 = vadd.f32 %v691, %v789
  %791 = vmatmul.bf16.gmra.mxu0 %v524
  %v792 = vpop.f32.mrf.mxu0
  %v793 = vadd.f32 %v694, %v792
  %v794 = vpop.f32.mrf.mxu0
  %v795 = vadd.f32 %v696, %v794
  %796 = vmatmul.bf16.gmra.mxu0 %v527
  %v797 = vpop.f32.mrf.mxu0
  %v798 = vadd.f32 %v699, %v797
  %v799 = vpop.f32.mrf.mxu0
  %v800 = vadd.f32 %v701, %v799
  %801 = vmatmul.bf16.gmra.mxu0 %v530
  %v802 = vpop.f32.mrf.mxu0
  %v803 = vadd.f32 %v704, %v802
  %v804 = vpop.f32.mrf.mxu0
  %v805 = vadd.f32 %v706, %v804
  %806 = vmatmul.bf16.gmra.mxu0 %v533
  %v807 = vpop.f32.mrf.mxu0
  %v808 = vadd.f32 %v709, %v807
  %v809 = vpop.f32.mrf.mxu0
  %v810 = vadd.f32 %v711, %v809
  %811 = vmatmul.bf16.gmra.mxu0 %v536
  %v812 = vpop.f32.mrf.mxu0
  %v813 = vadd.f32 %v714, %v812
  %v814 = vpop.f32.mrf.mxu0
  %v815 = vadd.f32 %v716, %v814
  %816 = vmatmul.bf16.gmra.mxu0 %v539
  %v817 = vpop.f32.mrf.mxu0
  %v818 = vadd.f32 %v719, %v817
  %v819 = vpop.f32.mrf.mxu0
  %v820 = vadd.f32 %v721, %v819
  %821 = vmatmul.bf16.gmra.mxu0 %v542
  %v822 = vpop.f32.mrf.mxu0
  %v823 = vadd.f32 %v724, %v822
  %v824 = vpop.f32.mrf.mxu0
  %v825 = vadd.f32 %v726, %v824
  %826 = vmatmul.bf16.gmra.mxu0 %v545
  %v827 = vpop.f32.mrf.mxu0
  %v828 = vadd.f32 %v729, %v827
  %v829 = vpop.f32.mrf.mxu0
  %v830 = vadd.f32 %v731, %v829
  %831 = vmatmul.bf16.gmra.mxu0 %v548
  %v832 = vpop.f32.mrf.mxu0
  %v833 = vadd.f32 %v734, %v832
  %v834 = vpop.f32.mrf.mxu0
  %v835 = vadd.f32 %v736, %v834
  %836 = vmatmul.bf16.gmra.mxu0 %v551
  %v837 = vpop.f32.mrf.mxu0
  %v838 = vadd.f32 %v739, %v837
  %v839 = vpop.f32.mrf.mxu0
  %v840 = vadd.f32 %v741, %v839
  %841 = vmatmul.bf16.gmra.mxu0 %v554
  %v842 = vpop.f32.mrf.mxu0
  %v843 = vadd.f32 %v744, %v842
  %v844 = vpop.f32.mrf.mxu0
  %v845 = vadd.f32 %v746, %v844
  %846 = vmatmul.bf16.gmra.mxu0 %v557
  %v847 = vpop.f32.mrf.mxu0
  %v848 = vadd.f32 %v749, %v847
  %v849 = vpop.f32.mrf.mxu0
  %v850 = vadd.f32 %v751, %v849
  %851 = vmatmul.bf16.gmra.mxu0 %v560
  %v852 = vpop.f32.mrf.mxu0
  %v853 = vadd.f32 %v754, %v852
  %v854 = vpop.f32.mrf.mxu0
  %v855 = vadd.f32 %v756, %v854
  %856 = vmatmul.bf16.gmra.mxu0 %v563
  %v857 = vpop.f32.mrf.mxu0
  %v858 = vadd.f32 %v759, %v857
  %v859 = vpop.f32.mrf.mxu0
  %v860 = vadd.f32 %v761, %v859
  %861 = vdwg.mxu0
  %v862 = vld [vmem:[%s1] sm:$0xff]
  %v863 = vld [vmem:[%s1 + $0x8] sm:$0xf]
  %v864 = vld [vmem:[%s1 + $0xc] sm:$0xff]
  %v865 = vld [vmem:[%s1 + $0x14] sm:$0xf]
  %v866 = vld [vmem:[%s1 + $0x18] sm:$0xff]
  %v867 = vld [vmem:[%s1 + $0x20] sm:$0xf]
  %v868 = vld [vmem:[%s1 + $0x24] sm:$0xff]
  %v869 = vld [vmem:[%s1 + $0x2c] sm:$0xf]
  %v870 = vld [vmem:[%s1 + $0x30] sm:$0xff]
  %v871 = vld [vmem:[%s1 + $0x38] sm:$0xf]
  %v872 = vld [vmem:[%s1 + $0x3c] sm:$0xff]
  %v873 = vld [vmem:[%s1 + $0x44] sm:$0xf]
  %v874 = vld [vmem:[%s1 + $0x48] sm:$0xff]
  %v875 = vld [vmem:[%s1 + $0x50] sm:$0xf]
  %v876 = vld [vmem:[%s1 + $0x54] sm:$0xff]
  %v877 = vld [vmem:[%s1 + $0x5c] sm:$0xf]
  %v878 = vld [vmem:[%s1 + $0x60] sm:$0xff]
  %v879 = vld [vmem:[%s1 + $0x68] sm:$0xf]
  %v880 = vld [vmem:[%s1 + $0x6c] sm:$0xff]
  %v881 = vld [vmem:[%s1 + $0x74] sm:$0xf]
  %v882 = vld [vmem:[%s1 + $0x78] sm:$0xff]
  %v883 = vld [vmem:[%s1 + $0x80] sm:$0xf]
  %v884 = vld [vmem:[%s1 + $0x84] sm:$0xff]
  %v885 = vld [vmem:[%s1 + $0x8c] sm:$0xf]
  %v886 = vld [vmem:[%s1 + $0x90] sm:$0xff]
  %v887 = vld [vmem:[%s1 + $0x98] sm:$0xf]
  %v888 = vld [vmem:[%s1 + $0x9c] sm:$0xff]
  %v889 = vld [vmem:[%s1 + $0xa4] sm:$0xf]
  %v890 = vld [vmem:[%s1 + $0xa8] sm:$0xff]
  %v891 = vld [vmem:[%s1 + $0xb0] sm:$0xf]
  %v892 = vld [vmem:[%s1 + $0xb4] sm:$0xff]
  %v893 = vld [vmem:[%s1 + $0xbc] sm:$0xf]
  %v894 = vld [vmem:[%s1 + $0xc0] sm:$0xff]
  %v895 = vld [vmem:[%s1 + $0xc8] sm:$0xf]
  %v896 = vld [vmem:[%s1 + $0xcc] sm:$0xff]
  %v897 = vld [vmem:[%s1 + $0xd4] sm:$0xf]
  %v898 = vld [vmem:[%s1 + $0xd8] sm:$0xff]
  %v899 = vld [vmem:[%s1 + $0xe0] sm:$0xf]
  %v900 = vld [vmem:[%s1 + $0xe4] sm:$0xff]
  %v901 = vld [vmem:[%s1 + $0xec] sm:$0xf]
  %v902 = vld [vmem:[%s1 + $0xf0] sm:$0xff]
  %v903 = vld [vmem:[%s1 + $0xf8] sm:$0xf]
  %v904 = vld [vmem:[%s1 + $0xfc] sm:$0xff]
  %v905 = vld [vmem:[%s1 + $0x104] sm:$0xf]
  %v906 = vld [vmem:[%s1 + $0x108] sm:$0xff]
  %v907 = vld [vmem:[%s1 + $0x110] sm:$0xf]
  %v908 = vld [vmem:[%s1 + $0x114] sm:$0xff]
  %v909 = vld [vmem:[%s1 + $0x11c] sm:$0xf]
  %v910 = vld [vmem:[%s1 + $0x120] sm:$0xff]
  %v911 = vld [vmem:[%s1 + $0x128] sm:$0xf]
  %v912 = vld [vmem:[%s1 + $0x12c] sm:$0xff]
  %v913 = vld [vmem:[%s1 + $0x134] sm:$0xf]
  %v914 = vld [vmem:[%s1 + $0x138] sm:$0xff]
  %v915 = vld [vmem:[%s1 + $0x140] sm:$0xf]
  %v916 = vld [vmem:[%s1 + $0x144] sm:$0xff]
  %v917 = vld [vmem:[%s1 + $0x14c] sm:$0xf]
  %v918 = vld [vmem:[%s1 + $0x150] sm:$0xff]
  %v919 = vld [vmem:[%s1 + $0x158] sm:$0xf]
  %v920 = vld [vmem:[%s1 + $0x15c] sm:$0xff]
  %v921 = vld [vmem:[%s1 + $0x164] sm:$0xf]
  %v922 = vld [vmem:[%s1 + $0x168] sm:$0xff]
  %v923 = vld [vmem:[%s1 + $0x170] sm:$0xf]
  %v924 = vld [vmem:[%s1 + $0x174] sm:$0xff]
  %v925 = vld [vmem:[%s1 + $0x17c] sm:$0xf]
  %v926 = vld [vmem:[%s1 + $0x180] sm:$0xff]
  %v927 = vld [vmem:[%s1 + $0x188] sm:$0xf]
  %v928 = vld [vmem:[%s1 + $0x18c] sm:$0xff]
  %v929 = vld [vmem:[%s1 + $0x194] sm:$0xf]
  %v930 = vld [vmem:[%s1 + $0x198] sm:$0xff]
  %v931 = vld [vmem:[%s1 + $0x1a0] sm:$0xf]
  %v932 = vld [vmem:[%s1 + $0x1a4] sm:$0xff]
  %v933 = vld [vmem:[%s1 + $0x1ac] sm:$0xf]
  %v1006 = vunpack.c.l.b16 %v862
  %v1007 = vunpack.c.h.b16 %v862
  %v1008 = vunpack.c.l.b16 %v863
  %v1009 = vunpack.c.l.b16 %v864
  %v1010 = vunpack.c.h.b16 %v864
  %v1011 = vunpack.c.l.b16 %v865
  %v1012 = vunpack.c.l.b16 %v866
  %v1013 = vunpack.c.h.b16 %v866
  %v1014 = vunpack.c.l.b16 %v867
  %v1015 = vunpack.c.l.b16 %v868
  %v1016 = vunpack.c.h.b16 %v868
  %v1017 = vunpack.c.l.b16 %v869
  %v1018 = vunpack.c.l.b16 %v870
  %v1019 = vunpack.c.h.b16 %v870
  %v1020 = vunpack.c.l.b16 %v871
  %v1021 = vunpack.c.l.b16 %v872
  %v1022 = vunpack.c.h.b16 %v872
  %v1023 = vunpack.c.l.b16 %v873
  %v1024 = vunpack.c.l.b16 %v874
  %v1025 = vunpack.c.h.b16 %v874
  %v1026 = vunpack.c.l.b16 %v875
  %v1027 = vunpack.c.l.b16 %v876
  %v1028 = vunpack.c.h.b16 %v876
  %v1029 = vunpack.c.l.b16 %v877
  %v1030 = vunpack.c.l.b16 %v878
  %v1031 = vunpack.c.h.b16 %v878
  %v1032 = vunpack.c.l.b16 %v879
  %v1033 = vunpack.c.l.b16 %v880
  %v1034 = vunpack.c.h.b16 %v880
  %v1035 = vunpack.c.l.b16 %v881
  %v1036 = vunpack.c.l.b16 %v882
  %v1037 = vunpack.c.h.b16 %v882
  %v1038 = vunpack.c.l.b16 %v883
  %v1039 = vunpack.c.l.b16 %v884
  %v1040 = vunpack.c.h.b16 %v884
  %v1041 = vunpack.c.l.b16 %v885
  %v1042 = vunpack.c.l.b16 %v886
  %v1043 = vunpack.c.h.b16 %v886
  %v1044 = vunpack.c.l.b16 %v887
  %v1045 = vunpack.c.l.b16 %v888
  %v1046 = vunpack.c.h.b16 %v888
  %v1047 = vunpack.c.l.b16 %v889
  %v1048 = vunpack.c.l.b16 %v890
  %v1049 = vunpack.c.h.b16 %v890
  %v1050 = vunpack.c.l.b16 %v891
  %v1051 = vunpack.c.l.b16 %v892
  %v1052 = vunpack.c.h.b16 %v892
  %v1053 = vunpack.c.l.b16 %v893
  %v1054 = vunpack.c.l.b16 %v894
  %v1055 = vunpack.c.h.b16 %v894
  %v1056 = vunpack.c.l.b16 %v895
  %v1057 = vunpack.c.l.b16 %v896
  %v1058 = vunpack.c.h.b16 %v896
  %v1059 = vunpack.c.l.b16 %v897
  %v1060 = vunpack.c.l.b16 %v898
  %v1061 = vunpack.c.h.b16 %v898
  %v1062 = vunpack.c.l.b16 %v899
  %v1063 = vunpack.c.l.b16 %v900
  %v1064 = vunpack.c.h.b16 %v900
  %v1065 = vunpack.c.l.b16 %v901
  %v1066 = vunpack.c.l.b16 %v902
  %v1067 = vunpack.c.h.b16 %v902
  %v1068 = vunpack.c.l.b16 %v903
  %v1069 = vunpack.c.l.b16 %v904
  %v1070 = vunpack.c.h.b16 %v904
  %v1071 = vunpack.c.l.b16 %v905
  %v1072 = vunpack.c.l.b16 %v906
  %v1073 = vunpack.c.h.b16 %v906
  %v1074 = vunpack.c.l.b16 %v907
  %v1075 = vunpack.c.l.b16 %v908
  %v1076 = vunpack.c.h.b16 %v908
  %v1077 = vunpack.c.l.b16 %v909
  %v1078 = vunpack.c.l.b16 %v910
  %v1079 = vunpack.c.h.b16 %v910
  %v1080 = vunpack.c.l.b16 %v911
  %v1081 = vunpack.c.l.b16 %v912
  %v1082 = vunpack.c.h.b16 %v912
  %v1083 = vunpack.c.l.b16 %v913
  %v1084 = vunpack.c.l.b16 %v914
  %v1085 = vunpack.c.h.b16 %v914
  %v1086 = vunpack.c.l.b16 %v915
  %v1087 = vunpack.c.l.b16 %v916
  %v1088 = vunpack.c.h.b16 %v916
  %v1089 = vunpack.c.l.b16 %v917
  %v1090 = vunpack.c.l.b16 %v918
  %v1091 = vunpack.c.h.b16 %v918
  %v1092 = vunpack.c.l.b16 %v919
  %v1093 = vunpack.c.l.b16 %v920
  %v1094 = vunpack.c.h.b16 %v920
  %v1095 = vunpack.c.l.b16 %v921
  %v1096 = vunpack.c.l.b16 %v922
  %v1097 = vunpack.c.h.b16 %v922
  %v1098 = vunpack.c.l.b16 %v923
  %v1099 = vunpack.c.l.b16 %v924
  %v1100 = vunpack.c.h.b16 %v924
  %v1101 = vunpack.c.l.b16 %v925
  %v1102 = vunpack.c.l.b16 %v926
  %v1103 = vunpack.c.h.b16 %v926
  %v1104 = vunpack.c.l.b16 %v927
  %v1105 = vunpack.c.l.b16 %v928
  %v1106 = vunpack.c.h.b16 %v928
  %v1107 = vunpack.c.l.b16 %v929
  %v1108 = vunpack.c.l.b16 %v930
  %v1109 = vunpack.c.h.b16 %v930
  %v1110 = vunpack.c.l.b16 %v931
  %v1111 = vunpack.c.l.b16 %v932
  %v1112 = vunpack.c.h.b16 %v932
  %v1113 = vunpack.c.l.b16 %v933
  %v1114 = vpack.c.b16 %v1009, %v1006
  %v1115 = vpack.c.b16 %v1010, %v1007
  %v1116 = vpack.c.b16 %v1011, %v1008
  %v1117 = vpack.c.b16 %v1015, %v1012
  %v1118 = vpack.c.b16 %v1016, %v1013
  %v1119 = vpack.c.b16 %v1017, %v1014
  %v1120 = vpack.c.b16 %v1021, %v1018
  %v1121 = vpack.c.b16 %v1022, %v1019
  %v1122 = vpack.c.b16 %v1023, %v1020
  %v1123 = vpack.c.b16 %v1027, %v1024
  %v1124 = vpack.c.b16 %v1028, %v1025
  %v1125 = vpack.c.b16 %v1029, %v1026
  %v1126 = vpack.c.b16 %v1033, %v1030
  %v1127 = vpack.c.b16 %v1034, %v1031
  %v1128 = vpack.c.b16 %v1035, %v1032
  %v1129 = vpack.c.b16 %v1039, %v1036
  %v1130 = vpack.c.b16 %v1040, %v1037
  %v1131 = vpack.c.b16 %v1041, %v1038
  %v1132 = vpack.c.b16 %v1045, %v1042
  %v1133 = vpack.c.b16 %v1046, %v1043
  %v1134 = vpack.c.b16 %v1047, %v1044
  %v1135 = vpack.c.b16 %v1051, %v1048
  %v1136 = vpack.c.b16 %v1052, %v1049
  %v1137 = vpack.c.b16 %v1053, %v1050
  %v1138 = vpack.c.b16 %v1057, %v1054
  %v1139 = vpack.c.b16 %v1058, %v1055
  %v1140 = vpack.c.b16 %v1059, %v1056
  %v1141 = vpack.c.b16 %v1063, %v1060
  %v1142 = vpack.c.b16 %v1064, %v1061
  %v1143 = vpack.c.b16 %v1065, %v1062
  %v1144 = vpack.c.b16 %v1069, %v1066
  %v1145 = vpack.c.b16 %v1070, %v1067
  %v1146 = vpack.c.b16 %v1071, %v1068
  %v1147 = vpack.c.b16 %v1075, %v1072
  %v1148 = vpack.c.b16 %v1076, %v1073
  %v1149 = vpack.c.b16 %v1077, %v1074
  %v1150 = vpack.c.b16 %v1081, %v1078
  %v1151 = vpack.c.b16 %v1082, %v1079
  %v1152 = vpack.c.b16 %v1083, %v1080
  %v1153 = vpack.c.b16 %v1087, %v1084
  %v1154 = vpack.c.b16 %v1088, %v1085
  %v1155 = vpack.c.b16 %v1089, %v1086
  %v1156 = vpack.c.b16 %v1093, %v1090
  %v1157 = vpack.c.b16 %v1094, %v1091
  %v1158 = vpack.c.b16 %v1095, %v1092
  %v1159 = vpack.c.b16 %v1099, %v1096
  %v1160 = vpack.c.b16 %v1100, %v1097
  %v1161 = vpack.c.b16 %v1101, %v1098
  %v1162 = vpack.c.b16 %v1105, %v1102
  %v1163 = vpack.c.b16 %v1106, %v1103
  %v1164 = vpack.c.b16 %v1107, %v1104
  %v1165 = vpack.c.b16 %v1111, %v1108
  %v1166 = vpack.c.b16 %v1112, %v1109
  %v1167 = vpack.c.b16 %v1113, %v1110
  %v1205 = vsel %vm510, %v1116, 0
  %v1208 = vsel %vm510, %v1119, 0
  %v1211 = vsel %vm510, %v1122, 0
  %v1214 = vsel %vm510, %v1125, 0
  %v1217 = vsel %vm510, %v1128, 0
  %v1220 = vsel %vm510, %v1131, 0
  %v1223 = vsel %vm510, %v1134, 0
  %v1226 = vsel %vm510, %v1137, 0
  %v1229 = vsel %vm510, %v1140, 0
  %v1232 = vsel %vm510, %v1143, 0
  %v1235 = vsel %vm510, %v1146, 0
  %v1238 = vsel %vm510, %v1149, 0
  %v1241 = vsel %vm510, %v1152, 0
  %v1244 = vsel %vm510, %v1155, 0
  %v1247 = vsel %vm510, %v1158, 0
  %v1250 = vsel %vm510, %v1161, 0
  %v1253 = vsel %vm510, %v1164, 0
  %v1256 = vsel %vm510, %v1167, 0
  %1258 = vmatpush.bf16.msra.mxu0 %v481
  %1259 = vmatpush.bf16.msra.mxu0 %v480
  %1260 = vmatpush.bf16.msra.mxu0 %v479
  %1261 = vmatpush.bf16.msra.mxu0 %v478
  %1262 = vmatpush.bf16.msra.mxu0 %v477
  %1263 = vmatpush.bf16.msra.mxu0 %v476
  %1264 = vmatpush.bf16.msra.mxu0 %v475
  %1265 = vmatpush.bf16.msra.mxu0 %v474
  %1266 = vmatmul.bf16.gmra.mxu0 %v1114
  %v1267 = vpop.f32.mrf.mxu0
  %v1268 = vadd.f32 0.0, %v1267
  %v1269 = vpop.f32.mrf.mxu0
  %v1270 = vadd.f32 0.0, %v1269
  %1271 = vmatmul.bf16.gmra.mxu0 %v1117
  %v1272 = vpop.f32.mrf.mxu0
  %v1273 = vadd.f32 0.0, %v1272
  %v1274 = vpop.f32.mrf.mxu0
  %v1275 = vadd.f32 0.0, %v1274
  %1276 = vmatmul.bf16.gmra.mxu0 %v1120
  %v1277 = vpop.f32.mrf.mxu0
  %v1278 = vadd.f32 0.0, %v1277
  %v1279 = vpop.f32.mrf.mxu0
  %v1280 = vadd.f32 0.0, %v1279
  %1281 = vmatmul.bf16.gmra.mxu0 %v1123
  %v1282 = vpop.f32.mrf.mxu0
  %v1283 = vadd.f32 0.0, %v1282
  %v1284 = vpop.f32.mrf.mxu0
  %v1285 = vadd.f32 0.0, %v1284
  %1286 = vmatmul.bf16.gmra.mxu0 %v1126
  %v1287 = vpop.f32.mrf.mxu0
  %v1288 = vadd.f32 0.0, %v1287
  %v1289 = vpop.f32.mrf.mxu0
  %v1290 = vadd.f32 0.0, %v1289
  %1291 = vmatmul.bf16.gmra.mxu0 %v1129
  %v1292 = vpop.f32.mrf.mxu0
  %v1293 = vadd.f32 0.0, %v1292
  %v1294 = vpop.f32.mrf.mxu0
  %v1295 = vadd.f32 0.0, %v1294
  %1296 = vmatmul.bf16.gmra.mxu0 %v1132
  %v1297 = vpop.f32.mrf.mxu0
  %v1298 = vadd.f32 0.0, %v1297
  %v1299 = vpop.f32.mrf.mxu0
  %v1300 = vadd.f32 0.0, %v1299
  %1301 = vmatmul.bf16.gmra.mxu0 %v1135
  %v1302 = vpop.f32.mrf.mxu0
  %v1303 = vadd.f32 0.0, %v1302
  %v1304 = vpop.f32.mrf.mxu0
  %v1305 = vadd.f32 0.0, %v1304
  %1306 = vmatmul.bf16.gmra.mxu0 %v1138
  %v1307 = vpop.f32.mrf.mxu0
  %v1308 = vadd.f32 0.0, %v1307
  %v1309 = vpop.f32.mrf.mxu0
  %v1310 = vadd.f32 0.0, %v1309
  %1311 = vmatmul.bf16.gmra.mxu0 %v1141
  %v1312 = vpop.f32.mrf.mxu0
  %v1313 = vadd.f32 0.0, %v1312
  %v1314 = vpop.f32.mrf.mxu0
  %v1315 = vadd.f32 0.0, %v1314
  %1316 = vmatmul.bf16.gmra.mxu0 %v1144
  %v1317 = vpop.f32.mrf.mxu0
  %v1318 = vadd.f32 0.0, %v1317
  %v1319 = vpop.f32.mrf.mxu0
  %v1320 = vadd.f32 0.0, %v1319
  %1321 = vmatmul.bf16.gmra.mxu0 %v1147
  %v1322 = vpop.f32.mrf.mxu0
  %v1323 = vadd.f32 0.0, %v1322
  %v1324 = vpop.f32.mrf.mxu0
  %v1325 = vadd.f32 0.0, %v1324
  %1326 = vmatmul.bf16.gmra.mxu0 %v1150
  %v1327 = vpop.f32.mrf.mxu0
  %v1328 = vadd.f32 0.0, %v1327
  %v1329 = vpop.f32.mrf.mxu0
  %v1330 = vadd.f32 0.0, %v1329
  %1331 = vmatmul.bf16.gmra.mxu0 %v1153
  %v1332 = vpop.f32.mrf.mxu0
  %v1333 = vadd.f32 0.0, %v1332
  %v1334 = vpop.f32.mrf.mxu0
  %v1335 = vadd.f32 0.0, %v1334
  %1336 = vmatmul.bf16.gmra.mxu0 %v1156
  %v1337 = vpop.f32.mrf.mxu0
  %v1338 = vadd.f32 0.0, %v1337
  %v1339 = vpop.f32.mrf.mxu0
  %v1340 = vadd.f32 0.0, %v1339
  %1341 = vmatmul.bf16.gmra.mxu0 %v1159
  %v1342 = vpop.f32.mrf.mxu0
  %v1343 = vadd.f32 0.0, %v1342
  %v1344 = vpop.f32.mrf.mxu0
  %v1345 = vadd.f32 0.0, %v1344
  %1346 = vmatmul.bf16.gmra.mxu0 %v1162
  %v1347 = vpop.f32.mrf.mxu0
  %v1348 = vadd.f32 0.0, %v1347
  %v1349 = vpop.f32.mrf.mxu0
  %v1350 = vadd.f32 0.0, %v1349
  %1351 = vmatmul.bf16.gmra.mxu0 %v1165
  %v1352 = vpop.f32.mrf.mxu0
  %v1353 = vadd.f32 0.0, %v1352
  %v1354 = vpop.f32.mrf.mxu0
  %v1355 = vadd.f32 0.0, %v1354
  %1356 = vdwg.mxu0
  %1357 = vmatpush.bf16.msra.mxu0 %v489
  %1358 = vmatpush.bf16.msra.mxu0 %v488
  %1359 = vmatpush.bf16.msra.mxu0 %v487
  %1360 = vmatpush.bf16.msra.mxu0 %v486
  %1361 = vmatpush.bf16.msra.mxu0 %v485
  %1362 = vmatpush.bf16.msra.mxu0 %v484
  %1363 = vmatpush.bf16.msra.mxu0 %v483
  %1364 = vmatpush.bf16.msra.mxu0 %v482
  %1365 = vmatmul.bf16.gmra.mxu0 %v1115
  %v1366 = vpop.f32.mrf.mxu0
  %v1367 = vadd.f32 %v1268, %v1366
  %v1368 = vpop.f32.mrf.mxu0
  %v1369 = vadd.f32 %v1270, %v1368
  %1370 = vmatmul.bf16.gmra.mxu0 %v1118
  %v1371 = vpop.f32.mrf.mxu0
  %v1372 = vadd.f32 %v1273, %v1371
  %v1373 = vpop.f32.mrf.mxu0
  %v1374 = vadd.f32 %v1275, %v1373
  %1375 = vmatmul.bf16.gmra.mxu0 %v1121
  %v1376 = vpop.f32.mrf.mxu0
  %v1377 = vadd.f32 %v1278, %v1376
  %v1378 = vpop.f32.mrf.mxu0
  %v1379 = vadd.f32 %v1280, %v1378
  %1380 = vmatmul.bf16.gmra.mxu0 %v1124
  %v1381 = vpop.f32.mrf.mxu0
  %v1382 = vadd.f32 %v1283, %v1381
  %v1383 = vpop.f32.mrf.mxu0
  %v1384 = vadd.f32 %v1285, %v1383
  %1385 = vmatmul.bf16.gmra.mxu0 %v1127
  %v1386 = vpop.f32.mrf.mxu0
  %v1387 = vadd.f32 %v1288, %v1386
  %v1388 = vpop.f32.mrf.mxu0
  %v1389 = vadd.f32 %v1290, %v1388
  %1390 = vmatmul.bf16.gmra.mxu0 %v1130
  %v1391 = vpop.f32.mrf.mxu0
  %v1392 = vadd.f32 %v1293, %v1391
  %v1393 = vpop.f32.mrf.mxu0
  %v1394 = vadd.f32 %v1295, %v1393
  %1395 = vmatmul.bf16.gmra.mxu0 %v1133
  %v1396 = vpop.f32.mrf.mxu0
  %v1397 = vadd.f32 %v1298, %v1396
  %v1398 = vpop.f32.mrf.mxu0
  %v1399 = vadd.f32 %v1300, %v1398
  %1400 = vmatmul.bf16.gmra.mxu0 %v1136
  %v1401 = vpop.f32.mrf.mxu0
  %v1402 = vadd.f32 %v1303, %v1401
  %v1403 = vpop.f32.mrf.mxu0
  %v1404 = vadd.f32 %v1305, %v1403
  %1405 = vmatmul.bf16.gmra.mxu0 %v1139
  %v1406 = vpop.f32.mrf.mxu0
  %v1407 = vadd.f32 %v1308, %v1406
  %v1408 = vpop.f32.mrf.mxu0
  %v1409 = vadd.f32 %v1310, %v1408
  %1410 = vmatmul.bf16.gmra.mxu0 %v1142
  %v1411 = vpop.f32.mrf.mxu0
  %v1412 = vadd.f32 %v1313, %v1411
  %v1413 = vpop.f32.mrf.mxu0
  %v1414 = vadd.f32 %v1315, %v1413
  %1415 = vmatmul.bf16.gmra.mxu0 %v1145
  %v1416 = vpop.f32.mrf.mxu0
  %v1417 = vadd.f32 %v1318, %v1416
  %v1418 = vpop.f32.mrf.mxu0
  %v1419 = vadd.f32 %v1320, %v1418
  %1420 = vmatmul.bf16.gmra.mxu0 %v1148
  %v1421 = vpop.f32.mrf.mxu0
  %v1422 = vadd.f32 %v1323, %v1421
  %v1423 = vpop.f32.mrf.mxu0
  %v1424 = vadd.f32 %v1325, %v1423
  %1425 = vmatmul.bf16.gmra.mxu0 %v1151
  %v1426 = vpop.f32.mrf.mxu0
  %v1427 = vadd.f32 %v1328, %v1426
  %v1428 = vpop.f32.mrf.mxu0
  %v1429 = vadd.f32 %v1330, %v1428
  %1430 = vmatmul.bf16.gmra.mxu0 %v1154
  %v1431 = vpop.f32.mrf.mxu0
  %v1432 = vadd.f32 %v1333, %v1431
  %v1433 = vpop.f32.mrf.mxu0
  %v1434 = vadd.f32 %v1335, %v1433
  %1435 = vmatmul.bf16.gmra.mxu0 %v1157
  %v1436 = vpop.f32.mrf.mxu0
  %v1437 = vadd.f32 %v1338, %v1436
  %v1438 = vpop.f32.mrf.mxu0
  %v1439 = vadd.f32 %v1340, %v1438
  %1440 = vmatmul.bf16.gmra.mxu0 %v1160
  %v1441 = vpop.f32.mrf.mxu0
  %v1442 = vadd.f32 %v1343, %v1441
  %v1443 = vpop.f32.mrf.mxu0
  %v1444 = vadd.f32 %v1345, %v1443
  %1445 = vmatmul.bf16.gmra.mxu0 %v1163
  %v1446 = vpop.f32.mrf.mxu0
  %v1447 = vadd.f32 %v1348, %v1446
  %v1448 = vpop.f32.mrf.mxu0
  %v1449 = vadd.f32 %v1350, %v1448
  %1450 = vmatmul.bf16.gmra.mxu0 %v1166
  %v1451 = vpop.f32.mrf.mxu0
  %v1452 = vadd.f32 %v1353, %v1451
  %v1453 = vpop.f32.mrf.mxu0
  %v1454 = vadd.f32 %v1355, %v1453
  %1455 = vdwg.mxu0
  %1456 = vmatpush.bf16.msra.mxu0 0
  %1457 = vmatpush.bf16.msra.mxu0 0
  %1458 = vmatpush.bf16.msra.mxu0 0
  %1459 = vmatpush.bf16.msra.mxu0 0
  %1460 = vmatpush.bf16.msra.mxu0 0
  %1461 = vmatpush.bf16.msra.mxu0 0
  %1462 = vmatpush.bf16.msra.mxu0 %v491
  %1463 = vmatpush.bf16.msra.mxu0 %v490
  %1464 = vmatmul.bf16.gmra.mxu0 %v1205
  %v1465 = vpop.f32.mrf.mxu0
  %v1466 = vadd.f32 %v1367, %v1465
  %v1467 = vpop.f32.mrf.mxu0
  %v1468 = vadd.f32 %v1369, %v1467
  %1469 = vmatmul.bf16.gmra.mxu0 %v1208
  %v1470 = vpop.f32.mrf.mxu0
  %v1471 = vadd.f32 %v1372, %v1470
  %v1472 = vpop.f32.mrf.mxu0
  %v1473 = vadd.f32 %v1374, %v1472
  %1474 = vmatmul.bf16.gmra.mxu0 %v1211
  %v1475 = vpop.f32.mrf.mxu0
  %v1476 = vadd.f32 %v1377, %v1475
  %v1477 = vpop.f32.mrf.mxu0
  %v1478 = vadd.f32 %v1379, %v1477
  %1479 = vmatmul.bf16.gmra.mxu0 %v1214
  %v1480 = vpop.f32.mrf.mxu0
  %v1481 = vadd.f32 %v1382, %v1480
  %v1482 = vpop.f32.mrf.mxu0
  %v1483 = vadd.f32 %v1384, %v1482
  %1484 = vmatmul.bf16.gmra.mxu0 %v1217
  %v1485 = vpop.f32.mrf.mxu0
  %v1486 = vadd.f32 %v1387, %v1485
  %v1487 = vpop.f32.mrf.mxu0
  %v1488 = vadd.f32 %v1389, %v1487
  %1489 = vmatmul.bf16.gmra.mxu0 %v1220
  %v1490 = vpop.f32.mrf.mxu0
  %v1491 = vadd.f32 %v1392, %v1490
  %v1492 = vpop.f32.mrf.mxu0
  %v1493 = vadd.f32 %v1394, %v1492
  %1494 = vmatmul.bf16.gmra.mxu0 %v1223
  %v1495 = vpop.f32.mrf.mxu0
  %v1496 = vadd.f32 %v1397, %v1495
  %v1497 = vpop.f32.mrf.mxu0
  %v1498 = vadd.f32 %v1399, %v1497
  %1499 = vmatmul.bf16.gmra.mxu0 %v1226
  %v1500 = vpop.f32.mrf.mxu0
  %v1501 = vadd.f32 %v1402, %v1500
  %v1502 = vpop.f32.mrf.mxu0
  %v1503 = vadd.f32 %v1404, %v1502
  %1504 = vmatmul.bf16.gmra.mxu0 %v1229
  %v1505 = vpop.f32.mrf.mxu0
  %v1506 = vadd.f32 %v1407, %v1505
  %v1507 = vpop.f32.mrf.mxu0
  %v1508 = vadd.f32 %v1409, %v1507
  %1509 = vmatmul.bf16.gmra.mxu0 %v1232
  %v1510 = vpop.f32.mrf.mxu0
  %v1511 = vadd.f32 %v1412, %v1510
  %v1512 = vpop.f32.mrf.mxu0
  %v1513 = vadd.f32 %v1414, %v1512
  %1514 = vmatmul.bf16.gmra.mxu0 %v1235
  %v1515 = vpop.f32.mrf.mxu0
  %v1516 = vadd.f32 %v1417, %v1515
  %v1517 = vpop.f32.mrf.mxu0
  %v1518 = vadd.f32 %v1419, %v1517
  %1519 = vmatmul.bf16.gmra.mxu0 %v1238
  %v1520 = vpop.f32.mrf.mxu0
  %v1521 = vadd.f32 %v1422, %v1520
  %v1522 = vpop.f32.mrf.mxu0
  %v1523 = vadd.f32 %v1424, %v1522
  %1524 = vmatmul.bf16.gmra.mxu0 %v1241
  %v1525 = vpop.f32.mrf.mxu0
  %v1526 = vadd.f32 %v1427, %v1525
  %v1527 = vpop.f32.mrf.mxu0
  %v1528 = vadd.f32 %v1429, %v1527
  %1529 = vmatmul.bf16.gmra.mxu0 %v1244
  %v1530 = vpop.f32.mrf.mxu0
  %v1531 = vadd.f32 %v1432, %v1530
  %v1532 = vpop.f32.mrf.mxu0
  %v1533 = vadd.f32 %v1434, %v1532
  %1534 = vmatmul.bf16.gmra.mxu0 %v1247
  %v1535 = vpop.f32.mrf.mxu0
  %v1536 = vadd.f32 %v1437, %v1535
  %v1537 = vpop.f32.mrf.mxu0
  %v1538 = vadd.f32 %v1439, %v1537
  %1539 = vmatmul.bf16.gmra.mxu0 %v1250
  %v1540 = vpop.f32.mrf.mxu0
  %v1541 = vadd.f32 %v1442, %v1540
  %v1542 = vpop.f32.mrf.mxu0
  %v1543 = vadd.f32 %v1444, %v1542
  %1544 = vmatmul.bf16.gmra.mxu0 %v1253
  %v1545 = vpop.f32.mrf.mxu0
  %v1546 = vadd.f32 %v1447, %v1545
  %v1547 = vpop.f32.mrf.mxu0
  %v1548 = vadd.f32 %v1449, %v1547
  %1549 = vmatmul.bf16.gmra.mxu0 %v1256
  %v1550 = vpop.f32.mrf.mxu0
  %v1551 = vadd.f32 %v1452, %v1550
  %v1552 = vpop.f32.mrf.mxu0
  %v1553 = vadd.f32 %v1454, %v1552
  %1554 = vdwg.mxu0
  %v1555 = vmax.f32 %v773, %v1466
  %v1556 = vmax.f32 %v775, %v1468
  %v1557 = vmax.f32 %v778, %v1471
  %v1558 = vmax.f32 %v780, %v1473
  %v1559 = vmax.f32 %v783, %v1476
  %v1560 = vmax.f32 %v785, %v1478
  %v1561 = vmax.f32 %v788, %v1481
  %v1562 = vmax.f32 %v790, %v1483
  %v1563 = vmax.f32 %v793, %v1486
  %v1564 = vmax.f32 %v795, %v1488
  %v1565 = vmax.f32 %v798, %v1491
  %v1566 = vmax.f32 %v800, %v1493
  %v1567 = vmax.f32 %v803, %v1496
  %v1568 = vmax.f32 %v805, %v1498
  %v1569 = vmax.f32 %v808, %v1501
  %v1570 = vmax.f32 %v810, %v1503
  %v1571 = vmax.f32 %v813, %v1506
  %v1572 = vmax.f32 %v815, %v1508
  %v1573 = vmax.f32 %v818, %v1511
  %v1574 = vmax.f32 %v820, %v1513
  %v1575 = vmax.f32 %v823, %v1516
  %v1576 = vmax.f32 %v825, %v1518
  %v1577 = vmax.f32 %v828, %v1521
  %v1578 = vmax.f32 %v830, %v1523
  %v1579 = vmax.f32 %v833, %v1526
  %v1580 = vmax.f32 %v835, %v1528
  %v1581 = vmax.f32 %v838, %v1531
  %v1582 = vmax.f32 %v840, %v1533
  %v1583 = vmax.f32 %v843, %v1536
  %v1584 = vmax.f32 %v845, %v1538
  %v1585 = vmax.f32 %v848, %v1541
  %v1586 = vmax.f32 %v850, %v1543
  %v1587 = vmax.f32 %v853, %v1546
  %v1588 = vmax.f32 %v855, %v1548
  %v1589 = vmax.f32 %v858, %v1551
  %v1590 = vmax.f32 %v860, %v1553
  %v1591 = vld [vmem:[%s2] sm:$0xff]
  %v1592 = vld [vmem:[%s2 + $0x8] sm:$0xf]
  %v1593 = vld [vmem:[%s2 + $0xc] sm:$0xff]
  %v1594 = vld [vmem:[%s2 + $0x14] sm:$0xf]
  %v1595 = vld [vmem:[%s2 + $0x18] sm:$0xff]
  %v1596 = vld [vmem:[%s2 + $0x20] sm:$0xf]
  %v1597 = vld [vmem:[%s2 + $0x24] sm:$0xff]
  %v1598 = vld [vmem:[%s2 + $0x2c] sm:$0xf]
  %v1599 = vld [vmem:[%s2 + $0x30] sm:$0xff]
  %v1600 = vld [vmem:[%s2 + $0x38] sm:$0xf]
  %v1601 = vld [vmem:[%s2 + $0x3c] sm:$0xff]
  %v1602 = vld [vmem:[%s2 + $0x44] sm:$0xf]
  %v1603 = vld [vmem:[%s2 + $0x48] sm:$0xff]
  %v1604 = vld [vmem:[%s2 + $0x50] sm:$0xf]
  %v1605 = vld [vmem:[%s2 + $0x54] sm:$0xff]
  %v1606 = vld [vmem:[%s2 + $0x5c] sm:$0xf]
  %v1607 = vld [vmem:[%s2 + $0x60] sm:$0xff]
  %v1608 = vld [vmem:[%s2 + $0x68] sm:$0xf]
  %v1609 = vld [vmem:[%s2 + $0x6c] sm:$0xff]
  %v1610 = vld [vmem:[%s2 + $0x74] sm:$0xf]
  %v1611 = vld [vmem:[%s2 + $0x78] sm:$0xff]
  %v1612 = vld [vmem:[%s2 + $0x80] sm:$0xf]
  %v1613 = vld [vmem:[%s2 + $0x84] sm:$0xff]
  %v1614 = vld [vmem:[%s2 + $0x8c] sm:$0xf]
  %v1615 = vld [vmem:[%s2 + $0x90] sm:$0xff]
  %v1616 = vld [vmem:[%s2 + $0x98] sm:$0xf]
  %v1617 = vld [vmem:[%s2 + $0x9c] sm:$0xff]
  %v1618 = vld [vmem:[%s2 + $0xa4] sm:$0xf]
  %v1619 = vld [vmem:[%s2 + $0xa8] sm:$0xff]
  %v1620 = vld [vmem:[%s2 + $0xb0] sm:$0xf]
  %v1621 = vld [vmem:[%s2 + $0xb4] sm:$0xff]
  %v1622 = vld [vmem:[%s2 + $0xbc] sm:$0xf]
  %v1623 = vld [vmem:[%s2 + $0xc0] sm:$0xff]
  %v1624 = vld [vmem:[%s2 + $0xc8] sm:$0xf]
  %v1625 = vld [vmem:[%s2 + $0xcc] sm:$0xff]
  %v1626 = vld [vmem:[%s2 + $0xd4] sm:$0xf]
  %v1627 = vld [vmem:[%s2 + $0xd8] sm:$0xff]
  %v1628 = vld [vmem:[%s2 + $0xe0] sm:$0xf]
  %v1629 = vld [vmem:[%s2 + $0xe4] sm:$0xff]
  %v1630 = vld [vmem:[%s2 + $0xec] sm:$0xf]
  %v1631 = vld [vmem:[%s2 + $0xf0] sm:$0xff]
  %v1632 = vld [vmem:[%s2 + $0xf8] sm:$0xf]
  %v1633 = vld [vmem:[%s2 + $0xfc] sm:$0xff]
  %v1634 = vld [vmem:[%s2 + $0x104] sm:$0xf]
  %v1635 = vld [vmem:[%s2 + $0x108] sm:$0xff]
  %v1636 = vld [vmem:[%s2 + $0x110] sm:$0xf]
  %v1637 = vld [vmem:[%s2 + $0x114] sm:$0xff]
  %v1638 = vld [vmem:[%s2 + $0x11c] sm:$0xf]
  %v1639 = vld [vmem:[%s2 + $0x120] sm:$0xff]
  %v1640 = vld [vmem:[%s2 + $0x128] sm:$0xf]
  %v1641 = vld [vmem:[%s2 + $0x12c] sm:$0xff]
  %v1642 = vld [vmem:[%s2 + $0x134] sm:$0xf]
  %v1643 = vld [vmem:[%s2 + $0x138] sm:$0xff]
  %v1644 = vld [vmem:[%s2 + $0x140] sm:$0xf]
  %v1645 = vld [vmem:[%s2 + $0x144] sm:$0xff]
  %v1646 = vld [vmem:[%s2 + $0x14c] sm:$0xf]
  %v1647 = vld [vmem:[%s2 + $0x150] sm:$0xff]
  %v1648 = vld [vmem:[%s2 + $0x158] sm:$0xf]
  %v1649 = vld [vmem:[%s2 + $0x15c] sm:$0xff]
  %v1650 = vld [vmem:[%s2 + $0x164] sm:$0xf]
  %v1651 = vld [vmem:[%s2 + $0x168] sm:$0xff]
  %v1652 = vld [vmem:[%s2 + $0x170] sm:$0xf]
  %v1653 = vld [vmem:[%s2 + $0x174] sm:$0xff]
  %v1654 = vld [vmem:[%s2 + $0x17c] sm:$0xf]
  %v1655 = vld [vmem:[%s2 + $0x180] sm:$0xff]
  %v1656 = vld [vmem:[%s2 + $0x188] sm:$0xf]
  %v1657 = vld [vmem:[%s2 + $0x18c] sm:$0xff]
  %v1658 = vld [vmem:[%s2 + $0x194] sm:$0xf]
  %v1659 = vld [vmem:[%s2 + $0x198] sm:$0xff]
  %v1660 = vld [vmem:[%s2 + $0x1a0] sm:$0xf]
  %v1661 = vld [vmem:[%s2 + $0x1a4] sm:$0xff]
  %v1662 = vld [vmem:[%s2 + $0x1ac] sm:$0xf]
  %v1735 = vunpack.c.l.b16 %v1591
  %v1736 = vunpack.c.h.b16 %v1591
  %v1737 = vunpack.c.l.b16 %v1592
  %v1738 = vunpack.c.l.b16 %v1593
  %v1739 = vunpack.c.h.b16 %v1593
  %v1740 = vunpack.c.l.b16 %v1594
  %v1741 = vunpack.c.l.b16 %v1595
  %v1742 = vunpack.c.h.b16 %v1595
  %v1743 = vunpack.c.l.b16 %v1596
  %v1744 = vunpack.c.l.b16 %v1597
  %v1745 = vunpack.c.h.b16 %v1597
  %v1746 = vunpack.c.l.b16 %v1598
  %v1747 = vunpack.c.l.b16 %v1599
  %v1748 = vunpack.c.h.b16 %v1599
  %v1749 = vunpack.c.l.b16 %v1600
  %v1750 = vunpack.c.l.b16 %v1601
  %v1751 = vunpack.c.h.b16 %v1601
  %v1752 = vunpack.c.l.b16 %v1602
  %v1753 = vunpack.c.l.b16 %v1603
  %v1754 = vunpack.c.h.b16 %v1603
  %v1755 = vunpack.c.l.b16 %v1604
  %v1756 = vunpack.c.l.b16 %v1605
  %v1757 = vunpack.c.h.b16 %v1605
  %v1758 = vunpack.c.l.b16 %v1606
  %v1759 = vunpack.c.l.b16 %v1607
  %v1760 = vunpack.c.h.b16 %v1607
  %v1761 = vunpack.c.l.b16 %v1608
  %v1762 = vunpack.c.l.b16 %v1609
  %v1763 = vunpack.c.h.b16 %v1609
  %v1764 = vunpack.c.l.b16 %v1610
  %v1765 = vunpack.c.l.b16 %v1611
  %v1766 = vunpack.c.h.b16 %v1611
  %v1767 = vunpack.c.l.b16 %v1612
  %v1768 = vunpack.c.l.b16 %v1613
  %v1769 = vunpack.c.h.b16 %v1613
  %v1770 = vunpack.c.l.b16 %v1614
  %v1771 = vunpack.c.l.b16 %v1615
  %v1772 = vunpack.c.h.b16 %v1615
  %v1773 = vunpack.c.l.b16 %v1616
  %v1774 = vunpack.c.l.b16 %v1617
  %v1775 = vunpack.c.h.b16 %v1617
  %v1776 = vunpack.c.l.b16 %v1618
  %v1777 = vunpack.c.l.b16 %v1619
  %v1778 = vunpack.c.h.b16 %v1619
  %v1779 = vunpack.c.l.b16 %v1620
  %v1780 = vunpack.c.l.b16 %v1621
  %v1781 = vunpack.c.h.b16 %v1621
  %v1782 = vunpack.c.l.b16 %v1622
  %v1783 = vunpack.c.l.b16 %v1623
  %v1784 = vunpack.c.h.b16 %v1623
  %v1785 = vunpack.c.l.b16 %v1624
  %v1786 = vunpack.c.l.b16 %v1625
  %v1787 = vunpack.c.h.b16 %v1625
  %v1788 = vunpack.c.l.b16 %v1626
  %v1789 = vunpack.c.l.b16 %v1627
  %v1790 = vunpack.c.h.b16 %v1627
  %v1791 = vunpack.c.l.b16 %v1628
  %v1792 = vunpack.c.l.b16 %v1629
  %v1793 = vunpack.c.h.b16 %v1629
  %v1794 = vunpack.c.l.b16 %v1630
  %v1795 = vunpack.c.l.b16 %v1631
  %v1796 = vunpack.c.h.b16 %v1631
  %v1797 = vunpack.c.l.b16 %v1632
  %v1798 = vunpack.c.l.b16 %v1633
  %v1799 = vunpack.c.h.b16 %v1633
  %v1800 = vunpack.c.l.b16 %v1634
  %v1801 = vunpack.c.l.b16 %v1635
  %v1802 = vunpack.c.h.b16 %v1635
  %v1803 = vunpack.c.l.b16 %v1636
  %v1804 = vunpack.c.l.b16 %v1637
  %v1805 = vunpack.c.h.b16 %v1637
  %v1806 = vunpack.c.l.b16 %v1638
  %v1807 = vunpack.c.l.b16 %v1639
  %v1808 = vunpack.c.h.b16 %v1639
  %v1809 = vunpack.c.l.b16 %v1640
  %v1810 = vunpack.c.l.b16 %v1641
  %v1811 = vunpack.c.h.b16 %v1641
  %v1812 = vunpack.c.l.b16 %v1642
  %v1813 = vunpack.c.l.b16 %v1643
  %v1814 = vunpack.c.h.b16 %v1643
  %v1815 = vunpack.c.l.b16 %v1644
  %v1816 = vunpack.c.l.b16 %v1645
  %v1817 = vunpack.c.h.b16 %v1645
  %v1818 = vunpack.c.l.b16 %v1646
  %v1819 = vunpack.c.l.b16 %v1647
  %v1820 = vunpack.c.h.b16 %v1647
  %v1821 = vunpack.c.l.b16 %v1648
  %v1822 = vunpack.c.l.b16 %v1649
  %v1823 = vunpack.c.h.b16 %v1649
  %v1824 = vunpack.c.l.b16 %v1650
  %v1825 = vunpack.c.l.b16 %v1651
  %v1826 = vunpack.c.h.b16 %v1651
  %v1827 = vunpack.c.l.b16 %v1652
  %v1828 = vunpack.c.l.b16 %v1653
  %v1829 = vunpack.c.h.b16 %v1653
  %v1830 = vunpack.c.l.b16 %v1654
  %v1831 = vunpack.c.l.b16 %v1655
  %v1832 = vunpack.c.h.b16 %v1655
  %v1833 = vunpack.c.l.b16 %v1656
  %v1834 = vunpack.c.l.b16 %v1657
  %v1835 = vunpack.c.h.b16 %v1657
  %v1836 = vunpack.c.l.b16 %v1658
  %v1837 = vunpack.c.l.b16 %v1659
  %v1838 = vunpack.c.h.b16 %v1659
  %v1839 = vunpack.c.l.b16 %v1660
  %v1840 = vunpack.c.l.b16 %v1661
  %v1841 = vunpack.c.h.b16 %v1661
  %v1842 = vunpack.c.l.b16 %v1662
  %v1843 = vpack.c.b16 %v1738, %v1735
  %v1844 = vpack.c.b16 %v1739, %v1736
  %v1845 = vpack.c.b16 %v1740, %v1737
  %v1846 = vpack.c.b16 %v1744, %v1741
  %v1847 = vpack.c.b16 %v1745, %v1742
  %v1848 = vpack.c.b16 %v1746, %v1743
  %v1849 = vpack.c.b16 %v1750, %v1747
  %v1850 = vpack.c.b16 %v1751, %v1748
  %v1851 = vpack.c.b16 %v1752, %v1749
  %v1852 = vpack.c.b16 %v1756, %v1753
  %v1853 = vpack.c.b16 %v1757, %v1754
  %v1854 = vpack.c.b16 %v1758, %v1755
  %v1855 = vpack.c.b16 %v1762, %v1759
  %v1856 = vpack.c.b16 %v1763, %v1760
  %v1857 = vpack.c.b16 %v1764, %v1761
  %v1858 = vpack.c.b16 %v1768, %v1765
  %v1859 = vpack.c.b16 %v1769, %v1766
  %v1860 = vpack.c.b16 %v1770, %v1767
  %v1861 = vpack.c.b16 %v1774, %v1771
  %v1862 = vpack.c.b16 %v1775, %v1772
  %v1863 = vpack.c.b16 %v1776, %v1773
  %v1864 = vpack.c.b16 %v1780, %v1777
  %v1865 = vpack.c.b16 %v1781, %v1778
  %v1866 = vpack.c.b16 %v1782, %v1779
  %v1867 = vpack.c.b16 %v1786, %v1783
  %v1868 = vpack.c.b16 %v1787, %v1784
  %v1869 = vpack.c.b16 %v1788, %v1785
  %v1870 = vpack.c.b16 %v1792, %v1789
  %v1871 = vpack.c.b16 %v1793, %v1790
  %v1872 = vpack.c.b16 %v1794, %v1791
  %v1873 = vpack.c.b16 %v1798, %v1795
  %v1874 = vpack.c.b16 %v1799, %v1796
  %v1875 = vpack.c.b16 %v1800, %v1797
  %v1876 = vpack.c.b16 %v1804, %v1801
  %v1877 = vpack.c.b16 %v1805, %v1802
  %v1878 = vpack.c.b16 %v1806, %v1803
  %v1879 = vpack.c.b16 %v1810, %v1807
  %v1880 = vpack.c.b16 %v1811, %v1808
  %v1881 = vpack.c.b16 %v1812, %v1809
  %v1882 = vpack.c.b16 %v1816, %v1813
  %v1883 = vpack.c.b16 %v1817, %v1814
  %v1884 = vpack.c.b16 %v1818, %v1815
  %v1885 = vpack.c.b16 %v1822, %v1819
  %v1886 = vpack.c.b16 %v1823, %v1820
  %v1887 = vpack.c.b16 %v1824, %v1821
  %v1888 = vpack.c.b16 %v1828, %v1825
  %v1889 = vpack.c.b16 %v1829, %v1826
  %v1890 = vpack.c.b16 %v1830, %v1827
  %v1891 = vpack.c.b16 %v1834, %v1831
  %v1892 = vpack.c.b16 %v1835, %v1832
  %v1893 = vpack.c.b16 %v1836, %v1833
  %v1894 = vpack.c.b16 %v1840, %v1837
  %v1895 = vpack.c.b16 %v1841, %v1838
  %v1896 = vpack.c.b16 %v1842, %v1839
  %v1934 = vsel %vm510, %v1845, 0
  %v1937 = vsel %vm510, %v1848, 0
  %v1940 = vsel %vm510, %v1851, 0
  %v1943 = vsel %vm510, %v1854, 0
  %v1946 = vsel %vm510, %v1857, 0
  %v1949 = vsel %vm510, %v1860, 0
  %v1952 = vsel %vm510, %v1863, 0
  %v1955 = vsel %vm510, %v1866, 0
  %v1958 = vsel %vm510, %v1869, 0
  %v1961 = vsel %vm510, %v1872, 0
  %v1964 = vsel %vm510, %v1875, 0
  %v1967 = vsel %vm510, %v1878, 0
  %v1970 = vsel %vm510, %v1881, 0
  %v1973 = vsel %vm510, %v1884, 0
  %v1976 = vsel %vm510, %v1887, 0
  %v1979 = vsel %vm510, %v1890, 0
  %v1982 = vsel %vm510, %v1893, 0
  %v1985 = vsel %vm510, %v1896, 0
  %1987 = vmatpush.bf16.msra.mxu0 %v481
  %1988 = vmatpush.bf16.msra.mxu0 %v480
  %1989 = vmatpush.bf16.msra.mxu0 %v479
  %1990 = vmatpush.bf16.msra.mxu0 %v478
  %1991 = vmatpush.bf16.msra.mxu0 %v477
  %1992 = vmatpush.bf16.msra.mxu0 %v476
  %1993 = vmatpush.bf16.msra.mxu0 %v475
  %1994 = vmatpush.bf16.msra.mxu0 %v474
  %1995 = vmatmul.bf16.gmra.mxu0 %v1843
  %v1996 = vpop.f32.mrf.mxu0
  %v1997 = vadd.f32 0.0, %v1996
  %v1998 = vpop.f32.mrf.mxu0
  %v1999 = vadd.f32 0.0, %v1998
  %2000 = vmatmul.bf16.gmra.mxu0 %v1846
  %v2001 = vpop.f32.mrf.mxu0
  %v2002 = vadd.f32 0.0, %v2001
  %v2003 = vpop.f32.mrf.mxu0
  %v2004 = vadd.f32 0.0, %v2003
  %2005 = vmatmul.bf16.gmra.mxu0 %v1849
  %v2006 = vpop.f32.mrf.mxu0
  %v2007 = vadd.f32 0.0, %v2006
  %v2008 = vpop.f32.mrf.mxu0
  %v2009 = vadd.f32 0.0, %v2008
  %2010 = vmatmul.bf16.gmra.mxu0 %v1852
  %v2011 = vpop.f32.mrf.mxu0
  %v2012 = vadd.f32 0.0, %v2011
  %v2013 = vpop.f32.mrf.mxu0
  %v2014 = vadd.f32 0.0, %v2013
  %2015 = vmatmul.bf16.gmra.mxu0 %v1855
  %v2016 = vpop.f32.mrf.mxu0
  %v2017 = vadd.f32 0.0, %v2016
  %v2018 = vpop.f32.mrf.mxu0
  %v2019 = vadd.f32 0.0, %v2018
  %2020 = vmatmul.bf16.gmra.mxu0 %v1858
  %v2021 = vpop.f32.mrf.mxu0
  %v2022 = vadd.f32 0.0, %v2021
  %v2023 = vpop.f32.mrf.mxu0
  %v2024 = vadd.f32 0.0, %v2023
  %2025 = vmatmul.bf16.gmra.mxu0 %v1861
  %v2026 = vpop.f32.mrf.mxu0
  %v2027 = vadd.f32 0.0, %v2026
  %v2028 = vpop.f32.mrf.mxu0
  %v2029 = vadd.f32 0.0, %v2028
  %2030 = vmatmul.bf16.gmra.mxu0 %v1864
  %v2031 = vpop.f32.mrf.mxu0
  %v2032 = vadd.f32 0.0, %v2031
  %v2033 = vpop.f32.mrf.mxu0
  %v2034 = vadd.f32 0.0, %v2033
  %2035 = vmatmul.bf16.gmra.mxu0 %v1867
  %v2036 = vpop.f32.mrf.mxu0
  %v2037 = vadd.f32 0.0, %v2036
  %v2038 = vpop.f32.mrf.mxu0
  %v2039 = vadd.f32 0.0, %v2038
  %2040 = vmatmul.bf16.gmra.mxu0 %v1870
  %v2041 = vpop.f32.mrf.mxu0
  %v2042 = vadd.f32 0.0, %v2041
  %v2043 = vpop.f32.mrf.mxu0
  %v2044 = vadd.f32 0.0, %v2043
  %2045 = vmatmul.bf16.gmra.mxu0 %v1873
  %v2046 = vpop.f32.mrf.mxu0
  %v2047 = vadd.f32 0.0, %v2046
  %v2048 = vpop.f32.mrf.mxu0
  %v2049 = vadd.f32 0.0, %v2048
  %2050 = vmatmul.bf16.gmra.mxu0 %v1876
  %v2051 = vpop.f32.mrf.mxu0
  %v2052 = vadd.f32 0.0, %v2051
  %v2053 = vpop.f32.mrf.mxu0
  %v2054 = vadd.f32 0.0, %v2053
  %2055 = vmatmul.bf16.gmra.mxu0 %v1879
  %v2056 = vpop.f32.mrf.mxu0
  %v2057 = vadd.f32 0.0, %v2056
  %v2058 = vpop.f32.mrf.mxu0
  %v2059 = vadd.f32 0.0, %v2058
  %2060 = vmatmul.bf16.gmra.mxu0 %v1882
  %v2061 = vpop.f32.mrf.mxu0
  %v2062 = vadd.f32 0.0, %v2061
  %v2063 = vpop.f32.mrf.mxu0
  %v2064 = vadd.f32 0.0, %v2063
  %2065 = vmatmul.bf16.gmra.mxu0 %v1885
  %v2066 = vpop.f32.mrf.mxu0
  %v2067 = vadd.f32 0.0, %v2066
  %v2068 = vpop.f32.mrf.mxu0
  %v2069 = vadd.f32 0.0, %v2068
  %2070 = vmatmul.bf16.gmra.mxu0 %v1888
  %v2071 = vpop.f32.mrf.mxu0
  %v2072 = vadd.f32 0.0, %v2071
  %v2073 = vpop.f32.mrf.mxu0
  %v2074 = vadd.f32 0.0, %v2073
  %2075 = vmatmul.bf16.gmra.mxu0 %v1891
  %v2076 = vpop.f32.mrf.mxu0
  %v2077 = vadd.f32 0.0, %v2076
  %v2078 = vpop.f32.mrf.mxu0
  %v2079 = vadd.f32 0.0, %v2078
  %2080 = vmatmul.bf16.gmra.mxu0 %v1894
  %v2081 = vpop.f32.mrf.mxu0
  %v2082 = vadd.f32 0.0, %v2081
  %v2083 = vpop.f32.mrf.mxu0
  %v2084 = vadd.f32 0.0, %v2083
  %2085 = vdwg.mxu0
  %2086 = vmatpush.bf16.msra.mxu0 %v489
  %2087 = vmatpush.bf16.msra.mxu0 %v488
  %2088 = vmatpush.bf16.msra.mxu0 %v487
  %2089 = vmatpush.bf16.msra.mxu0 %v486
  %2090 = vmatpush.bf16.msra.mxu0 %v485
  %2091 = vmatpush.bf16.msra.mxu0 %v484
  %2092 = vmatpush.bf16.msra.mxu0 %v483
  %2093 = vmatpush.bf16.msra.mxu0 %v482
  %2094 = vmatmul.bf16.gmra.mxu0 %v1844
  %v2095 = vpop.f32.mrf.mxu0
  %v2096 = vadd.f32 %v1997, %v2095
  %v2097 = vpop.f32.mrf.mxu0
  %v2098 = vadd.f32 %v1999, %v2097
  %2099 = vmatmul.bf16.gmra.mxu0 %v1847
  %v2100 = vpop.f32.mrf.mxu0
  %v2101 = vadd.f32 %v2002, %v2100
  %v2102 = vpop.f32.mrf.mxu0
  %v2103 = vadd.f32 %v2004, %v2102
  %2104 = vmatmul.bf16.gmra.mxu0 %v1850
  %v2105 = vpop.f32.mrf.mxu0
  %v2106 = vadd.f32 %v2007, %v2105
  %v2107 = vpop.f32.mrf.mxu0
  %v2108 = vadd.f32 %v2009, %v2107
  %2109 = vmatmul.bf16.gmra.mxu0 %v1853
  %v2110 = vpop.f32.mrf.mxu0
  %v2111 = vadd.f32 %v2012, %v2110
  %v2112 = vpop.f32.mrf.mxu0
  %v2113 = vadd.f32 %v2014, %v2112
  %2114 = vmatmul.bf16.gmra.mxu0 %v1856
  %v2115 = vpop.f32.mrf.mxu0
  %v2116 = vadd.f32 %v2017, %v2115
  %v2117 = vpop.f32.mrf.mxu0
  %v2118 = vadd.f32 %v2019, %v2117
  %2119 = vmatmul.bf16.gmra.mxu0 %v1859
  %v2120 = vpop.f32.mrf.mxu0
  %v2121 = vadd.f32 %v2022, %v2120
  %v2122 = vpop.f32.mrf.mxu0
  %v2123 = vadd.f32 %v2024, %v2122
  %2124 = vmatmul.bf16.gmra.mxu0 %v1862
  %v2125 = vpop.f32.mrf.mxu0
  %v2126 = vadd.f32 %v2027, %v2125
  %v2127 = vpop.f32.mrf.mxu0
  %v2128 = vadd.f32 %v2029, %v2127
  %2129 = vmatmul.bf16.gmra.mxu0 %v1865
  %v2130 = vpop.f32.mrf.mxu0
  %v2131 = vadd.f32 %v2032, %v2130
  %v2132 = vpop.f32.mrf.mxu0
  %v2133 = vadd.f32 %v2034, %v2132
  %2134 = vmatmul.bf16.gmra.mxu0 %v1868
  %v2135 = vpop.f32.mrf.mxu0
  %v2136 = vadd.f32 %v2037, %v2135
  %v2137 = vpop.f32.mrf.mxu0
  %v2138 = vadd.f32 %v2039, %v2137
  %2139 = vmatmul.bf16.gmra.mxu0 %v1871
  %v2140 = vpop.f32.mrf.mxu0
  %v2141 = vadd.f32 %v2042, %v2140
  %v2142 = vpop.f32.mrf.mxu0
  %v2143 = vadd.f32 %v2044, %v2142
  %2144 = vmatmul.bf16.gmra.mxu0 %v1874
  %v2145 = vpop.f32.mrf.mxu0
  %v2146 = vadd.f32 %v2047, %v2145
  %v2147 = vpop.f32.mrf.mxu0
  %v2148 = vadd.f32 %v2049, %v2147
  %2149 = vmatmul.bf16.gmra.mxu0 %v1877
  %v2150 = vpop.f32.mrf.mxu0
  %v2151 = vadd.f32 %v2052, %v2150
  %v2152 = vpop.f32.mrf.mxu0
  %v2153 = vadd.f32 %v2054, %v2152
  %2154 = vmatmul.bf16.gmra.mxu0 %v1880
  %v2155 = vpop.f32.mrf.mxu0
  %v2156 = vadd.f32 %v2057, %v2155
  %v2157 = vpop.f32.mrf.mxu0
  %v2158 = vadd.f32 %v2059, %v2157
  %2159 = vmatmul.bf16.gmra.mxu0 %v1883
  %v2160 = vpop.f32.mrf.mxu0
  %v2161 = vadd.f32 %v2062, %v2160
  %v2162 = vpop.f32.mrf.mxu0
  %v2163 = vadd.f32 %v2064, %v2162
  %2164 = vmatmul.bf16.gmra.mxu0 %v1886
  %v2165 = vpop.f32.mrf.mxu0
  %v2166 = vadd.f32 %v2067, %v2165
  %v2167 = vpop.f32.mrf.mxu0
  %v2168 = vadd.f32 %v2069, %v2167
  %2169 = vmatmul.bf16.gmra.mxu0 %v1889
  %v2170 = vpop.f32.mrf.mxu0
  %v2171 = vadd.f32 %v2072, %v2170
  %v2172 = vpop.f32.mrf.mxu0
  %v2173 = vadd.f32 %v2074, %v2172
  %2174 = vmatmul.bf16.gmra.mxu0 %v1892
  %v2175 = vpop.f32.mrf.mxu0
  %v2176 = vadd.f32 %v2077, %v2175
  %v2177 = vpop.f32.mrf.mxu0
  %v2178 = vadd.f32 %v2079, %v2177
  %2179 = vmatmul.bf16.gmra.mxu0 %v1895
  %v2180 = vpop.f32.mrf.mxu0
  %v2181 = vadd.f32 %v2082, %v2180
  %v2182 = vpop.f32.mrf.mxu0
  %v2183 = vadd.f32 %v2084, %v2182
  %2184 = vdwg.mxu0
  %2185 = vmatpush.bf16.msra.mxu0 0
  %2186 = vmatpush.bf16.msra.mxu0 0
  %2187 = vmatpush.bf16.msra.mxu0 0
  %2188 = vmatpush.bf16.msra.mxu0 0
  %2189 = vmatpush.bf16.msra.mxu0 0
  %2190 = vmatpush.bf16.msra.mxu0 0
  %2191 = vmatpush.bf16.msra.mxu0 %v491
  %2192 = vmatpush.bf16.msra.mxu0 %v490
  %2193 = vmatmul.bf16.gmra.mxu0 %v1934
  %v2194 = vpop.f32.mrf.mxu0
  %v2195 = vadd.f32 %v2096, %v2194
  %v2196 = vpop.f32.mrf.mxu0
  %v2197 = vadd.f32 %v2098, %v2196
  %2198 = vmatmul.bf16.gmra.mxu0 %v1937
  %v2199 = vpop.f32.mrf.mxu0
  %v2200 = vadd.f32 %v2101, %v2199
  %v2201 = vpop.f32.mrf.mxu0
  %v2202 = vadd.f32 %v2103, %v2201
  %2203 = vmatmul.bf16.gmra.mxu0 %v1940
  %v2204 = vpop.f32.mrf.mxu0
  %v2205 = vadd.f32 %v2106, %v2204
  %v2206 = vpop.f32.mrf.mxu0
  %v2207 = vadd.f32 %v2108, %v2206
  %2208 = vmatmul.bf16.gmra.mxu0 %v1943
  %v2209 = vpop.f32.mrf.mxu0
  %v2210 = vadd.f32 %v2111, %v2209
  %v2211 = vpop.f32.mrf.mxu0
  %v2212 = vadd.f32 %v2113, %v2211
  %2213 = vmatmul.bf16.gmra.mxu0 %v1946
  %v2214 = vpop.f32.mrf.mxu0
  %v2215 = vadd.f32 %v2116, %v2214
  %v2216 = vpop.f32.mrf.mxu0
  %v2217 = vadd.f32 %v2118, %v2216
  %2218 = vmatmul.bf16.gmra.mxu0 %v1949
  %v2219 = vpop.f32.mrf.mxu0
  %v2220 = vadd.f32 %v2121, %v2219
  %v2221 = vpop.f32.mrf.mxu0
  %v2222 = vadd.f32 %v2123, %v2221
  %2223 = vmatmul.bf16.gmra.mxu0 %v1952
  %v2224 = vpop.f32.mrf.mxu0
  %v2225 = vadd.f32 %v2126, %v2224
  %v2226 = vpop.f32.mrf.mxu0
  %v2227 = vadd.f32 %v2128, %v2226
  %2228 = vmatmul.bf16.gmra.mxu0 %v1955
  %v2229 = vpop.f32.mrf.mxu0
  %v2230 = vadd.f32 %v2131, %v2229
  %v2231 = vpop.f32.mrf.mxu0
  %v2232 = vadd.f32 %v2133, %v2231
  %2233 = vmatmul.bf16.gmra.mxu0 %v1958
  %v2234 = vpop.f32.mrf.mxu0
  %v2235 = vadd.f32 %v2136, %v2234
  %v2236 = vpop.f32.mrf.mxu0
  %v2237 = vadd.f32 %v2138, %v2236
  %2238 = vmatmul.bf16.gmra.mxu0 %v1961
  %v2239 = vpop.f32.mrf.mxu0
  %v2240 = vadd.f32 %v2141, %v2239
  %v2241 = vpop.f32.mrf.mxu0
  %v2242 = vadd.f32 %v2143, %v2241
  %2243 = vmatmul.bf16.gmra.mxu0 %v1964
  %v2244 = vpop.f32.mrf.mxu0
  %v2245 = vadd.f32 %v2146, %v2244
  %v2246 = vpop.f32.mrf.mxu0
  %v2247 = vadd.f32 %v2148, %v2246
  %2248 = vmatmul.bf16.gmra.mxu0 %v1967
  %v2249 = vpop.f32.mrf.mxu0
  %v2250 = vadd.f32 %v2151, %v2249
  %v2251 = vpop.f32.mrf.mxu0
  %v2252 = vadd.f32 %v2153, %v2251
  %2253 = vmatmul.bf16.gmra.mxu0 %v1970
  %v2254 = vpop.f32.mrf.mxu0
  %v2255 = vadd.f32 %v2156, %v2254
  %v2256 = vpop.f32.mrf.mxu0
  %v2257 = vadd.f32 %v2158, %v2256
  %2258 = vmatmul.bf16.gmra.mxu0 %v1973
  %v2259 = vpop.f32.mrf.mxu0
  %v2260 = vadd.f32 %v2161, %v2259
  %v2261 = vpop.f32.mrf.mxu0
  %v2262 = vadd.f32 %v2163, %v2261
  %2263 = vmatmul.bf16.gmra.mxu0 %v1976
  %v2264 = vpop.f32.mrf.mxu0
  %v2265 = vadd.f32 %v2166, %v2264
  %v2266 = vpop.f32.mrf.mxu0
  %v2267 = vadd.f32 %v2168, %v2266
  %2268 = vmatmul.bf16.gmra.mxu0 %v1979
  %v2269 = vpop.f32.mrf.mxu0
  %v2270 = vadd.f32 %v2171, %v2269
  %v2271 = vpop.f32.mrf.mxu0
  %v2272 = vadd.f32 %v2173, %v2271
  %2273 = vmatmul.bf16.gmra.mxu0 %v1982
  %v2274 = vpop.f32.mrf.mxu0
  %v2275 = vadd.f32 %v2176, %v2274
  %v2276 = vpop.f32.mrf.mxu0
  %v2277 = vadd.f32 %v2178, %v2276
  %2278 = vmatmul.bf16.gmra.mxu0 %v1985
  %v2279 = vpop.f32.mrf.mxu0
  %v2280 = vadd.f32 %v2181, %v2279
  %v2281 = vpop.f32.mrf.mxu0
  %v2282 = vadd.f32 %v2183, %v2281
  %2283 = vdwg.mxu0
  %v2284 = vld [vmem:[%s3] sm:$0xff]
  %v2285 = vld [vmem:[%s3 + $0x8] sm:$0xf]
  %v2286 = vld [vmem:[%s3 + $0xc] sm:$0xff]
  %v2287 = vld [vmem:[%s3 + $0x14] sm:$0xf]
  %v2288 = vld [vmem:[%s3 + $0x18] sm:$0xff]
  %v2289 = vld [vmem:[%s3 + $0x20] sm:$0xf]
  %v2290 = vld [vmem:[%s3 + $0x24] sm:$0xff]
  %v2291 = vld [vmem:[%s3 + $0x2c] sm:$0xf]
  %v2292 = vld [vmem:[%s3 + $0x30] sm:$0xff]
  %v2293 = vld [vmem:[%s3 + $0x38] sm:$0xf]
  %v2294 = vld [vmem:[%s3 + $0x3c] sm:$0xff]
  %v2295 = vld [vmem:[%s3 + $0x44] sm:$0xf]
  %v2296 = vld [vmem:[%s3 + $0x48] sm:$0xff]
  %v2297 = vld [vmem:[%s3 + $0x50] sm:$0xf]
  %v2298 = vld [vmem:[%s3 + $0x54] sm:$0xff]
  %v2299 = vld [vmem:[%s3 + $0x5c] sm:$0xf]
  %v2300 = vld [vmem:[%s3 + $0x60] sm:$0xff]
  %v2301 = vld [vmem:[%s3 + $0x68] sm:$0xf]
  %v2302 = vld [vmem:[%s3 + $0x6c] sm:$0xff]
  %v2303 = vld [vmem:[%s3 + $0x74] sm:$0xf]
  %v2304 = vld [vmem:[%s3 + $0x78] sm:$0xff]
  %v2305 = vld [vmem:[%s3 + $0x80] sm:$0xf]
  %v2306 = vld [vmem:[%s3 + $0x84] sm:$0xff]
  %v2307 = vld [vmem:[%s3 + $0x8c] sm:$0xf]
  %v2308 = vld [vmem:[%s3 + $0x90] sm:$0xff]
  %v2309 = vld [vmem:[%s3 + $0x98] sm:$0xf]
  %v2310 = vld [vmem:[%s3 + $0x9c] sm:$0xff]
  %v2311 = vld [vmem:[%s3 + $0xa4] sm:$0xf]
  %v2312 = vld [vmem:[%s3 + $0xa8] sm:$0xff]
  %v2313 = vld [vmem:[%s3 + $0xb0] sm:$0xf]
  %v2314 = vld [vmem:[%s3 + $0xb4] sm:$0xff]
  %v2315 = vld [vmem:[%s3 + $0xbc] sm:$0xf]
  %v2316 = vld [vmem:[%s3 + $0xc0] sm:$0xff]
  %v2317 = vld [vmem:[%s3 + $0xc8] sm:$0xf]
  %v2318 = vld [vmem:[%s3 + $0xcc] sm:$0xff]
  %v2319 = vld [vmem:[%s3 + $0xd4] sm:$0xf]
  %v2320 = vld [vmem:[%s3 + $0xd8] sm:$0xff]
  %v2321 = vld [vmem:[%s3 + $0xe0] sm:$0xf]
  %v2322 = vld [vmem:[%s3 + $0xe4] sm:$0xff]
  %v2323 = vld [vmem:[%s3 + $0xec] sm:$0xf]
  %v2324 = vld [vmem:[%s3 + $0xf0] sm:$0xff]
  %v2325 = vld [vmem:[%s3 + $0xf8] sm:$0xf]
  %v2326 = vld [vmem:[%s3 + $0xfc] sm:$0xff]
  %v2327 = vld [vmem:[%s3 + $0x104] sm:$0xf]
  %v2328 = vld [vmem:[%s3 + $0x108] sm:$0xff]
  %v2329 = vld [vmem:[%s3 + $0x110] sm:$0xf]
  %v2330 = vld [vmem:[%s3 + $0x114] sm:$0xff]
  %v2331 = vld [vmem:[%s3 + $0x11c] sm:$0xf]
  %v2332 = vld [vmem:[%s3 + $0x120] sm:$0xff]
  %v2333 = vld [vmem:[%s3 + $0x128] sm:$0xf]
  %v2334 = vld [vmem:[%s3 + $0x12c] sm:$0xff]
  %v2335 = vld [vmem:[%s3 + $0x134] sm:$0xf]
  %v2336 = vld [vmem:[%s3 + $0x138] sm:$0xff]
  %v2337 = vld [vmem:[%s3 + $0x140] sm:$0xf]
  %v2338 = vld [vmem:[%s3 + $0x144] sm:$0xff]
  %v2339 = vld [vmem:[%s3 + $0x14c] sm:$0xf]
  %v2340 = vld [vmem:[%s3 + $0x150] sm:$0xff]
  %v2341 = vld [vmem:[%s3 + $0x158] sm:$0xf]
  %v2342 = vld [vmem:[%s3 + $0x15c] sm:$0xff]
  %v2343 = vld [vmem:[%s3 + $0x164] sm:$0xf]
  %v2344 = vld [vmem:[%s3 + $0x168] sm:$0xff]
  %v2345 = vld [vmem:[%s3 + $0x170] sm:$0xf]
  %v2346 = vld [vmem:[%s3 + $0x174] sm:$0xff]
  %v2347 = vld [vmem:[%s3 + $0x17c] sm:$0xf]
  %v2348 = vld [vmem:[%s3 + $0x180] sm:$0xff]
  %v2349 = vld [vmem:[%s3 + $0x188] sm:$0xf]
  %v2350 = vld [vmem:[%s3 + $0x18c] sm:$0xff]
  %v2351 = vld [vmem:[%s3 + $0x194] sm:$0xf]
  %v2352 = vld [vmem:[%s3 + $0x198] sm:$0xff]
  %v2353 = vld [vmem:[%s3 + $0x1a0] sm:$0xf]
  %v2354 = vld [vmem:[%s3 + $0x1a4] sm:$0xff]
  %v2355 = vld [vmem:[%s3 + $0x1ac] sm:$0xf]
  %v2428 = vunpack.c.l.b16 %v2284
  %v2429 = vunpack.c.h.b16 %v2284
  %v2430 = vunpack.c.l.b16 %v2285
  %v2431 = vunpack.c.l.b16 %v2286
  %v2432 = vunpack.c.h.b16 %v2286
  %v2433 = vunpack.c.l.b16 %v2287
  %v2434 = vunpack.c.l.b16 %v2288
  %v2435 = vunpack.c.h.b16 %v2288
  %v2436 = vunpack.c.l.b16 %v2289
  %v2437 = vunpack.c.l.b16 %v2290
  %v2438 = vunpack.c.h.b16 %v2290
  %v2439 = vunpack.c.l.b16 %v2291
  %v2440 = vunpack.c.l.b16 %v2292
  %v2441 = vunpack.c.h.b16 %v2292
  %v2442 = vunpack.c.l.b16 %v2293
  %v2443 = vunpack.c.l.b16 %v2294
  %v2444 = vunpack.c.h.b16 %v2294
  %v2445 = vunpack.c.l.b16 %v2295
  %v2446 = vunpack.c.l.b16 %v2296
  %v2447 = vunpack.c.h.b16 %v2296
  %v2448 = vunpack.c.l.b16 %v2297
  %v2449 = vunpack.c.l.b16 %v2298
  %v2450 = vunpack.c.h.b16 %v2298
  %v2451 = vunpack.c.l.b16 %v2299
  %v2452 = vunpack.c.l.b16 %v2300
  %v2453 = vunpack.c.h.b16 %v2300
  %v2454 = vunpack.c.l.b16 %v2301
  %v2455 = vunpack.c.l.b16 %v2302
  %v2456 = vunpack.c.h.b16 %v2302
  %v2457 = vunpack.c.l.b16 %v2303
  %v2458 = vunpack.c.l.b16 %v2304
  %v2459 = vunpack.c.h.b16 %v2304
  %v2460 = vunpack.c.l.b16 %v2305
  %v2461 = vunpack.c.l.b16 %v2306
  %v2462 = vunpack.c.h.b16 %v2306
  %v2463 = vunpack.c.l.b16 %v2307
  %v2464 = vunpack.c.l.b16 %v2308
  %v2465 = vunpack.c.h.b16 %v2308
  %v2466 = vunpack.c.l.b16 %v2309
  %v2467 = vunpack.c.l.b16 %v2310
  %v2468 = vunpack.c.h.b16 %v2310
  %v2469 = vunpack.c.l.b16 %v2311
  %v2470 = vunpack.c.l.b16 %v2312
  %v2471 = vunpack.c.h.b16 %v2312
  %v2472 = vunpack.c.l.b16 %v2313
  %v2473 = vunpack.c.l.b16 %v2314
  %v2474 = vunpack.c.h.b16 %v2314
  %v2475 = vunpack.c.l.b16 %v2315
  %v2476 = vunpack.c.l.b16 %v2316
  %v2477 = vunpack.c.h.b16 %v2316
  %v2478 = vunpack.c.l.b16 %v2317
  %v2479 = vunpack.c.l.b16 %v2318
  %v2480 = vunpack.c.h.b16 %v2318
  %v2481 = vunpack.c.l.b16 %v2319
  %v2482 = vunpack.c.l.b16 %v2320
  %v2483 = vunpack.c.h.b16 %v2320
  %v2484 = vunpack.c.l.b16 %v2321
  %v2485 = vunpack.c.l.b16 %v2322
  %v2486 = vunpack.c.h.b16 %v2322
  %v2487 = vunpack.c.l.b16 %v2323
  %v2488 = vunpack.c.l.b16 %v2324
  %v2489 = vunpack.c.h.b16 %v2324
  %v2490 = vunpack.c.l.b16 %v2325
  %v2491 = vunpack.c.l.b16 %v2326
  %v2492 = vunpack.c.h.b16 %v2326
  %v2493 = vunpack.c.l.b16 %v2327
  %v2494 = vunpack.c.l.b16 %v2328
  %v2495 = vunpack.c.h.b16 %v2328
  %v2496 = vunpack.c.l.b16 %v2329
  %v2497 = vunpack.c.l.b16 %v2330
  %v2498 = vunpack.c.h.b16 %v2330
  %v2499 = vunpack.c.l.b16 %v2331
  %v2500 = vunpack.c.l.b16 %v2332
  %v2501 = vunpack.c.h.b16 %v2332
  %v2502 = vunpack.c.l.b16 %v2333
  %v2503 = vunpack.c.l.b16 %v2334
  %v2504 = vunpack.c.h.b16 %v2334
  %v2505 = vunpack.c.l.b16 %v2335
  %v2506 = vunpack.c.l.b16 %v2336
  %v2507 = vunpack.c.h.b16 %v2336
  %v2508 = vunpack.c.l.b16 %v2337
  %v2509 = vunpack.c.l.b16 %v2338
  %v2510 = vunpack.c.h.b16 %v2338
  %v2511 = vunpack.c.l.b16 %v2339
  %v2512 = vunpack.c.l.b16 %v2340
  %v2513 = vunpack.c.h.b16 %v2340
  %v2514 = vunpack.c.l.b16 %v2341
  %v2515 = vunpack.c.l.b16 %v2342
  %v2516 = vunpack.c.h.b16 %v2342
  %v2517 = vunpack.c.l.b16 %v2343
  %v2518 = vunpack.c.l.b16 %v2344
  %v2519 = vunpack.c.h.b16 %v2344
  %v2520 = vunpack.c.l.b16 %v2345
  %v2521 = vunpack.c.l.b16 %v2346
  %v2522 = vunpack.c.h.b16 %v2346
  %v2523 = vunpack.c.l.b16 %v2347
  %v2524 = vunpack.c.l.b16 %v2348
  %v2525 = vunpack.c.h.b16 %v2348
  %v2526 = vunpack.c.l.b16 %v2349
  %v2527 = vunpack.c.l.b16 %v2350
  %v2528 = vunpack.c.h.b16 %v2350
  %v2529 = vunpack.c.l.b16 %v2351
  %v2530 = vunpack.c.l.b16 %v2352
  %v2531 = vunpack.c.h.b16 %v2352
  %v2532 = vunpack.c.l.b16 %v2353
  %v2533 = vunpack.c.l.b16 %v2354
  %v2534 = vunpack.c.h.b16 %v2354
  %v2535 = vunpack.c.l.b16 %v2355
  %v2536 = vpack.c.b16 %v2431, %v2428
  %v2537 = vpack.c.b16 %v2432, %v2429
  %v2538 = vpack.c.b16 %v2433, %v2430
  %v2539 = vpack.c.b16 %v2437, %v2434
  %v2540 = vpack.c.b16 %v2438, %v2435
  %v2541 = vpack.c.b16 %v2439, %v2436
  %v2542 = vpack.c.b16 %v2443, %v2440
  %v2543 = vpack.c.b16 %v2444, %v2441
  %v2544 = vpack.c.b16 %v2445, %v2442
  %v2545 = vpack.c.b16 %v2449, %v2446
  %v2546 = vpack.c.b16 %v2450, %v2447
  %v2547 = vpack.c.b16 %v2451, %v2448
  %v2548 = vpack.c.b16 %v2455, %v2452
  %v2549 = vpack.c.b16 %v2456, %v2453
  %v2550 = vpack.c.b16 %v2457, %v2454
  %v2551 = vpack.c.b16 %v2461, %v2458
  %v2552 = vpack.c.b16 %v2462, %v2459
  %v2553 = vpack.c.b16 %v2463, %v2460
  %v2554 = vpack.c.b16 %v2467, %v2464
  %v2555 = vpack.c.b16 %v2468, %v2465
  %v2556 = vpack.c.b16 %v2469, %v2466
  %v2557 = vpack.c.b16 %v2473, %v2470
  %v2558 = vpack.c.b16 %v2474, %v2471
  %v2559 = vpack.c.b16 %v2475, %v2472
  %v2560 = vpack.c.b16 %v2479, %v2476
  %v2561 = vpack.c.b16 %v2480, %v2477
  %v2562 = vpack.c.b16 %v2481, %v2478
  %v2563 = vpack.c.b16 %v2485, %v2482
  %v2564 = vpack.c.b16 %v2486, %v2483
  %v2565 = vpack.c.b16 %v2487, %v2484
  %v2566 = vpack.c.b16 %v2491, %v2488
  %v2567 = vpack.c.b16 %v2492, %v2489
  %v2568 = vpack.c.b16 %v2493, %v2490
  %v2569 = vpack.c.b16 %v2497, %v2494
  %v2570 = vpack.c.b16 %v2498, %v2495
  %v2571 = vpack.c.b16 %v2499, %v2496
  %v2572 = vpack.c.b16 %v2503, %v2500
  %v2573 = vpack.c.b16 %v2504, %v2501
  %v2574 = vpack.c.b16 %v2505, %v2502
  %v2575 = vpack.c.b16 %v2509, %v2506
  %v2576 = vpack.c.b16 %v2510, %v2507
  %v2577 = vpack.c.b16 %v2511, %v2508
  %v2578 = vpack.c.b16 %v2515, %v2512
  %v2579 = vpack.c.b16 %v2516, %v2513
  %v2580 = vpack.c.b16 %v2517, %v2514
  %v2581 = vpack.c.b16 %v2521, %v2518
  %v2582 = vpack.c.b16 %v2522, %v2519
  %v2583 = vpack.c.b16 %v2523, %v2520
  %v2584 = vpack.c.b16 %v2527, %v2524
  %v2585 = vpack.c.b16 %v2528, %v2525
  %v2586 = vpack.c.b16 %v2529, %v2526
  %v2587 = vpack.c.b16 %v2533, %v2530
  %v2588 = vpack.c.b16 %v2534, %v2531
  %v2589 = vpack.c.b16 %v2535, %v2532
  %v2627 = vsel %vm510, %v2538, 0
  %v2630 = vsel %vm510, %v2541, 0
  %v2633 = vsel %vm510, %v2544, 0
  %v2636 = vsel %vm510, %v2547, 0
  %v2639 = vsel %vm510, %v2550, 0
  %v2642 = vsel %vm510, %v2553, 0
  %v2645 = vsel %vm510, %v2556, 0
  %v2648 = vsel %vm510, %v2559, 0
  %v2651 = vsel %vm510, %v2562, 0
  %v2654 = vsel %vm510, %v2565, 0
  %v2657 = vsel %vm510, %v2568, 0
  %v2660 = vsel %vm510, %v2571, 0
  %v2663 = vsel %vm510, %v2574, 0
  %v2666 = vsel %vm510, %v2577, 0
  %v2669 = vsel %vm510, %v2580, 0
  %v2672 = vsel %vm510, %v2583, 0
  %v2675 = vsel %vm510, %v2586, 0
  %v2678 = vsel %vm510, %v2589, 0
  %2680 = vmatpush.bf16.msra.mxu0 %v481
  %2681 = vmatpush.bf16.msra.mxu0 %v480
  %2682 = vmatpush.bf16.msra.mxu0 %v479
  %2683 = vmatpush.bf16.msra.mxu0 %v478
  %2684 = vmatpush.bf16.msra.mxu0 %v477
  %2685 = vmatpush.bf16.msra.mxu0 %v476
  %2686 = vmatpush.bf16.msra.mxu0 %v475
  %2687 = vmatpush.bf16.msra.mxu0 %v474
  %2688 = vmatmul.bf16.gmra.mxu0 %v2536
  %v2689 = vpop.f32.mrf.mxu0
  %v2690 = vadd.f32 0.0, %v2689
  %v2691 = vpop.f32.mrf.mxu0
  %v2692 = vadd.f32 0.0, %v2691
  %2693 = vmatmul.bf16.gmra.mxu0 %v2539
  %v2694 = vpop.f32.mrf.mxu0
  %v2695 = vadd.f32 0.0, %v2694
  %v2696 = vpop.f32.mrf.mxu0
  %v2697 = vadd.f32 0.0, %v2696
  %2698 = vmatmul.bf16.gmra.mxu0 %v2542
  %v2699 = vpop.f32.mrf.mxu0
  %v2700 = vadd.f32 0.0, %v2699
  %v2701 = vpop.f32.mrf.mxu0
  %v2702 = vadd.f32 0.0, %v2701
  %2703 = vmatmul.bf16.gmra.mxu0 %v2545
  %v2704 = vpop.f32.mrf.mxu0
  %v2705 = vadd.f32 0.0, %v2704
  %v2706 = vpop.f32.mrf.mxu0
  %v2707 = vadd.f32 0.0, %v2706
  %2708 = vmatmul.bf16.gmra.mxu0 %v2548
  %v2709 = vpop.f32.mrf.mxu0
  %v2710 = vadd.f32 0.0, %v2709
  %v2711 = vpop.f32.mrf.mxu0
  %v2712 = vadd.f32 0.0, %v2711
  %2713 = vmatmul.bf16.gmra.mxu0 %v2551
  %v2714 = vpop.f32.mrf.mxu0
  %v2715 = vadd.f32 0.0, %v2714
  %v2716 = vpop.f32.mrf.mxu0
  %v2717 = vadd.f32 0.0, %v2716
  %2718 = vmatmul.bf16.gmra.mxu0 %v2554
  %v2719 = vpop.f32.mrf.mxu0
  %v2720 = vadd.f32 0.0, %v2719
  %v2721 = vpop.f32.mrf.mxu0
  %v2722 = vadd.f32 0.0, %v2721
  %2723 = vmatmul.bf16.gmra.mxu0 %v2557
  %v2724 = vpop.f32.mrf.mxu0
  %v2725 = vadd.f32 0.0, %v2724
  %v2726 = vpop.f32.mrf.mxu0
  %v2727 = vadd.f32 0.0, %v2726
  %2728 = vmatmul.bf16.gmra.mxu0 %v2560
  %v2729 = vpop.f32.mrf.mxu0
  %v2730 = vadd.f32 0.0, %v2729
  %v2731 = vpop.f32.mrf.mxu0
  %v2732 = vadd.f32 0.0, %v2731
  %2733 = vmatmul.bf16.gmra.mxu0 %v2563
  %v2734 = vpop.f32.mrf.mxu0
  %v2735 = vadd.f32 0.0, %v2734
  %v2736 = vpop.f32.mrf.mxu0
  %v2737 = vadd.f32 0.0, %v2736
  %2738 = vmatmul.bf16.gmra.mxu0 %v2566
  %v2739 = vpop.f32.mrf.mxu0
  %v2740 = vadd.f32 0.0, %v2739
  %v2741 = vpop.f32.mrf.mxu0
  %v2742 = vadd.f32 0.0, %v2741
  %2743 = vmatmul.bf16.gmra.mxu0 %v2569
  %v2744 = vpop.f32.mrf.mxu0
  %v2745 = vadd.f32 0.0, %v2744
  %v2746 = vpop.f32.mrf.mxu0
  %v2747 = vadd.f32 0.0, %v2746
  %2748 = vmatmul.bf16.gmra.mxu0 %v2572
  %v2749 = vpop.f32.mrf.mxu0
  %v2750 = vadd.f32 0.0, %v2749
  %v2751 = vpop.f32.mrf.mxu0
  %v2752 = vadd.f32 0.0, %v2751
  %2753 = vmatmul.bf16.gmra.mxu0 %v2575
  %v2754 = vpop.f32.mrf.mxu0
  %v2755 = vadd.f32 0.0, %v2754
  %v2756 = vpop.f32.mrf.mxu0
  %v2757 = vadd.f32 0.0, %v2756
  %2758 = vmatmul.bf16.gmra.mxu0 %v2578
  %v2759 = vpop.f32.mrf.mxu0
  %v2760 = vadd.f32 0.0, %v2759
  %v2761 = vpop.f32.mrf.mxu0
  %v2762 = vadd.f32 0.0, %v2761
  %2763 = vmatmul.bf16.gmra.mxu0 %v2581
  %v2764 = vpop.f32.mrf.mxu0
  %v2765 = vadd.f32 0.0, %v2764
  %v2766 = vpop.f32.mrf.mxu0
  %v2767 = vadd.f32 0.0, %v2766
  %2768 = vmatmul.bf16.gmra.mxu0 %v2584
  %v2769 = vpop.f32.mrf.mxu0
  %v2770 = vadd.f32 0.0, %v2769
  %v2771 = vpop.f32.mrf.mxu0
  %v2772 = vadd.f32 0.0, %v2771
  %2773 = vmatmul.bf16.gmra.mxu0 %v2587
  %v2774 = vpop.f32.mrf.mxu0
  %v2775 = vadd.f32 0.0, %v2774
  %v2776 = vpop.f32.mrf.mxu0
  %v2777 = vadd.f32 0.0, %v2776
  %2778 = vdwg.mxu0
  %2779 = vmatpush.bf16.msra.mxu0 %v489
  %2780 = vmatpush.bf16.msra.mxu0 %v488
  %2781 = vmatpush.bf16.msra.mxu0 %v487
  %2782 = vmatpush.bf16.msra.mxu0 %v486
  %2783 = vmatpush.bf16.msra.mxu0 %v485
  %2784 = vmatpush.bf16.msra.mxu0 %v484
  %2785 = vmatpush.bf16.msra.mxu0 %v483
  %2786 = vmatpush.bf16.msra.mxu0 %v482
  %2787 = vmatmul.bf16.gmra.mxu0 %v2537
  %v2788 = vpop.f32.mrf.mxu0
  %v2789 = vadd.f32 %v2690, %v2788
  %v2790 = vpop.f32.mrf.mxu0
  %v2791 = vadd.f32 %v2692, %v2790
  %2792 = vmatmul.bf16.gmra.mxu0 %v2540
  %v2793 = vpop.f32.mrf.mxu0
  %v2794 = vadd.f32 %v2695, %v2793
  %v2795 = vpop.f32.mrf.mxu0
  %v2796 = vadd.f32 %v2697, %v2795
  %2797 = vmatmul.bf16.gmra.mxu0 %v2543
  %v2798 = vpop.f32.mrf.mxu0
  %v2799 = vadd.f32 %v2700, %v2798
  %v2800 = vpop.f32.mrf.mxu0
  %v2801 = vadd.f32 %v2702, %v2800
  %2802 = vmatmul.bf16.gmra.mxu0 %v2546
  %v2803 = vpop.f32.mrf.mxu0
  %v2804 = vadd.f32 %v2705, %v2803
  %v2805 = vpop.f32.mrf.mxu0
  %v2806 = vadd.f32 %v2707, %v2805
  %2807 = vmatmul.bf16.gmra.mxu0 %v2549
  %v2808 = vpop.f32.mrf.mxu0
  %v2809 = vadd.f32 %v2710, %v2808
  %v2810 = vpop.f32.mrf.mxu0
  %v2811 = vadd.f32 %v2712, %v2810
  %2812 = vmatmul.bf16.gmra.mxu0 %v2552
  %v2813 = vpop.f32.mrf.mxu0
  %v2814 = vadd.f32 %v2715, %v2813
  %v2815 = vpop.f32.mrf.mxu0
  %v2816 = vadd.f32 %v2717, %v2815
  %2817 = vmatmul.bf16.gmra.mxu0 %v2555
  %v2818 = vpop.f32.mrf.mxu0
  %v2819 = vadd.f32 %v2720, %v2818
  %v2820 = vpop.f32.mrf.mxu0
  %v2821 = vadd.f32 %v2722, %v2820
  %2822 = vmatmul.bf16.gmra.mxu0 %v2558
  %v2823 = vpop.f32.mrf.mxu0
  %v2824 = vadd.f32 %v2725, %v2823
  %v2825 = vpop.f32.mrf.mxu0
  %v2826 = vadd.f32 %v2727, %v2825
  %2827 = vmatmul.bf16.gmra.mxu0 %v2561
  %v2828 = vpop.f32.mrf.mxu0
  %v2829 = vadd.f32 %v2730, %v2828
  %v2830 = vpop.f32.mrf.mxu0
  %v2831 = vadd.f32 %v2732, %v2830
  %2832 = vmatmul.bf16.gmra.mxu0 %v2564
  %v2833 = vpop.f32.mrf.mxu0
  %v2834 = vadd.f32 %v2735, %v2833
  %v2835 = vpop.f32.mrf.mxu0
  %v2836 = vadd.f32 %v2737, %v2835
  %2837 = vmatmul.bf16.gmra.mxu0 %v2567
  %v2838 = vpop.f32.mrf.mxu0
  %v2839 = vadd.f32 %v2740, %v2838
  %v2840 = vpop.f32.mrf.mxu0
  %v2841 = vadd.f32 %v2742, %v2840
  %2842 = vmatmul.bf16.gmra.mxu0 %v2570
  %v2843 = vpop.f32.mrf.mxu0
  %v2844 = vadd.f32 %v2745, %v2843
  %v2845 = vpop.f32.mrf.mxu0
  %v2846 = vadd.f32 %v2747, %v2845
  %2847 = vmatmul.bf16.gmra.mxu0 %v2573
  %v2848 = vpop.f32.mrf.mxu0
  %v2849 = vadd.f32 %v2750, %v2848
  %v2850 = vpop.f32.mrf.mxu0
  %v2851 = vadd.f32 %v2752, %v2850
  %2852 = vmatmul.bf16.gmra.mxu0 %v2576
  %v2853 = vpop.f32.mrf.mxu0
  %v2854 = vadd.f32 %v2755, %v2853
  %v2855 = vpop.f32.mrf.mxu0
  %v2856 = vadd.f32 %v2757, %v2855
  %2857 = vmatmul.bf16.gmra.mxu0 %v2579
  %v2858 = vpop.f32.mrf.mxu0
  %v2859 = vadd.f32 %v2760, %v2858
  %v2860 = vpop.f32.mrf.mxu0
  %v2861 = vadd.f32 %v2762, %v2860
  %2862 = vmatmul.bf16.gmra.mxu0 %v2582
  %v2863 = vpop.f32.mrf.mxu0
  %v2864 = vadd.f32 %v2765, %v2863
  %v2865 = vpop.f32.mrf.mxu0
  %v2866 = vadd.f32 %v2767, %v2865
  %2867 = vmatmul.bf16.gmra.mxu0 %v2585
  %v2868 = vpop.f32.mrf.mxu0
  %v2869 = vadd.f32 %v2770, %v2868
  %v2870 = vpop.f32.mrf.mxu0
  %v2871 = vadd.f32 %v2772, %v2870
  %2872 = vmatmul.bf16.gmra.mxu0 %v2588
  %v2873 = vpop.f32.mrf.mxu0
  %v2874 = vadd.f32 %v2775, %v2873
  %v2875 = vpop.f32.mrf.mxu0
  %v2876 = vadd.f32 %v2777, %v2875
  %2877 = vdwg.mxu0
  %2878 = vmatpush.bf16.msra.mxu0 0
  %2879 = vmatpush.bf16.msra.mxu0 0
  %2880 = vmatpush.bf16.msra.mxu0 0
  %2881 = vmatpush.bf16.msra.mxu0 0
  %2882 = vmatpush.bf16.msra.mxu0 0
  %2883 = vmatpush.bf16.msra.mxu0 0
  %2884 = vmatpush.bf16.msra.mxu0 %v491
  %2885 = vmatpush.bf16.msra.mxu0 %v490
  %2886 = vmatmul.bf16.gmra.mxu0 %v2627
  %v2887 = vpop.f32.mrf.mxu0
  %v2888 = vadd.f32 %v2789, %v2887
  %v2889 = vpop.f32.mrf.mxu0
  %v2890 = vadd.f32 %v2791, %v2889
  %2891 = vmatmul.bf16.gmra.mxu0 %v2630
  %v2892 = vpop.f32.mrf.mxu0
  %v2893 = vadd.f32 %v2794, %v2892
  %v2894 = vpop.f32.mrf.mxu0
  %v2895 = vadd.f32 %v2796, %v2894
  %2896 = vmatmul.bf16.gmra.mxu0 %v2633
  %v2897 = vpop.f32.mrf.mxu0
  %v2898 = vadd.f32 %v2799, %v2897
  %v2899 = vpop.f32.mrf.mxu0
  %v2900 = vadd.f32 %v2801, %v2899
  %2901 = vmatmul.bf16.gmra.mxu0 %v2636
  %v2902 = vpop.f32.mrf.mxu0
  %v2903 = vadd.f32 %v2804, %v2902
  %v2904 = vpop.f32.mrf.mxu0
  %v2905 = vadd.f32 %v2806, %v2904
  %2906 = vmatmul.bf16.gmra.mxu0 %v2639
  %v2907 = vpop.f32.mrf.mxu0
  %v2908 = vadd.f32 %v2809, %v2907
  %v2909 = vpop.f32.mrf.mxu0
  %v2910 = vadd.f32 %v2811, %v2909
  %2911 = vmatmul.bf16.gmra.mxu0 %v2642
  %v2912 = vpop.f32.mrf.mxu0
  %v2913 = vadd.f32 %v2814, %v2912
  %v2914 = vpop.f32.mrf.mxu0
  %v2915 = vadd.f32 %v2816, %v2914
  %2916 = vmatmul.bf16.gmra.mxu0 %v2645
  %v2917 = vpop.f32.mrf.mxu0
  %v2918 = vadd.f32 %v2819, %v2917
  %v2919 = vpop.f32.mrf.mxu0
  %v2920 = vadd.f32 %v2821, %v2919
  %2921 = vmatmul.bf16.gmra.mxu0 %v2648
  %v2922 = vpop.f32.mrf.mxu0
  %v2923 = vadd.f32 %v2824, %v2922
  %v2924 = vpop.f32.mrf.mxu0
  %v2925 = vadd.f32 %v2826, %v2924
  %2926 = vmatmul.bf16.gmra.mxu0 %v2651
  %v2927 = vpop.f32.mrf.mxu0
  %v2928 = vadd.f32 %v2829, %v2927
  %v2929 = vpop.f32.mrf.mxu0
  %v2930 = vadd.f32 %v2831, %v2929
  %2931 = vmatmul.bf16.gmra.mxu0 %v2654
  %v2932 = vpop.f32.mrf.mxu0
  %v2933 = vadd.f32 %v2834, %v2932
  %v2934 = vpop.f32.mrf.mxu0
  %v2935 = vadd.f32 %v2836, %v2934
  %2936 = vmatmul.bf16.gmra.mxu0 %v2657
  %v2937 = vpop.f32.mrf.mxu0
  %v2938 = vadd.f32 %v2839, %v2937
  %v2939 = vpop.f32.mrf.mxu0
  %v2940 = vadd.f32 %v2841, %v2939
  %2941 = vmatmul.bf16.gmra.mxu0 %v2660
  %v2942 = vpop.f32.mrf.mxu0
  %v2943 = vadd.f32 %v2844, %v2942
  %v2944 = vpop.f32.mrf.mxu0
  %v2945 = vadd.f32 %v2846, %v2944
  %2946 = vmatmul.bf16.gmra.mxu0 %v2663
  %v2947 = vpop.f32.mrf.mxu0
  %v2948 = vadd.f32 %v2849, %v2947
  %v2949 = vpop.f32.mrf.mxu0
  %v2950 = vadd.f32 %v2851, %v2949
  %2951 = vmatmul.bf16.gmra.mxu0 %v2666
  %v2952 = vpop.f32.mrf.mxu0
  %v2953 = vadd.f32 %v2854, %v2952
  %v2954 = vpop.f32.mrf.mxu0
  %v2955 = vadd.f32 %v2856, %v2954
  %2956 = vmatmul.bf16.gmra.mxu0 %v2669
  %v2957 = vpop.f32.mrf.mxu0
  %v2958 = vadd.f32 %v2859, %v2957
  %v2959 = vpop.f32.mrf.mxu0
  %v2960 = vadd.f32 %v2861, %v2959
  %2961 = vmatmul.bf16.gmra.mxu0 %v2672
  %v2962 = vpop.f32.mrf.mxu0
  %v2963 = vadd.f32 %v2864, %v2962
  %v2964 = vpop.f32.mrf.mxu0
  %v2965 = vadd.f32 %v2866, %v2964
  %2966 = vmatmul.bf16.gmra.mxu0 %v2675
  %v2967 = vpop.f32.mrf.mxu0
  %v2968 = vadd.f32 %v2869, %v2967
  %v2969 = vpop.f32.mrf.mxu0
  %v2970 = vadd.f32 %v2871, %v2969
  %2971 = vmatmul.bf16.gmra.mxu0 %v2678
  %v2972 = vpop.f32.mrf.mxu0
  %v2973 = vadd.f32 %v2874, %v2972
  %v2974 = vpop.f32.mrf.mxu0
  %v2975 = vadd.f32 %v2876, %v2974
  %2976 = vdwg.mxu0
  %v2977 = vmax.f32 %v2195, %v2888
  %v2978 = vmax.f32 %v2197, %v2890
  %v2979 = vmax.f32 %v2200, %v2893
  %v2980 = vmax.f32 %v2202, %v2895
  %v2981 = vmax.f32 %v2205, %v2898
  %v2982 = vmax.f32 %v2207, %v2900
  %v2983 = vmax.f32 %v2210, %v2903
  %v2984 = vmax.f32 %v2212, %v2905
  %v2985 = vmax.f32 %v2215, %v2908
  %v2986 = vmax.f32 %v2217, %v2910
  %v2987 = vmax.f32 %v2220, %v2913
  %v2988 = vmax.f32 %v2222, %v2915
  %v2989 = vmax.f32 %v2225, %v2918
  %v2990 = vmax.f32 %v2227, %v2920
  %v2991 = vmax.f32 %v2230, %v2923
  %v2992 = vmax.f32 %v2232, %v2925
  %v2993 = vmax.f32 %v2235, %v2928
  %v2994 = vmax.f32 %v2237, %v2930
  %v2995 = vmax.f32 %v2240, %v2933
  %v2996 = vmax.f32 %v2242, %v2935
  %v2997 = vmax.f32 %v2245, %v2938
  %v2998 = vmax.f32 %v2247, %v2940
  %v2999 = vmax.f32 %v2250, %v2943
  %v3000 = vmax.f32 %v2252, %v2945
  %v3001 = vmax.f32 %v2255, %v2948
  %v3002 = vmax.f32 %v2257, %v2950
  %v3003 = vmax.f32 %v2260, %v2953
  %v3004 = vmax.f32 %v2262, %v2955
  %v3005 = vmax.f32 %v2265, %v2958
  %v3006 = vmax.f32 %v2267, %v2960
  %v3007 = vmax.f32 %v2270, %v2963
  %v3008 = vmax.f32 %v2272, %v2965
  %v3009 = vmax.f32 %v2275, %v2968
  %v3010 = vmax.f32 %v2277, %v2970
  %v3011 = vmax.f32 %v2280, %v2973
  %v3012 = vmax.f32 %v2282, %v2975
  %v3013 = vmax.f32 %v1555, %v2977
  %v3014 = vmax.f32 %v1556, %v2978
  %v3015 = vmax.f32 %v1557, %v2979
  %v3016 = vmax.f32 %v1558, %v2980
  %v3017 = vmax.f32 %v1559, %v2981
  %v3018 = vmax.f32 %v1560, %v2982
  %v3019 = vmax.f32 %v1561, %v2983
  %v3020 = vmax.f32 %v1562, %v2984
  %v3021 = vmax.f32 %v1563, %v2985
  %v3022 = vmax.f32 %v1564, %v2986
  %v3023 = vmax.f32 %v1565, %v2987
  %v3024 = vmax.f32 %v1566, %v2988
  %v3025 = vmax.f32 %v1567, %v2989
  %v3026 = vmax.f32 %v1568, %v2990
  %v3027 = vmax.f32 %v1569, %v2991
  %v3028 = vmax.f32 %v1570, %v2992
  %v3029 = vmax.f32 %v1571, %v2993
  %v3030 = vmax.f32 %v1572, %v2994
  %v3031 = vmax.f32 %v1573, %v2995
  %v3032 = vmax.f32 %v1574, %v2996
  %v3033 = vmax.f32 %v1575, %v2997
  %v3034 = vmax.f32 %v1576, %v2998
  %v3035 = vmax.f32 %v1577, %v2999
  %v3036 = vmax.f32 %v1578, %v3000
  %v3037 = vmax.f32 %v1579, %v3001
  %v3038 = vmax.f32 %v1580, %v3002
  %v3039 = vmax.f32 %v1581, %v3003
  %v3040 = vmax.f32 %v1582, %v3004
  %v3041 = vmax.f32 %v1583, %v3005
  %v3042 = vmax.f32 %v1584, %v3006
  %v3043 = vmax.f32 %v1585, %v3007
  %v3044 = vmax.f32 %v1586, %v3008
  %v3045 = vmax.f32 %v1587, %v3009
  %v3046 = vmax.f32 %v1588, %v3010
  %v3047 = vmax.f32 %v1589, %v3011
  %v3048 = vmax.f32 %v1590, %v3012
  %v3049 = vld [vmem:[%s5] sm:$0x1]
  %v3051 = vperm.slane %v3049, 0
  %v3053 = vadd.f32 %v3013, %v3051
  %v3054 = vadd.f32 %v3014, %v3051
  %v3055 = vadd.f32 %v3015, %v3051
  %v3056 = vadd.f32 %v3016, %v3051
  %v3057 = vadd.f32 %v3017, %v3051
  %v3058 = vadd.f32 %v3018, %v3051
  %v3059 = vadd.f32 %v3019, %v3051
  %v3060 = vadd.f32 %v3020, %v3051
  %v3061 = vadd.f32 %v3021, %v3051
  %v3062 = vadd.f32 %v3022, %v3051
  %v3063 = vadd.f32 %v3023, %v3051
  %v3064 = vadd.f32 %v3024, %v3051
  %v3065 = vadd.f32 %v3025, %v3051
  %v3066 = vadd.f32 %v3026, %v3051
  %v3067 = vadd.f32 %v3027, %v3051
  %v3068 = vadd.f32 %v3028, %v3051
  %v3069 = vadd.f32 %v3029, %v3051
  %v3070 = vadd.f32 %v3030, %v3051
  %v3071 = vadd.f32 %v3031, %v3051
  %v3072 = vadd.f32 %v3032, %v3051
  %v3073 = vadd.f32 %v3033, %v3051
  %v3074 = vadd.f32 %v3034, %v3051
  %v3075 = vadd.f32 %v3035, %v3051
  %v3076 = vadd.f32 %v3036, %v3051
  %v3077 = vadd.f32 %v3037, %v3051
  %v3078 = vadd.f32 %v3038, %v3051
  %v3079 = vadd.f32 %v3039, %v3051
  %v3080 = vadd.f32 %v3040, %v3051
  %v3081 = vadd.f32 %v3041, %v3051
  %v3082 = vadd.f32 %v3042, %v3051
  %v3083 = vadd.f32 %v3043, %v3051
  %v3084 = vadd.f32 %v3044, %v3051
  %v3085 = vadd.f32 %v3045, %v3051
  %v3086 = vadd.f32 %v3046, %v3051
  %v3087 = vadd.f32 %v3047, %v3051
  %v3088 = vadd.f32 %v3048, %v3051
  %v3089 = vmax.f32 %v3053, 0.0
  %v3090 = vmax.f32 %v3054, 0.0
  %v3091 = vmax.f32 %v3055, 0.0
  %v3092 = vmax.f32 %v3056, 0.0
  %v3093 = vmax.f32 %v3057, 0.0
  %v3094 = vmax.f32 %v3058, 0.0
  %v3095 = vmax.f32 %v3059, 0.0
  %v3096 = vmax.f32 %v3060, 0.0
  %v3097 = vmax.f32 %v3061, 0.0
  %v3098 = vmax.f32 %v3062, 0.0
  %v3099 = vmax.f32 %v3063, 0.0
  %v3100 = vmax.f32 %v3064, 0.0
  %v3101 = vmax.f32 %v3065, 0.0
  %v3102 = vmax.f32 %v3066, 0.0
  %v3103 = vmax.f32 %v3067, 0.0
  %v3104 = vmax.f32 %v3068, 0.0
  %v3105 = vmax.f32 %v3069, 0.0
  %v3106 = vmax.f32 %v3070, 0.0
  %v3107 = vmax.f32 %v3071, 0.0
  %v3108 = vmax.f32 %v3072, 0.0
  %v3109 = vmax.f32 %v3073, 0.0
  %v3110 = vmax.f32 %v3074, 0.0
  %v3111 = vmax.f32 %v3075, 0.0
  %v3112 = vmax.f32 %v3076, 0.0
  %v3113 = vmax.f32 %v3077, 0.0
  %v3114 = vmax.f32 %v3078, 0.0
  %v3115 = vmax.f32 %v3079, 0.0
  %v3116 = vmax.f32 %v3080, 0.0
  %v3117 = vmax.f32 %v3081, 0.0
  %v3118 = vmax.f32 %v3082, 0.0
  %v3119 = vmax.f32 %v3083, 0.0
  %v3120 = vmax.f32 %v3084, 0.0
  %v3121 = vmax.f32 %v3085, 0.0
  %v3122 = vmax.f32 %v3086, 0.0
  %v3123 = vmax.f32 %v3087, 0.0
  %v3124 = vmax.f32 %v3088, 0.0
  %v3125 = vpack.c.bf16 %v3089, %v3089
  %v3126 = vpack.c.bf16 %v3090, %v3090
  %v3127 = vpack.c.bf16 %v3091, %v3091
  %v3128 = vpack.c.bf16 %v3092, %v3092
  %v3129 = vpack.c.bf16 %v3093, %v3093
  %v3130 = vpack.c.bf16 %v3094, %v3094
  %v3131 = vpack.c.bf16 %v3095, %v3095
  %v3132 = vpack.c.bf16 %v3096, %v3096
  %v3133 = vpack.c.bf16 %v3097, %v3097
  %v3134 = vpack.c.bf16 %v3098, %v3098
  %v3135 = vpack.c.bf16 %v3099, %v3099
  %v3136 = vpack.c.bf16 %v3100, %v3100
  %v3137 = vpack.c.bf16 %v3101, %v3101
  %v3138 = vpack.c.bf16 %v3102, %v3102
  %v3139 = vpack.c.bf16 %v3103, %v3103
  %v3140 = vpack.c.bf16 %v3104, %v3104
  %v3141 = vpack.c.bf16 %v3105, %v3105
  %v3142 = vpack.c.bf16 %v3106, %v3106
  %v3143 = vpack.c.bf16 %v3107, %v3107
  %v3144 = vpack.c.bf16 %v3108, %v3108
  %v3145 = vpack.c.bf16 %v3109, %v3109
  %v3146 = vpack.c.bf16 %v3110, %v3110
  %v3147 = vpack.c.bf16 %v3111, %v3111
  %v3148 = vpack.c.bf16 %v3112, %v3112
  %v3149 = vpack.c.bf16 %v3113, %v3113
  %v3150 = vpack.c.bf16 %v3114, %v3114
  %v3151 = vpack.c.bf16 %v3115, %v3115
  %v3152 = vpack.c.bf16 %v3116, %v3116
  %v3153 = vpack.c.bf16 %v3117, %v3117
  %v3154 = vpack.c.bf16 %v3118, %v3118
  %v3155 = vpack.c.bf16 %v3119, %v3119
  %v3156 = vpack.c.bf16 %v3120, %v3120
  %v3157 = vpack.c.bf16 %v3121, %v3121
  %v3158 = vpack.c.bf16 %v3122, %v3122
  %v3159 = vpack.c.bf16 %v3123, %v3123
  %v3160 = vpack.c.bf16 %v3124, %v3124
  %vm3161 = vcmask 519168
  %3162 = vst.msk [vmem:[%s6] sm:$0xf] %vm3161, %v3125
  %3163 = vst.msk [vmem:[%s6 + $0x4] sm:$0xf] %vm3161, %v3126
  %3164 = vst.msk [vmem:[%s6 + $0x8] sm:$0xf] %vm3161, %v3127
  %3165 = vst.msk [vmem:[%s6 + $0xc] sm:$0xf] %vm3161, %v3128
  %3166 = vst.msk [vmem:[%s6 + $0x10] sm:$0xf] %vm3161, %v3129
  %3167 = vst.msk [vmem:[%s6 + $0x14] sm:$0xf] %vm3161, %v3130
  %3168 = vst.msk [vmem:[%s6 + $0x18] sm:$0xf] %vm3161, %v3131
  %3169 = vst.msk [vmem:[%s6 + $0x1c] sm:$0xf] %vm3161, %v3132
  %3170 = vst.msk [vmem:[%s6 + $0x20] sm:$0xf] %vm3161, %v3133
  %3171 = vst.msk [vmem:[%s6 + $0x24] sm:$0xf] %vm3161, %v3134
  %3172 = vst.msk [vmem:[%s6 + $0x28] sm:$0xf] %vm3161, %v3135
  %3173 = vst.msk [vmem:[%s6 + $0x2c] sm:$0xf] %vm3161, %v3136
  %3174 = vst.msk [vmem:[%s6 + $0x30] sm:$0xf] %vm3161, %v3137
  %3175 = vst.msk [vmem:[%s6 + $0x34] sm:$0xf] %vm3161, %v3138
  %3176 = vst.msk [vmem:[%s6 + $0x38] sm:$0xf] %vm3161, %v3139
  %3177 = vst.msk [vmem:[%s6 + $0x3c] sm:$0xf] %vm3161, %v3140
  %3178 = vst.msk [vmem:[%s6 + $0x40] sm:$0xf] %vm3161, %v3141
  %3179 = vst.msk [vmem:[%s6 + $0x44] sm:$0xf] %vm3161, %v3142
  %3180 = vst.msk [vmem:[%s6 + $0x48] sm:$0xf] %vm3161, %v3143
  %3181 = vst.msk [vmem:[%s6 + $0x4c] sm:$0xf] %vm3161, %v3144
  %3182 = vst.msk [vmem:[%s6 + $0x50] sm:$0xf] %vm3161, %v3145
  %3183 = vst.msk [vmem:[%s6 + $0x54] sm:$0xf] %vm3161, %v3146
  %3184 = vst.msk [vmem:[%s6 + $0x58] sm:$0xf] %vm3161, %v3147
  %3185 = vst.msk [vmem:[%s6 + $0x5c] sm:$0xf] %vm3161, %v3148
  %3186 = vst.msk [vmem:[%s6 + $0x60] sm:$0xf] %vm3161, %v3149
  %3187 = vst.msk [vmem:[%s6 + $0x64] sm:$0xf] %vm3161, %v3150
  %3188 = vst.msk [vmem:[%s6 + $0x68] sm:$0xf] %vm3161, %v3151
  %3189 = vst.msk [vmem:[%s6 + $0x6c] sm:$0xf] %vm3161, %v3152
  %3190 = vst.msk [vmem:[%s6 + $0x70] sm:$0xf] %vm3161, %v3153
  %3191 = vst.msk [vmem:[%s6 + $0x74] sm:$0xf] %vm3161, %v3154
  %3192 = vst.msk [vmem:[%s6 + $0x78] sm:$0xf] %vm3161, %v3155
  %3193 = vst.msk [vmem:[%s6 + $0x7c] sm:$0xf] %vm3161, %v3156
  %3194 = vst.msk [vmem:[%s6 + $0x80] sm:$0xf] %vm3161, %v3157
  %3195 = vst.msk [vmem:[%s6 + $0x84] sm:$0xf] %vm3161, %v3158
  %3196 = vst.msk [vmem:[%s6 + $0x88] sm:$0xf] %vm3161, %v3159
  %3197 = vst.msk [vmem:[%s6 + $0x8c] sm:$0xf] %vm3161, %v3160
  // Predicated region
  $region26: #{cnn_forward.4} parent=0 // pred_check
    _
  $region27: #{cnn_forward.4} parent=0 // pred_check_branch
    %3199 = sbr.rel (0) target = $region29
  $region28: #{cnn_forward.4} parent=0 // pred_region
    _
  $region29: #{cnn_forward.4} parent=0 // pred_fallthru
    _
  // Predicated region
  $region30: #{cnn_forward.4} parent=0 // pred_check
    _
  $region31: #{cnn_forward.4} parent=0 // pred_check_branch
    %3201 = sbr.rel (0) target = $region33
  $region32: #{cnn_forward.4} parent=0 // pred_region
    _
  $region33: #{cnn_forward.4} parent=0 // pred_fallthru
    _

</llo_original>
